<compile_context>
chip_gen: v7x
topology: tpu7x:2x2x1
jax: 0.10.0
libtpu: 0.0.40
codegen_flags: <defaults>
</compile_context>

<pallas_src>
import jax
import jax.numpy as jnp
from jax.experimental import pallas as pl
from jax.experimental.pallas import tpu as pltpu


# ----------------------------------------------------------------------------- VMEM budgeting ---
def _vmem_budget_bytes():
    """Per-generation VMEM budget: ~3/4 of physical, capped at 100 MiB (v5e/v6e)."""
    cap = None
    try:
        info = pltpu.get_tpu_info()
        cap = getattr(info, "vmem_capacity_bytes", None)
    except Exception:
        cap = None
    if not cap:
        cap = 64 * 1024 * 1024          # conservative fallback (v7x physical)
    return min(int(cap) * 3 // 4, 100 * 1024 * 1024)


def _vmem_bytes_estimate(th, Hp, Wp, Cin, Cmid, Cout, itemsize=2):
    """Rough per-core VMEM footprint for band size `th` (ignores tile-padding)."""
    x_block = 2 * 4 * (Hp + 4) * (Wp + 2) * Cin * itemsize          # resident image, 2 buffers
    weights = 2 * 9 * (Cin * Cmid + Cmid * Cout) * itemsize         # 2 buffers each
    bn = 2 * 2 * (Cmid + Cout) * 4
    pad1 = (th + 4) * (Wp + 2) * Cin * itemsize
    pad2 = (th + 2) * (Wp + 2) * Cmid * itemsize
    accs = ((th + 2) * Wp * Cmid + th * Wp * Cout) * 4               # f32 conv accumulators
    out_block = 2 * th * Wp * Cout * itemsize
    return x_block + weights + bn + pad1 + pad2 + accs + out_block


def _pick_band_rows(Hp, Wp, Cin, Cmid, Cout, budget):
    """Largest band size (divisor of Hp, sublane-aligned bands) whose estimate fits the budget."""
    cands = [t for t in range(1, Hp + 1)
             if Hp % t == 0 and (t == Hp or (t * Wp) % 8 == 0)]
    for t in sorted(cands, reverse=True):
        if _vmem_bytes_estimate(t, Hp, Wp, Cin, Cmid, Cout) <= budget:
            return t
    # TODO(synk): if even the smallest band overshoots (huge Cin*W), also band the input DMA
    #             manually (memory_space=pl.ANY + halo'd make_async_copy) instead of keeping the
    #             whole image resident.
    return cands[0]


# ------------------------------------------------------------------------------------ kernel ---
def _make_downsample_kernel(TH, Hp, Wp, Cin, Cmid, Cout):
    def kernel(x_ref, w1_ref, s1_ref, b1_ref, w2_ref, s2_ref, b2_ref, o_ref,
               pad1_ref, pad2_ref):
        # x_ref : (1, 2, 2, Hp+4, Wp+2, Cin) bf16  pooling windows leading, pooled plane pre-padded
        # w1_ref: (9, Cin, Cmid)  bf16   w2_ref: (9, Cmid, Cout) bf16   (tap-major (ky,kx))
        # s*/b* : (1, C) f32  folded BatchNorm scale / shift
        # o_ref : (1, TH*Wp, Cout) bf16  NHWC-flat band
        # pad1  : (TH+4, Wp+2, Cin)  bf16 scratch (fully overwritten every band -> never zeroed)
        # pad2  : (TH+2, Wp+2, Cmid) bf16 scratch (border cols zeroed once per image)
        f32 = jnp.float32
        j = pl.program_id(1)
        r0 = pl.multiple_of(j * TH, TH)      # band start in padded pooled-row coordinates

        # zero conv2 pad scratch once per image; only its 2 border columns must stay zero and
        # they are never written again (interior cols are fully overwritten every band).
        @pl.when(j == 0)
        def _():
            pad2_ref[...] = jnp.zeros_like(pad2_ref)

        # ---- 2x2 max pool (stride 2) over the band + 2-row halo: three whole-slab VPU maxima ----
        x00 = x_ref[0, 0, 0, pl.ds(r0, TH + 4), :, :]
        x01 = x_ref[0, 0, 1, pl.ds(r0, TH + 4), :, :]
        x10 = x_ref[0, 1, 0, pl.ds(r0, TH + 4), :, :]
        x11 = x_ref[0, 1, 1, pl.ds(r0, TH + 4), :, :]
        pad1_ref[...] = jnp.maximum(jnp.maximum(x00, x01), jnp.maximum(x10, x11))

        # ---- conv1: 3x3 SAME as 9 accumulated (M, Cin)x(Cin, Cmid) matmuls -> BN -> ReLU ----
        m1 = (TH + 2) * Wp                   # band rows + 1-row halo each side for conv2
        acc1 = jnp.zeros((m1, Cmid), f32)
        for t in range(9):
            dy, dx = divmod(t, 3)
            tap = pad1_ref[dy:dy + TH + 2, dx:dx + Wp, :].reshape(m1, Cin)
            acc1 = acc1 + jnp.dot(tap, w1_ref[t], preferred_element_type=f32)
        h1 = jnp.maximum(acc1 * s1_ref[...] + b1_ref[...], 0.0)
        h1 = h1.reshape(TH + 2, Wp, Cmid)

        # h1 halo rows that fall outside the image (first/last band only) must be exact zeros so
        # that conv2 sees correct SAME zero-padding (BN shift makes conv-of-zeros nonzero).
        img_row = jax.lax.broadcasted_iota(jnp.int32, (TH + 2, 1, 1), 0) + (r0 - 1)
        h1 = jnp.where((img_row >= 0) & (img_row < Hp), h1, 0.0)
        pad2_ref[:, 1:Wp + 1, :] = h1.astype(pad2_ref.dtype)

        # ---- conv2: 3x3 SAME as 9 accumulated (M, Cmid)x(Cmid, Cout) matmuls -> BN -> ReLU ----
        m2 = TH * Wp
        acc2 = jnp.zeros((m2, Cout), f32)
        for t in range(9):
            dy, dx = divmod(t, 3)
            tap = pad2_ref[dy:dy + TH, dx:dx + Wp, :].reshape(m2, Cmid)
            acc2 = acc2 + jnp.dot(tap, w2_ref[t], preferred_element_type=f32)
        out = jnp.maximum(acc2 * s2_ref[...] + b2_ref[...], 0.0)

        # single NHWC-flat bf16 store (no XLU transpose, half the HBM write traffic)
        o_ref[0] = out.astype(o_ref.dtype)

    return kernel


# ----------------------------------------------------------------------------------- wrapper ---
def downsample_layer(x_nchw, w1, scale1, shift1, w2, scale2, shift2,
                     band_rows=None, mxu_dtype=jnp.bfloat16):
    """DownSampleLayer forward. x_nchw: (B, Cin, H, W) -> (B, Cout, H//2, W//2) float32."""
    B, Cin, H, W = x_nchw.shape
    assert H % 2 == 0 and W % 2 == 0, "MaxPool2d(2) requires even H and W"
    Hp, Wp = H // 2, W // 2
    Cmid = w1.shape[-1]
    Cout = w2.shape[-1]
    assert w1.shape == (3, 3, Cin, Cmid) and w2.shape == (3, 3, Cmid, Cout)

    vmem_budget = _vmem_budget_bytes()
    if band_rows is None:
        band_rows = _pick_band_rows(Hp, Wp, Cin, Cmid, Cout, vmem_budget)
    TH = int(band_rows)
    assert Hp % TH == 0, "band_rows must divide the pooled height"
    assert TH == Hp or (TH * Wp) % 8 == 0, "band output rows must be sublane-aligned"
    n_bands = Hp // TH

    # layout glue (fused by XLA): NCHW -> bf16 -> pad (2 pooled rows, 1 pooled col each side)
    # -> split 2x2 pooling windows with window axes LEADING -> (B, 2, 2, Hp+4, Wp+2, Cin)
    xq = x_nchw.astype(mxu_dtype)
    xq = jnp.pad(xq, ((0, 0), (0, 0), (4, 4), (2, 2)))
    x6 = jnp.transpose(xq.reshape(B, Cin, Hp + 4, 2, Wp + 2, 2), (0, 3, 5, 2, 4, 1))

    # weights as (9, Cin, Cout): each tap's weight is a free leading-axis index in-kernel
    w1f = w1.reshape(9, Cin, Cmid).astype(mxu_dtype)
    w2f = w2.reshape(9, Cmid, Cout).astype(mxu_dtype)
    s1 = scale1.reshape(1, Cmid).astype(jnp.float32)
    b1 = shift1.reshape(1, Cmid).astype(jnp.float32)
    s2 = scale2.reshape(1, Cout).astype(jnp.float32)
    b2 = shift2.reshape(1, Cout).astype(jnp.float32)

    out_flat = pl.pallas_call(
        _make_downsample_kernel(TH, Hp, Wp, Cin, Cmid, Cout),
        out_shape=jax.ShapeDtypeStruct((B, Hp * Wp, Cout), jnp.bfloat16),
        grid=(B, n_bands),
        in_specs=[
            # whole (padded) image per program; block index constant in the band axis, so it is
            # DMA'd once per image and stays resident while bands iterate.
            pl.BlockSpec((1, 2, 2, Hp + 4, Wp + 2, Cin),
                         lambda b, j: (b, 0, 0, 0, 0, 0)),
            pl.BlockSpec((9, Cin, Cmid), lambda b, j: (0, 0, 0)),
            pl.BlockSpec((1, Cmid), lambda b, j: (0, 0)),
            pl.BlockSpec((1, Cmid), lambda b, j: (0, 0)),
            pl.BlockSpec((9, Cmid, Cout), lambda b, j: (0, 0, 0)),
            pl.BlockSpec((1, Cout), lambda b, j: (0, 0)),
            pl.BlockSpec((1, Cout), lambda b, j: (0, 0)),
        ],
        out_specs=pl.BlockSpec((1, TH * Wp, Cout), lambda b, j: (b, j, 0)),
        scratch_shapes=[
            pltpu.VMEM((TH + 4, Wp + 2, Cin), mxu_dtype),
            pltpu.VMEM((TH + 2, Wp + 2, Cmid), mxu_dtype),
        ],
        compiler_params=pltpu.CompilerParams(
            dimension_semantics=("parallel", "arbitrary"),
            vmem_limit_bytes=int(vmem_budget)),
    )(x6, w1f, s1, b1, w2f, s2, b2)

    # interface glue only: a fused UNet would consume the NHWC bf16 slab directly.
    out = out_flat.reshape(B, Hp, Wp, Cout)
    return jnp.transpose(out, (0, 3, 1, 2)).astype(jnp.float32)


# --------------------------------------------------------------------------------- reference ---
def _reference(x_nchw, w1, scale1, shift1, w2, scale2, shift2, mxu_dtype=jnp.bfloat16):
    """Pure-JAX reference with the same mixed-precision policy as the kernel: bf16 inputs to the
    MXU matmuls, f32 accumulation, BN/ReLU in f32, eval-mode folded BN, bf16 output."""
    B, Cin, H, W = x_nchw.shape
    Hp, Wp = H // 2, W // 2
    xq = x_nchw.astype(mxu_dtype).astype(jnp.float32)
    xp = xq.reshape(B, Cin, Hp, 2, Wp, 2).max(axis=(3, 5))
    dn = ("NCHW", "OIHW", "NCHW")
    y = jax.lax.conv_general_dilated(
        xp.astype(mxu_dtype), jnp.transpose(w1, (3, 2, 0, 1)).astype(mxu_dtype),
        (1, 1), "SAME", dimension_numbers=dn, preferred_element_type=jnp.float32)
    y = jnp.maximum(y * scale1.reshape(1, -1, 1, 1) + shift1.reshape(1, -1, 1, 1), 0.0)
    y = jax.lax.conv_general_dilated(
        y.astype(mxu_dtype), jnp.transpose(w2, (3, 2, 0, 1)).astype(mxu_dtype),
        (1, 1), "SAME", dimension_numbers=dn, preferred_element_type=jnp.float32)
    y = jnp.maximum(y * scale2.reshape(1, -1, 1, 1) + shift2.reshape(1, -1, 1, 1), 0.0)
    return y.astype(mxu_dtype).astype(jnp.float32)


def _make_bn_params(key, c, eps=1e-5):
    k1, k2, k3, k4 = jax.random.split(key, 4)
    gamma = 1.0 + 0.1 * jax.random.normal(k1, (c,), jnp.float32)
    beta = 0.05 * jax.random.normal(k2, (c,), jnp.float32)
    running_mean = 0.1 * jax.random.normal(k3, (c,), jnp.float32)
    running_var = jax.random.uniform(k4, (c,), jnp.float32, 0.5, 1.5)
    scale = gamma / jnp.sqrt(running_var + eps)
    shift = beta - running_mean * scale
    return scale, shift


if __name__ == "__main__":
    B, Cin, H, W = 2, 4, 16, 16
    Cout = 8
    Cmid = Cout  # DoubleConv default: mid_channels = out_channels

    key = jax.random.PRNGKey(0)
    kx, kw1, kbn1, kw2, kbn2 = jax.random.split(key, 5)

    x = jax.random.normal(kx, (B, Cin, H, W), jnp.float32)
    w1 = 0.1 * jax.random.normal(kw1, (3, 3, Cin, Cmid), jnp.float32)   # HWIO
    w2 = 0.1 * jax.random.normal(kw2, (3, 3, Cmid, Cout), jnp.float32)  # HWIO
    scale1, shift1 = _make_bn_params(kbn1, Cmid)
    scale2, shift2 = _make_bn_params(kbn2, Cout)

    # multi-band path (2 bands of 4 pooled rows): exercises top/bottom halo masking
    out_banded = downsample_layer(x, w1, scale1, shift1, w2, scale2, shift2, band_rows=4)
    # auto band selection (fits whole image in one band at this toy size)
    out_auto = downsample_layer(x, w1, scale1, shift1, w2, scale2, shift2)
    jax.block_until_ready((out_banded, out_auto))

    ref = _reference(x, w1, scale1, shift1, w2, scale2, shift2)
    assert out_banded.shape == (B, Cout, H // 2, W // 2), out_banded.shape
    assert out_auto.shape == (B, Cout, H // 2, W // 2), out_auto.shape
    # bf16 MXU inputs/outputs -> compare against the matching mixed-precision reference.
    assert jnp.allclose(out_banded, ref, atol=2e-2, rtol=2e-2), \
        float(jnp.max(jnp.abs(out_banded - ref)))
    assert jnp.allclose(out_auto, ref, atol=2e-2, rtol=2e-2), \
        float(jnp.max(jnp.abs(out_auto - ref)))

    print("KERNEL_OK")
</pallas_src>

<mosaic_0001>
module attributes {stable_mosaic.version = 11 : i64} {
  func.func @kernel(%arg0: i32, %arg1: i32, %arg2: memref<1x2x2x12x10x4xbf16, #tpu.memory_space<vmem>>, %arg3: memref<9x4x8xbf16, #tpu.memory_space<vmem>>, %arg4: memref<1x8xf32, #tpu.memory_space<vmem>>, %arg5: memref<1x8xf32, #tpu.memory_space<vmem>>, %arg6: memref<9x8x8xbf16, #tpu.memory_space<vmem>>, %arg7: memref<1x8xf32, #tpu.memory_space<vmem>>, %arg8: memref<1x8xf32, #tpu.memory_space<vmem>>, %arg9: memref<1x32x8xbf16, #tpu.memory_space<vmem>>, %arg10: memref<8x10x4xbf16, #tpu.memory_space<vmem>>, %arg11: memref<6x10x8xbf16, #tpu.memory_space<vmem>>) attributes {dimension_semantics = [#tpu.dimension_semantics<parallel>, #tpu.dimension_semantics<arbitrary>], iteration_bounds = array<i64: 2, 2>, scalar_prefetch = 0 : i64, scratch_operands = 2 : i64, tpu.core_type = #tpu.core_type<tc>, window_params = [{transform_indices = @transform_0, window_bounds = array<i64: 1, 2, 2, 12, 10, 4>}, {pipeline_mode = #tpu.pipeline_mode<synchronous>, transform_indices = @transform_1, window_bounds = array<i64: 9, 4, 8>}, {pipeline_mode = #tpu.pipeline_mode<synchronous>, transform_indices = @transform_2, window_bounds = array<i64: 1, 8>}, {pipeline_mode = #tpu.pipeline_mode<synchronous>, transform_indices = @transform_3, window_bounds = array<i64: 1, 8>}, {pipeline_mode = #tpu.pipeline_mode<synchronous>, transform_indices = @transform_4, window_bounds = array<i64: 9, 8, 8>}, {pipeline_mode = #tpu.pipeline_mode<synchronous>, transform_indices = @transform_5, window_bounds = array<i64: 1, 8>}, {pipeline_mode = #tpu.pipeline_mode<synchronous>, transform_indices = @transform_6, window_bounds = array<i64: 1, 8>}, {transform_indices = @transform_7, window_bounds = array<i64: 1, 32, 8>}]} {
    %c4_i32 = arith.constant 4 : i32
    %0 = arith.muli %arg1, %c4_i32 : i32
    %1 = tpu.assume_multiple %0, 4 : i32
    %c0_i32 = arith.constant 0 : i32
    %2 = arith.cmpi eq, %arg1, %c0_i32 : i32
    %3 = arith.extui %2 : i1 to i32
    %c0_i32_0 = arith.constant 0 : i32
    %4 = arith.cmpi ne, %3, %c0_i32_0 : i32
    scf.if %4 {
      %cst_160 = arith.constant 0.000000e+00 : bf16
      %167 = vector.broadcast %cst_160 : bf16 to vector<6x10x8xbf16>
      %c0_161 = arith.constant 0 : index
      %c0_162 = arith.constant 0 : index
      %c0_163 = arith.constant 0 : index
      %168 = vector.load %arg11[%c0_161, %c0_162, %c0_163] : memref<6x10x8xbf16, #tpu.memory_space<vmem>>, vector<6x10x8xbf16>
      tpu.vector_store %arg11[%c0_161, %c0_162, %c0_163], %167 {strides = array<i32>} : memref<6x10x8xbf16, #tpu.memory_space<vmem>>, vector<6x10x8xbf16>,
    } else {
    }
    %c0 = arith.constant 0 : index
    %c0_1 = arith.constant 0 : index
    %c0_2 = arith.constant 0 : index
    %5 = arith.index_cast %1 : i32 to index
    %c0_3 = arith.constant 0 : index
    %c0_4 = arith.constant 0 : index
    %6 = vector.load %arg2[%c0, %c0_1, %c0_2, %5, %c0_3, %c0_4] : memref<1x2x2x12x10x4xbf16, #tpu.memory_space<vmem>>, vector<1x1x1x8x10x4xbf16>
    %7 = vector.shape_cast %6 : vector<1x1x1x8x10x4xbf16> to vector<8x10x4xbf16>
    %c0_5 = arith.constant 0 : index
    %c0_6 = arith.constant 0 : index
    %c1 = arith.constant 1 : index
    %8 = arith.index_cast %1 : i32 to index
    %c0_7 = arith.constant 0 : index
    %c0_8 = arith.constant 0 : index
    %9 = vector.load %arg2[%c0_5, %c0_6, %c1, %8, %c0_7, %c0_8] : memref<1x2x2x12x10x4xbf16, #tpu.memory_space<vmem>>, vector<1x1x1x8x10x4xbf16>
    %10 = vector.shape_cast %9 : vector<1x1x1x8x10x4xbf16> to vector<8x10x4xbf16>
    %c0_9 = arith.constant 0 : index
    %c1_10 = arith.constant 1 : index
    %c0_11 = arith.constant 0 : index
    %11 = arith.index_cast %1 : i32 to index
    %c0_12 = arith.constant 0 : index
    %c0_13 = arith.constant 0 : index
    %12 = vector.load %arg2[%c0_9, %c1_10, %c0_11, %11, %c0_12, %c0_13] : memref<1x2x2x12x10x4xbf16, #tpu.memory_space<vmem>>, vector<1x1x1x8x10x4xbf16>
    %13 = vector.shape_cast %12 : vector<1x1x1x8x10x4xbf16> to vector<8x10x4xbf16>
    %c0_14 = arith.constant 0 : index
    %c1_15 = arith.constant 1 : index
    %c1_16 = arith.constant 1 : index
    %14 = arith.index_cast %1 : i32 to index
    %c0_17 = arith.constant 0 : index
    %c0_18 = arith.constant 0 : index
    %15 = vector.load %arg2[%c0_14, %c1_15, %c1_16, %14, %c0_17, %c0_18] : memref<1x2x2x12x10x4xbf16, #tpu.memory_space<vmem>>, vector<1x1x1x8x10x4xbf16>
    %16 = vector.shape_cast %15 : vector<1x1x1x8x10x4xbf16> to vector<8x10x4xbf16>
    %17 = arith.maximumf %7, %10 : vector<8x10x4xbf16>
    %18 = arith.maximumf %13, %16 : vector<8x10x4xbf16>
    %19 = arith.maximumf %17, %18 : vector<8x10x4xbf16>
    %c0_19 = arith.constant 0 : index
    %c0_20 = arith.constant 0 : index
    %c0_21 = arith.constant 0 : index
    %20 = vector.load %arg10[%c0_19, %c0_20, %c0_21] : memref<8x10x4xbf16, #tpu.memory_space<vmem>>, vector<8x10x4xbf16>
    tpu.vector_store %arg10[%c0_19, %c0_20, %c0_21], %19 {strides = array<i32>} : memref<8x10x4xbf16, #tpu.memory_space<vmem>>, vector<8x10x4xbf16>,
    %cst = arith.constant 0.000000e+00 : f32
    %21 = vector.broadcast %cst : f32 to vector<48x8xf32>
    %c0_22 = arith.constant 0 : index
    %c0_23 = arith.constant 0 : index
    %c0_24 = arith.constant 0 : index
    %22 = vector.load %arg10[%c0_22, %c0_23, %c0_24] : memref<8x10x4xbf16, #tpu.memory_space<vmem>>, vector<6x8x4xbf16>
    %23 = vector.shape_cast %22 : vector<6x8x4xbf16> to vector<48x4xbf16>
    %c0_25 = arith.constant 0 : index
    %c0_26 = arith.constant 0 : index
    %c0_27 = arith.constant 0 : index
    %24 = vector.load %arg3[%c0_25, %c0_26, %c0_27] : memref<9x4x8xbf16, #tpu.memory_space<vmem>>, vector<1x4x8xbf16>
    %25 = vector.shape_cast %24 : vector<1x4x8xbf16> to vector<4x8xbf16>
    %cst_28 = arith.constant dense<0.000000e+00> : vector<48x8xf32>
    %26 = tpu.matmul %23, %25, %cst_28 {dimension_numbers = #tpu.dot_dimension_numbers<[1], [0], [0], [1], [0, 0, 1, 1], [], []>} : vector<48x4xbf16>, vector<4x8xbf16>, vector<48x8xf32> -> vector<48x8xf32>
    %27 = arith.addf %21, %26 : vector<48x8xf32>
    %c0_29 = arith.constant 0 : index
    %c1_30 = arith.constant 1 : index
    %c0_31 = arith.constant 0 : index
    %28 = vector.load %arg10[%c0_29, %c1_30, %c0_31] : memref<8x10x4xbf16, #tpu.memory_space<vmem>>, vector<6x8x4xbf16>
    %29 = vector.shape_cast %28 : vector<6x8x4xbf16> to vector<48x4xbf16>
    %c1_32 = arith.constant 1 : index
    %c0_33 = arith.constant 0 : index
    %c0_34 = arith.constant 0 : index
    %30 = vector.load %arg3[%c1_32, %c0_33, %c0_34] : memref<9x4x8xbf16, #tpu.memory_space<vmem>>, vector<1x4x8xbf16>
    %31 = vector.shape_cast %30 : vector<1x4x8xbf16> to vector<4x8xbf16>
    %cst_35 = arith.constant dense<0.000000e+00> : vector<48x8xf32>
    %32 = tpu.matmul %29, %31, %cst_35 {dimension_numbers = #tpu.dot_dimension_numbers<[1], [0], [0], [1], [0, 0, 1, 1], [], []>} : vector<48x4xbf16>, vector<4x8xbf16>, vector<48x8xf32> -> vector<48x8xf32>
    %33 = arith.addf %27, %32 : vector<48x8xf32>
    %c0_36 = arith.constant 0 : index
    %c2 = arith.constant 2 : index
    %c0_37 = arith.constant 0 : index
    %34 = vector.load %arg10[%c0_36, %c2, %c0_37] : memref<8x10x4xbf16, #tpu.memory_space<vmem>>, vector<6x8x4xbf16>
    %35 = vector.shape_cast %34 : vector<6x8x4xbf16> to vector<48x4xbf16>
    %c2_38 = arith.constant 2 : index
    %c0_39 = arith.constant 0 : index
    %c0_40 = arith.constant 0 : index
    %36 = vector.load %arg3[%c2_38, %c0_39, %c0_40] : memref<9x4x8xbf16, #tpu.memory_space<vmem>>, vector<1x4x8xbf16>
    %37 = vector.shape_cast %36 : vector<1x4x8xbf16> to vector<4x8xbf16>
    %cst_41 = arith.constant dense<0.000000e+00> : vector<48x8xf32>
    %38 = tpu.matmul %35, %37, %cst_41 {dimension_numbers = #tpu.dot_dimension_numbers<[1], [0], [0], [1], [0, 0, 1, 1], [], []>} : vector<48x4xbf16>, vector<4x8xbf16>, vector<48x8xf32> -> vector<48x8xf32>
    %39 = arith.addf %33, %38 : vector<48x8xf32>
    %c1_42 = arith.constant 1 : index
    %c0_43 = arith.constant 0 : index
    %c0_44 = arith.constant 0 : index
    %40 = vector.load %arg10[%c1_42, %c0_43, %c0_44] : memref<8x10x4xbf16, #tpu.memory_space<vmem>>, vector<6x8x4xbf16>
    %41 = vector.shape_cast %40 : vector<6x8x4xbf16> to vector<48x4xbf16>
    %c3 = arith.constant 3 : index
    %c0_45 = arith.constant 0 : index
    %c0_46 = arith.constant 0 : index
    %42 = vector.load %arg3[%c3, %c0_45, %c0_46] : memref<9x4x8xbf16, #tpu.memory_space<vmem>>, vector<1x4x8xbf16>
    %43 = vector.shape_cast %42 : vector<1x4x8xbf16> to vector<4x8xbf16>
    %cst_47 = arith.constant dense<0.000000e+00> : vector<48x8xf32>
    %44 = tpu.matmul %41, %43, %cst_47 {dimension_numbers = #tpu.dot_dimension_numbers<[1], [0], [0], [1], [0, 0, 1, 1], [], []>} : vector<48x4xbf16>, vector<4x8xbf16>, vector<48x8xf32> -> vector<48x8xf32>
    %45 = arith.addf %39, %44 : vector<48x8xf32>
    %c1_48 = arith.constant 1 : index
    %c1_49 = arith.constant 1 : index
    %c0_50 = arith.constant 0 : index
    %46 = vector.load %arg10[%c1_48, %c1_49, %c0_50] : memref<8x10x4xbf16, #tpu.memory_space<vmem>>, vector<6x8x4xbf16>
    %47 = vector.shape_cast %46 : vector<6x8x4xbf16> to vector<48x4xbf16>
    %c4 = arith.constant 4 : index
    %c0_51 = arith.constant 0 : index
    %c0_52 = arith.constant 0 : index
    %48 = vector.load %arg3[%c4, %c0_51, %c0_52] : memref<9x4x8xbf16, #tpu.memory_space<vmem>>, vector<1x4x8xbf16>
    %49 = vector.shape_cast %48 : vector<1x4x8xbf16> to vector<4x8xbf16>
    %cst_53 = arith.constant dense<0.000000e+00> : vector<48x8xf32>
    %50 = tpu.matmul %47, %49, %cst_53 {dimension_numbers = #tpu.dot_dimension_numbers<[1], [0], [0], [1], [0, 0, 1, 1], [], []>} : vector<48x4xbf16>, vector<4x8xbf16>, vector<48x8xf32> -> vector<48x8xf32>
    %51 = arith.addf %45, %50 : vector<48x8xf32>
    %c1_54 = arith.constant 1 : index
    %c2_55 = arith.constant 2 : index
    %c0_56 = arith.constant 0 : index
    %52 = vector.load %arg10[%c1_54, %c2_55, %c0_56] : memref<8x10x4xbf16, #tpu.memory_space<vmem>>, vector<6x8x4xbf16>
    %53 = vector.shape_cast %52 : vector<6x8x4xbf16> to vector<48x4xbf16>
    %c5 = arith.constant 5 : index
    %c0_57 = arith.constant 0 : index
    %c0_58 = arith.constant 0 : index
    %54 = vector.load %arg3[%c5, %c0_57, %c0_58] : memref<9x4x8xbf16, #tpu.memory_space<vmem>>, vector<1x4x8xbf16>
    %55 = vector.shape_cast %54 : vector<1x4x8xbf16> to vector<4x8xbf16>
    %cst_59 = arith.constant dense<0.000000e+00> : vector<48x8xf32>
    %56 = tpu.matmul %53, %55, %cst_59 {dimension_numbers = #tpu.dot_dimension_numbers<[1], [0], [0], [1], [0, 0, 1, 1], [], []>} : vector<48x4xbf16>, vector<4x8xbf16>, vector<48x8xf32> -> vector<48x8xf32>
    %57 = arith.addf %51, %56 : vector<48x8xf32>
    %c2_60 = arith.constant 2 : index
    %c0_61 = arith.constant 0 : index
    %c0_62 = arith.constant 0 : index
    %58 = vector.load %arg10[%c2_60, %c0_61, %c0_62] : memref<8x10x4xbf16, #tpu.memory_space<vmem>>, vector<6x8x4xbf16>
    %59 = vector.shape_cast %58 : vector<6x8x4xbf16> to vector<48x4xbf16>
    %c6 = arith.constant 6 : index
    %c0_63 = arith.constant 0 : index
    %c0_64 = arith.constant 0 : index
    %60 = vector.load %arg3[%c6, %c0_63, %c0_64] : memref<9x4x8xbf16, #tpu.memory_space<vmem>>, vector<1x4x8xbf16>
    %61 = vector.shape_cast %60 : vector<1x4x8xbf16> to vector<4x8xbf16>
    %cst_65 = arith.constant dense<0.000000e+00> : vector<48x8xf32>
    %62 = tpu.matmul %59, %61, %cst_65 {dimension_numbers = #tpu.dot_dimension_numbers<[1], [0], [0], [1], [0, 0, 1, 1], [], []>} : vector<48x4xbf16>, vector<4x8xbf16>, vector<48x8xf32> -> vector<48x8xf32>
    %63 = arith.addf %57, %62 : vector<48x8xf32>
    %c2_66 = arith.constant 2 : index
    %c1_67 = arith.constant 1 : index
    %c0_68 = arith.constant 0 : index
    %64 = vector.load %arg10[%c2_66, %c1_67, %c0_68] : memref<8x10x4xbf16, #tpu.memory_space<vmem>>, vector<6x8x4xbf16>
    %65 = vector.shape_cast %64 : vector<6x8x4xbf16> to vector<48x4xbf16>
    %c7 = arith.constant 7 : index
    %c0_69 = arith.constant 0 : index
    %c0_70 = arith.constant 0 : index
    %66 = vector.load %arg3[%c7, %c0_69, %c0_70] : memref<9x4x8xbf16, #tpu.memory_space<vmem>>, vector<1x4x8xbf16>
    %67 = vector.shape_cast %66 : vector<1x4x8xbf16> to vector<4x8xbf16>
    %cst_71 = arith.constant dense<0.000000e+00> : vector<48x8xf32>
    %68 = tpu.matmul %65, %67, %cst_71 {dimension_numbers = #tpu.dot_dimension_numbers<[1], [0], [0], [1], [0, 0, 1, 1], [], []>} : vector<48x4xbf16>, vector<4x8xbf16>, vector<48x8xf32> -> vector<48x8xf32>
    %69 = arith.addf %63, %68 : vector<48x8xf32>
    %c2_72 = arith.constant 2 : index
    %c2_73 = arith.constant 2 : index
    %c0_74 = arith.constant 0 : index
    %70 = vector.load %arg10[%c2_72, %c2_73, %c0_74] : memref<8x10x4xbf16, #tpu.memory_space<vmem>>, vector<6x8x4xbf16>
    %71 = vector.shape_cast %70 : vector<6x8x4xbf16> to vector<48x4xbf16>
    %c8 = arith.constant 8 : index
    %c0_75 = arith.constant 0 : index
    %c0_76 = arith.constant 0 : index
    %72 = vector.load %arg3[%c8, %c0_75, %c0_76] : memref<9x4x8xbf16, #tpu.memory_space<vmem>>, vector<1x4x8xbf16>
    %73 = vector.shape_cast %72 : vector<1x4x8xbf16> to vector<4x8xbf16>
    %cst_77 = arith.constant dense<0.000000e+00> : vector<48x8xf32>
    %74 = tpu.matmul %71, %73, %cst_77 {dimension_numbers = #tpu.dot_dimension_numbers<[1], [0], [0], [1], [0, 0, 1, 1], [], []>} : vector<48x4xbf16>, vector<4x8xbf16>, vector<48x8xf32> -> vector<48x8xf32>
    %75 = arith.addf %69, %74 : vector<48x8xf32>
    %c0_78 = arith.constant 0 : index
    %c0_79 = arith.constant 0 : index
    %76 = vector.load %arg4[%c0_78, %c0_79] : memref<1x8xf32, #tpu.memory_space<vmem>>, vector<1x8xf32>
    %77 = vector.broadcast %76 : vector<1x8xf32> to vector<48x8xf32>
    %78 = arith.mulf %75, %77 : vector<48x8xf32>
    %c0_80 = arith.constant 0 : index
    %c0_81 = arith.constant 0 : index
    %79 = vector.load %arg5[%c0_80, %c0_81] : memref<1x8xf32, #tpu.memory_space<vmem>>, vector<1x8xf32>
    %80 = vector.broadcast %79 : vector<1x8xf32> to vector<48x8xf32>
    %81 = arith.addf %78, %80 : vector<48x8xf32>
    %cst_82 = arith.constant 0.000000e+00 : f32
    %82 = vector.broadcast %cst_82 : f32 to vector<48x8xf32>
    %83 = arith.maximumf %81, %82 : vector<48x8xf32>
    %84 = vector.shape_cast %83 : vector<48x8xf32> to vector<6x8x8xf32>
    %85 = tpu.iota {dimensions = array<i32: 0>} : vector<6x1x1xi32>
    %c1_i32 = arith.constant 1 : i32
    %86 = arith.subi %1, %c1_i32 : i32
    %87 = vector.broadcast %86 : i32 to vector<6x1x1xi32>
    %88 = arith.addi %85, %87 : vector<6x1x1xi32>
    %c0_i32_83 = arith.constant 0 : i32
    %89 = vector.broadcast %c0_i32_83 : i32 to vector<6x1x1xi32>
    %90 = arith.cmpi sge, %88, %89 : vector<6x1x1xi32>
    %c8_i32 = arith.constant 8 : i32
    %91 = vector.broadcast %c8_i32 : i32 to vector<6x1x1xi32>
    %92 = arith.cmpi slt, %88, %91 : vector<6x1x1xi32>
    %93 = arith.andi %90, %92 : vector<6x1x1xi1>
    %cst_84 = arith.constant 0.000000e+00 : f32
    %94 = vector.shape_cast %93 : vector<6x1x1xi1> to vector<6x1x1xi1>
    %95 = vector.broadcast %94 : vector<6x1x1xi1> to vector<6x8x8xi1>
    %96 = vector.broadcast %cst_84 : f32 to vector<6x8x8xf32>
    %97 = arith.select %95, %84, %96 : vector<6x8x8xi1>, vector<6x8x8xf32>
    %98 = arith.truncf %97 : vector<6x8x8xf32> to vector<6x8x8xbf16>
    %c0_85 = arith.constant 0 : index
    %c1_86 = arith.constant 1 : index
    %c0_87 = arith.constant 0 : index
    %99 = vector.load %arg11[%c0_85, %c1_86, %c0_87] : memref<6x10x8xbf16, #tpu.memory_space<vmem>>, vector<6x8x8xbf16>
    tpu.vector_store %arg11[%c0_85, %c1_86, %c0_87], %98 {strides = array<i32>} : memref<6x10x8xbf16, #tpu.memory_space<vmem>>, vector<6x8x8xbf16>,
    %cst_88 = arith.constant 0.000000e+00 : f32
    %100 = vector.broadcast %cst_88 : f32 to vector<32x8xf32>
    %c0_89 = arith.constant 0 : index
    %c0_90 = arith.constant 0 : index
    %c0_91 = arith.constant 0 : index
    %101 = vector.load %arg11[%c0_89, %c0_90, %c0_91] : memref<6x10x8xbf16, #tpu.memory_space<vmem>>, vector<4x8x8xbf16>
    %102 = vector.shape_cast %101 : vector<4x8x8xbf16> to vector<32x8xbf16>
    %c0_92 = arith.constant 0 : index
    %c0_93 = arith.constant 0 : index
    %c0_94 = arith.constant 0 : index
    %103 = vector.load %arg6[%c0_92, %c0_93, %c0_94] : memref<9x8x8xbf16, #tpu.memory_space<vmem>>, vector<1x8x8xbf16>
    %104 = vector.shape_cast %103 : vector<1x8x8xbf16> to vector<8x8xbf16>
    %cst_95 = arith.constant dense<0.000000e+00> : vector<32x8xf32>
    %105 = tpu.matmul %102, %104, %cst_95 {dimension_numbers = #tpu.dot_dimension_numbers<[1], [0], [0], [1], [0, 0, 1, 1], [], []>} : vector<32x8xbf16>, vector<8x8xbf16>, vector<32x8xf32> -> vector<32x8xf32>
    %106 = arith.addf %100, %105 : vector<32x8xf32>
    %c0_96 = arith.constant 0 : index
    %c1_97 = arith.constant 1 : index
    %c0_98 = arith.constant 0 : index
    %107 = vector.load %arg11[%c0_96, %c1_97, %c0_98] : memref<6x10x8xbf16, #tpu.memory_space<vmem>>, vector<4x8x8xbf16>
    %108 = vector.shape_cast %107 : vector<4x8x8xbf16> to vector<32x8xbf16>
    %c1_99 = arith.constant 1 : index
    %c0_100 = arith.constant 0 : index
    %c0_101 = arith.constant 0 : index
    %109 = vector.load %arg6[%c1_99, %c0_100, %c0_101] : memref<9x8x8xbf16, #tpu.memory_space<vmem>>, vector<1x8x8xbf16>
    %110 = vector.shape_cast %109 : vector<1x8x8xbf16> to vector<8x8xbf16>
    %cst_102 = arith.constant dense<0.000000e+00> : vector<32x8xf32>
    %111 = tpu.matmul %108, %110, %cst_102 {dimension_numbers = #tpu.dot_dimension_numbers<[1], [0], [0], [1], [0, 0, 1, 1], [], []>} : vector<32x8xbf16>, vector<8x8xbf16>, vector<32x8xf32> -> vector<32x8xf32>
    %112 = arith.addf %106, %111 : vector<32x8xf32>
    %c0_103 = arith.constant 0 : index
    %c2_104 = arith.constant 2 : index
    %c0_105 = arith.constant 0 : index
    %113 = vector.load %arg11[%c0_103, %c2_104, %c0_105] : memref<6x10x8xbf16, #tpu.memory_space<vmem>>, vector<4x8x8xbf16>
    %114 = vector.shape_cast %113 : vector<4x8x8xbf16> to vector<32x8xbf16>
    %c2_106 = arith.constant 2 : index
    %c0_107 = arith.constant 0 : index
    %c0_108 = arith.constant 0 : index
    %115 = vector.load %arg6[%c2_106, %c0_107, %c0_108] : memref<9x8x8xbf16, #tpu.memory_space<vmem>>, vector<1x8x8xbf16>
    %116 = vector.shape_cast %115 : vector<1x8x8xbf16> to vector<8x8xbf16>
    %cst_109 = arith.constant dense<0.000000e+00> : vector<32x8xf32>
    %117 = tpu.matmul %114, %116, %cst_109 {dimension_numbers = #tpu.dot_dimension_numbers<[1], [0], [0], [1], [0, 0, 1, 1], [], []>} : vector<32x8xbf16>, vector<8x8xbf16>, vector<32x8xf32> -> vector<32x8xf32>
    %118 = arith.addf %112, %117 : vector<32x8xf32>
    %c1_110 = arith.constant 1 : index
    %c0_111 = arith.constant 0 : index
    %c0_112 = arith.constant 0 : index
    %119 = vector.load %arg11[%c1_110, %c0_111, %c0_112] : memref<6x10x8xbf16, #tpu.memory_space<vmem>>, vector<4x8x8xbf16>
    %120 = vector.shape_cast %119 : vector<4x8x8xbf16> to vector<32x8xbf16>
    %c3_113 = arith.constant 3 : index
    %c0_114 = arith.constant 0 : index
    %c0_115 = arith.constant 0 : index
    %121 = vector.load %arg6[%c3_113, %c0_114, %c0_115] : memref<9x8x8xbf16, #tpu.memory_space<vmem>>, vector<1x8x8xbf16>
    %122 = vector.shape_cast %121 : vector<1x8x8xbf16> to vector<8x8xbf16>
    %cst_116 = arith.constant dense<0.000000e+00> : vector<32x8xf32>
    %123 = tpu.matmul %120, %122, %cst_116 {dimension_numbers = #tpu.dot_dimension_numbers<[1], [0], [0], [1], [0, 0, 1, 1], [], []>} : vector<32x8xbf16>, vector<8x8xbf16>, vector<32x8xf32> -> vector<32x8xf32>
    %124 = arith.addf %118, %123 : vector<32x8xf32>
    %c1_117 = arith.constant 1 : index
    %c1_118 = arith.constant 1 : index
    %c0_119 = arith.constant 0 : index
    %125 = vector.load %arg11[%c1_117, %c1_118, %c0_119] : memref<6x10x8xbf16, #tpu.memory_space<vmem>>, vector<4x8x8xbf16>
    %126 = vector.shape_cast %125 : vector<4x8x8xbf16> to vector<32x8xbf16>
    %c4_120 = arith.constant 4 : index
    %c0_121 = arith.constant 0 : index
    %c0_122 = arith.constant 0 : index
    %127 = vector.load %arg6[%c4_120, %c0_121, %c0_122] : memref<9x8x8xbf16, #tpu.memory_space<vmem>>, vector<1x8x8xbf16>
    %128 = vector.shape_cast %127 : vector<1x8x8xbf16> to vector<8x8xbf16>
    %cst_123 = arith.constant dense<0.000000e+00> : vector<32x8xf32>
    %129 = tpu.matmul %126, %128, %cst_123 {dimension_numbers = #tpu.dot_dimension_numbers<[1], [0], [0], [1], [0, 0, 1, 1], [], []>} : vector<32x8xbf16>, vector<8x8xbf16>, vector<32x8xf32> -> vector<32x8xf32>
    %130 = arith.addf %124, %129 : vector<32x8xf32>
    %c1_124 = arith.constant 1 : index
    %c2_125 = arith.constant 2 : index
    %c0_126 = arith.constant 0 : index
    %131 = vector.load %arg11[%c1_124, %c2_125, %c0_126] : memref<6x10x8xbf16, #tpu.memory_space<vmem>>, vector<4x8x8xbf16>
    %132 = vector.shape_cast %131 : vector<4x8x8xbf16> to vector<32x8xbf16>
    %c5_127 = arith.constant 5 : index
    %c0_128 = arith.constant 0 : index
    %c0_129 = arith.constant 0 : index
    %133 = vector.load %arg6[%c5_127, %c0_128, %c0_129] : memref<9x8x8xbf16, #tpu.memory_space<vmem>>, vector<1x8x8xbf16>
    %134 = vector.shape_cast %133 : vector<1x8x8xbf16> to vector<8x8xbf16>
    %cst_130 = arith.constant dense<0.000000e+00> : vector<32x8xf32>
    %135 = tpu.matmul %132, %134, %cst_130 {dimension_numbers = #tpu.dot_dimension_numbers<[1], [0], [0], [1], [0, 0, 1, 1], [], []>} : vector<32x8xbf16>, vector<8x8xbf16>, vector<32x8xf32> -> vector<32x8xf32>
    %136 = arith.addf %130, %135 : vector<32x8xf32>
    %c2_131 = arith.constant 2 : index
    %c0_132 = arith.constant 0 : index
    %c0_133 = arith.constant 0 : index
    %137 = vector.load %arg11[%c2_131, %c0_132, %c0_133] : memref<6x10x8xbf16, #tpu.memory_space<vmem>>, vector<4x8x8xbf16>
    %138 = vector.shape_cast %137 : vector<4x8x8xbf16> to vector<32x8xbf16>
    %c6_134 = arith.constant 6 : index
    %c0_135 = arith.constant 0 : index
    %c0_136 = arith.constant 0 : index
    %139 = vector.load %arg6[%c6_134, %c0_135, %c0_136] : memref<9x8x8xbf16, #tpu.memory_space<vmem>>, vector<1x8x8xbf16>
    %140 = vector.shape_cast %139 : vector<1x8x8xbf16> to vector<8x8xbf16>
    %cst_137 = arith.constant dense<0.000000e+00> : vector<32x8xf32>
    %141 = tpu.matmul %138, %140, %cst_137 {dimension_numbers = #tpu.dot_dimension_numbers<[1], [0], [0], [1], [0, 0, 1, 1], [], []>} : vector<32x8xbf16>, vector<8x8xbf16>, vector<32x8xf32> -> vector<32x8xf32>
    %142 = arith.addf %136, %141 : vector<32x8xf32>
    %c2_138 = arith.constant 2 : index
    %c1_139 = arith.constant 1 : index
    %c0_140 = arith.constant 0 : index
    %143 = vector.load %arg11[%c2_138, %c1_139, %c0_140] : memref<6x10x8xbf16, #tpu.memory_space<vmem>>, vector<4x8x8xbf16>
    %144 = vector.shape_cast %143 : vector<4x8x8xbf16> to vector<32x8xbf16>
    %c7_141 = arith.constant 7 : index
    %c0_142 = arith.constant 0 : index
    %c0_143 = arith.constant 0 : index
    %145 = vector.load %arg6[%c7_141, %c0_142, %c0_143] : memref<9x8x8xbf16, #tpu.memory_space<vmem>>, vector<1x8x8xbf16>
    %146 = vector.shape_cast %145 : vector<1x8x8xbf16> to vector<8x8xbf16>
    %cst_144 = arith.constant dense<0.000000e+00> : vector<32x8xf32>
    %147 = tpu.matmul %144, %146, %cst_144 {dimension_numbers = #tpu.dot_dimension_numbers<[1], [0], [0], [1], [0, 0, 1, 1], [], []>} : vector<32x8xbf16>, vector<8x8xbf16>, vector<32x8xf32> -> vector<32x8xf32>
    %148 = arith.addf %142, %147 : vector<32x8xf32>
    %c2_145 = arith.constant 2 : index
    %c2_146 = arith.constant 2 : index
    %c0_147 = arith.constant 0 : index
    %149 = vector.load %arg11[%c2_145, %c2_146, %c0_147] : memref<6x10x8xbf16, #tpu.memory_space<vmem>>, vector<4x8x8xbf16>
    %150 = vector.shape_cast %149 : vector<4x8x8xbf16> to vector<32x8xbf16>
    %c8_148 = arith.constant 8 : index
    %c0_149 = arith.constant 0 : index
    %c0_150 = arith.constant 0 : index
    %151 = vector.load %arg6[%c8_148, %c0_149, %c0_150] : memref<9x8x8xbf16, #tpu.memory_space<vmem>>, vector<1x8x8xbf16>
    %152 = vector.shape_cast %151 : vector<1x8x8xbf16> to vector<8x8xbf16>
    %cst_151 = arith.constant dense<0.000000e+00> : vector<32x8xf32>
    %153 = tpu.matmul %150, %152, %cst_151 {dimension_numbers = #tpu.dot_dimension_numbers<[1], [0], [0], [1], [0, 0, 1, 1], [], []>} : vector<32x8xbf16>, vector<8x8xbf16>, vector<32x8xf32> -> vector<32x8xf32>
    %154 = arith.addf %148, %153 : vector<32x8xf32>
    %c0_152 = arith.constant 0 : index
    %c0_153 = arith.constant 0 : index
    %155 = vector.load %arg7[%c0_152, %c0_153] : memref<1x8xf32, #tpu.memory_space<vmem>>, vector<1x8xf32>
    %156 = vector.broadcast %155 : vector<1x8xf32> to vector<32x8xf32>
    %157 = arith.mulf %154, %156 : vector<32x8xf32>
    %c0_154 = arith.constant 0 : index
    %c0_155 = arith.constant 0 : index
    %158 = vector.load %arg8[%c0_154, %c0_155] : memref<1x8xf32, #tpu.memory_space<vmem>>, vector<1x8xf32>
    %159 = vector.broadcast %158 : vector<1x8xf32> to vector<32x8xf32>
    %160 = arith.addf %157, %159 : vector<32x8xf32>
    %cst_156 = arith.constant 0.000000e+00 : f32
    %161 = vector.broadcast %cst_156 : f32 to vector<32x8xf32>
    %162 = arith.maximumf %160, %161 : vector<32x8xf32>
    %163 = arith.truncf %162 : vector<32x8xf32> to vector<32x8xbf16>
    %c0_157 = arith.constant 0 : index
    %c0_158 = arith.constant 0 : index
    %c0_159 = arith.constant 0 : index
    %164 = vector.load %arg9[%c0_157, %c0_158, %c0_159] : memref<1x32x8xbf16, #tpu.memory_space<vmem>>, vector<1x32x8xbf16>
    %165 = vector.shape_cast %164 : vector<1x32x8xbf16> to vector<32x8xbf16>
    %166 = vector.shape_cast %163 : vector<32x8xbf16> to vector<1x32x8xbf16>
    tpu.vector_store %arg9[%c0_157, %c0_158, %c0_159], %166 {strides = array<i32>} : memref<1x32x8xbf16, #tpu.memory_space<vmem>>, vector<1x32x8xbf16>,
    return
  }
  func.func @transform_0(%arg0: i32, %arg1: i32) -> (i32, i32, i32, i32, i32, i32) {
    %c0_i32 = arith.constant 0 : i32
    %c0_i32_0 = arith.constant 0 : i32
    %c0_i32_1 = arith.constant 0 : i32
    %c0_i32_2 = arith.constant 0 : i32
    %c0_i32_3 = arith.constant 0 : i32
    %c0_i32_4 = arith.constant 0 : i32
    return %arg0, %c0_i32, %c0_i32_0, %c0_i32_1, %c0_i32_2, %c0_i32_3 : i32, i32, i32, i32, i32, i32
  }
  func.func @transform_1(%arg0: i32, %arg1: i32) -> (i32, i32, i32) {
    %c0_i32 = arith.constant 0 : i32
    %c0_i32_0 = arith.constant 0 : i32
    %c0_i32_1 = arith.constant 0 : i32
    %c0_i32_2 = arith.constant 0 : i32
    return %c0_i32, %c0_i32_0, %c0_i32_1 : i32, i32, i32
  }
  func.func @transform_2(%arg0: i32, %arg1: i32) -> (i32, i32) {
    %c0_i32 = arith.constant 0 : i32
    %c0_i32_0 = arith.constant 0 : i32
    %c0_i32_1 = arith.constant 0 : i32
    return %c0_i32, %c0_i32_0 : i32, i32
  }
  func.func @transform_3(%arg0: i32, %arg1: i32) -> (i32, i32) {
    %c0_i32 = arith.constant 0 : i32
    %c0_i32_0 = arith.constant 0 : i32
    %c0_i32_1 = arith.constant 0 : i32
    return %c0_i32, %c0_i32_0 : i32, i32
  }
  func.func @transform_4(%arg0: i32, %arg1: i32) -> (i32, i32, i32) {
    %c0_i32 = arith.constant 0 : i32
    %c0_i32_0 = arith.constant 0 : i32
    %c0_i32_1 = arith.constant 0 : i32
    %c0_i32_2 = arith.constant 0 : i32
    return %c0_i32, %c0_i32_0, %c0_i32_1 : i32, i32, i32
  }
  func.func @transform_5(%arg0: i32, %arg1: i32) -> (i32, i32) {
    %c0_i32 = arith.constant 0 : i32
    %c0_i32_0 = arith.constant 0 : i32
    %c0_i32_1 = arith.constant 0 : i32
    return %c0_i32, %c0_i32_0 : i32, i32
  }
  func.func @transform_6(%arg0: i32, %arg1: i32) -> (i32, i32) {
    %c0_i32 = arith.constant 0 : i32
    %c0_i32_0 = arith.constant 0 : i32
    %c0_i32_1 = arith.constant 0 : i32
    return %c0_i32, %c0_i32_0 : i32, i32
  }
  func.func @transform_7(%arg0: i32, %arg1: i32) -> (i32, i32, i32) {
    %c0_i32 = arith.constant 0 : i32
    %c0_i32_0 = arith.constant 0 : i32
    return %arg0, %arg1, %c0_i32 : i32, i32, i32
  }
}

</mosaic_0001>

<llo_original>
// kernel: tpu_custom_call.1
$region0: #{tpu_custom_call.1}
  #allocation0 [shape = 'u32[]', space=smem, size = 0x4, offset = 0x4, fixed_abs, tag = 'smem constant byte address 0x4 - core index']
  #allocation1 [shape = 'u32[144,128]{1,0:T(1,128)}', space=vmem, size = 0x12000, scoped, tag = 'internal scratch']
  #allocation2 [shape = 'bf16[8,10,4]{2,1,0:T(8,128)(2,1)}', space=vmem, size = 0x8000, scoped, tag = 'scratch operand']
  #allocation3 [shape = 'bf16[6,10,8]{2,1,0:T(8,128)(2,1)}', space=vmem, size = 0x6000, scoped, tag = 'scratch operand']
  %s0 = inlined_call_operand.vmem [shape: bf16[2,2,2,12,10,4], index: 0, kind: input, shape index: {}]
  %s1 = inlined_call_operand.vmem [shape: bf16[9,4,8], index: 1, kind: input, shape index: {}]
  %s2 = inlined_call_operand.vmem [shape: f32[1,8], index: 2, kind: input, shape index: {}]
  %s3 = inlined_call_operand.vmem [shape: f32[1,8], index: 3, kind: input, shape index: {}]
  %s4 = inlined_call_operand.vmem [shape: bf16[9,8,8], index: 4, kind: input, shape index: {}]
  %s5 = inlined_call_operand.vmem [shape: f32[1,8], index: 5, kind: input, shape index: {}]
  %s6 = inlined_call_operand.vmem [shape: f32[1,8], index: 6, kind: input, shape index: {}]
  %s7 = inlined_call_operand.vmem [shape: bf16[2,64,8], index: 7, kind: output, shape index: {}]
  %s8 = sld [smem:[#allocation0]]
  $region65: #{tpu_custom_call.1} parent=0
    _
  %s10 = ssub.s32 1, %s8
  %s11 = scalar_select 0, %s10, %s8
  loop: start=0, step=1, limit=6
  $region2: #{tpu_custom_call.1} parent=0 // loop_pre_header
    _
  $region3: #{tpu_custom_call.1} parent=0 // loop_header
    %s13 = sphi 0, %s17
    %p14 = scmp.ge.s32.totalorder %s13, 6
    %s20 = sphi 0, %s32
    %s21 = sphi 0, %s28
    %s22 = sphi 0, %s20
    %s23 = sphi 0, %s21
    %s24 = sphi 0, %s22
    %s25 = sphi 0, %s23
    %s35 = sphi 0, %s37
    %s38 = sphi 0, %s35
    %s39 = sphi 0, %s38
    %s55 = sphi 0, %s39
    %s59 = sphi 0, %s59
    %s61 = sphi 0, %s59
    %s62 = sphi 0, %s61
    %s76 = sphi 0, %s62
    %s80 = sphi 0, %s80
    %s82 = sphi 0, %s80
    %s83 = sphi 0, %s82
    %s97 = sphi 0, %s83
    %s101 = sphi 0, %s101
    %s103 = sphi 0, %s101
    %s104 = sphi 0, %s103
    %s118 = sphi 0, %s104
    %s122 = sphi 0, %s122
    %s124 = sphi 0, %s122
    %s125 = sphi 0, %s124
    %s139 = sphi 0, %s125
    %s143 = sphi 0, %s143
    %s145 = sphi 0, %s143
    %s146 = sphi 0, %s145
    %s160 = sphi 0, %s146
    %s164 = sphi 0, %s164
    %s166 = sphi 0, %s164
    %s167 = sphi 0, %s166
    %s181 = sphi 0, %s167
    %s189 = sphi 0, %s191
    %s192 = sphi 0, %s189
    %s193 = sphi 0, %s192
    %s209 = sphi 0, %s193
  $region4: #{tpu_custom_call.1} parent=0 // loop_header_branch
    %16 = sbr.rel (%p14) target = $region8
  $region5: #{tpu_custom_call.1} parent=0 // loop_body
    %s18 = ssub.s32 %s13, 1
    %s19 = ssub.s32 %s13, 2
    %s26 = sadd.s32 1, %s21
    %p27 = scmp.ge.s32.totalorder %s26, 2
    %s28 = scalar_select %p27, 0, %s26
    %s29 = sadd.s32 1, %s20
    %s30 = scalar_select %p27, %s29, %s20
    %p31 = scmp.ge.s32.totalorder %s30, 2
    %s32 = scalar_select %p31, 0, %s30
    %s33 = ssub.s32 %s20, %s32
    %p34 = scmp.eq.s32.totalorder %s33, 0
    %s36 = sadd.s32 %s35, 1
    %s37 = scalar_select %p34, %s35, %s36
    %p40 = pneg %p34
    %p41 = scmp.eq.s32.totalorder %s13, 3
    %p42 = por %p40, %p41
    %p43 = scmp.ne.s32.totalorder %s35, %s38
    %p44 = scmp.eq.s32.totalorder %s13, 0
    %p45 = por %p43, %p44
    %p46 = scmp.ne.s32.totalorder %s35, %s38
    %p47 = scmp.eq.s32.totalorder %s18, 3
    %p48 = por %p46, %p47
    %p49 = scmp.ne.s32.totalorder %s38, %s39
    %p50 = scmp.eq.s32.totalorder %s18, 0
    %p51 = por %p49, %p50
    %p52 = scmp.ne.s32.totalorder %s38, %s39
    %p53 = scmp.eq.s32.totalorder %s19, 3
    %p54 = por %p52, %p53
    %p56 = scmp.ne.s32.totalorder %s39, %s55
    %p57 = scmp.eq.s32.totalorder %s19, 0
    %p58 = por %p56, %p57
    %s60 = sadd.s32 %s59, 1
    %p63 = scmp.eq.s32.totalorder %s13, 3
    %p64 = scmp.ne.s32.totalorder %s59, %s61
    %p65 = scmp.eq.s32.totalorder %s13, 0
    %p66 = por %p64, %p65
    %p67 = scmp.ne.s32.totalorder %s59, %s61
    %p68 = scmp.eq.s32.totalorder %s18, 3
    %p69 = por %p67, %p68
    %p70 = scmp.ne.s32.totalorder %s61, %s62
    %p71 = scmp.eq.s32.totalorder %s18, 0
    %p72 = por %p70, %p71
    %p73 = scmp.ne.s32.totalorder %s61, %s62
    %p74 = scmp.eq.s32.totalorder %s19, 3
    %p75 = por %p73, %p74
    %p77 = scmp.ne.s32.totalorder %s62, %s76
    %p78 = scmp.eq.s32.totalorder %s19, 0
    %p79 = por %p77, %p78
    %s81 = sadd.s32 %s80, 1
    %p84 = scmp.eq.s32.totalorder %s13, 3
    %p85 = scmp.ne.s32.totalorder %s80, %s82
    %p86 = scmp.eq.s32.totalorder %s13, 0
    %p87 = por %p85, %p86
    %p88 = scmp.ne.s32.totalorder %s80, %s82
    %p89 = scmp.eq.s32.totalorder %s18, 3
    %p90 = por %p88, %p89
    %p91 = scmp.ne.s32.totalorder %s82, %s83
    %p92 = scmp.eq.s32.totalorder %s18, 0
    %p93 = por %p91, %p92
    %p94 = scmp.ne.s32.totalorder %s82, %s83
    %p95 = scmp.eq.s32.totalorder %s19, 3
    %p96 = por %p94, %p95
    %p98 = scmp.ne.s32.totalorder %s83, %s97
    %p99 = scmp.eq.s32.totalorder %s19, 0
    %p100 = por %p98, %p99
    %s102 = sadd.s32 %s101, 1
    %p105 = scmp.eq.s32.totalorder %s13, 3
    %p106 = scmp.ne.s32.totalorder %s101, %s103
    %p107 = scmp.eq.s32.totalorder %s13, 0
    %p108 = por %p106, %p107
    %p109 = scmp.ne.s32.totalorder %s101, %s103
    %p110 = scmp.eq.s32.totalorder %s18, 3
    %p111 = por %p109, %p110
    %p112 = scmp.ne.s32.totalorder %s103, %s104
    %p113 = scmp.eq.s32.totalorder %s18, 0
    %p114 = por %p112, %p113
    %p115 = scmp.ne.s32.totalorder %s103, %s104
    %p116 = scmp.eq.s32.totalorder %s19, 3
    %p117 = por %p115, %p116
    %p119 = scmp.ne.s32.totalorder %s104, %s118
    %p120 = scmp.eq.s32.totalorder %s19, 0
    %p121 = por %p119, %p120
    %s123 = sadd.s32 %s122, 1
    %p126 = scmp.eq.s32.totalorder %s13, 3
    %p127 = scmp.ne.s32.totalorder %s122, %s124
    %p128 = scmp.eq.s32.totalorder %s13, 0
    %p129 = por %p127, %p128
    %p130 = scmp.ne.s32.totalorder %s122, %s124
    %p131 = scmp.eq.s32.totalorder %s18, 3
    %p132 = por %p130, %p131
    %p133 = scmp.ne.s32.totalorder %s124, %s125
    %p134 = scmp.eq.s32.totalorder %s18, 0
    %p135 = por %p133, %p134
    %p136 = scmp.ne.s32.totalorder %s124, %s125
    %p137 = scmp.eq.s32.totalorder %s19, 3
    %p138 = por %p136, %p137
    %p140 = scmp.ne.s32.totalorder %s125, %s139
    %p141 = scmp.eq.s32.totalorder %s19, 0
    %p142 = por %p140, %p141
    %s144 = sadd.s32 %s143, 1
    %p147 = scmp.eq.s32.totalorder %s13, 3
    %p148 = scmp.ne.s32.totalorder %s143, %s145
    %p149 = scmp.eq.s32.totalorder %s13, 0
    %p150 = por %p148, %p149
    %p151 = scmp.ne.s32.totalorder %s143, %s145
    %p152 = scmp.eq.s32.totalorder %s18, 3
    %p153 = por %p151, %p152
    %p154 = scmp.ne.s32.totalorder %s145, %s146
    %p155 = scmp.eq.s32.totalorder %s18, 0
    %p156 = por %p154, %p155
    %p157 = scmp.ne.s32.totalorder %s145, %s146
    %p158 = scmp.eq.s32.totalorder %s19, 3
    %p159 = por %p157, %p158
    %p161 = scmp.ne.s32.totalorder %s146, %s160
    %p162 = scmp.eq.s32.totalorder %s19, 0
    %p163 = por %p161, %p162
    %s165 = sadd.s32 %s164, 1
    %p168 = scmp.eq.s32.totalorder %s13, 3
    %p169 = scmp.ne.s32.totalorder %s164, %s166
    %p170 = scmp.eq.s32.totalorder %s13, 0
    %p171 = por %p169, %p170
    %p172 = scmp.ne.s32.totalorder %s164, %s166
    %p173 = scmp.eq.s32.totalorder %s18, 3
    %p174 = por %p172, %p173
    %p175 = scmp.ne.s32.totalorder %s166, %s167
    %p176 = scmp.eq.s32.totalorder %s18, 0
    %p177 = por %p175, %p176
    %p178 = scmp.ne.s32.totalorder %s166, %s167
    %p179 = scmp.eq.s32.totalorder %s19, 3
    %p180 = por %p178, %p179
    %p182 = scmp.ne.s32.totalorder %s167, %s181
    %p183 = scmp.eq.s32.totalorder %s19, 0
    %p184 = por %p182, %p183
    %s185 = ssub.s32 %s20, %s32
    %s186 = ssub.s32 %s21, %s28
    %s187 = sor.u32 %s185, %s186
    %p188 = scmp.eq.s32.totalorder %s187, 0
    %s190 = sadd.s32 %s189, 1
    %s191 = scalar_select %p188, %s189, %s190
    %p194 = pneg %p188
    %p195 = scmp.eq.s32.totalorder %s13, 3
    %p196 = por %p194, %p195
    %p197 = scmp.ne.s32.totalorder %s189, %s192
    %p198 = scmp.eq.s32.totalorder %s13, 0
    %p199 = por %p197, %p198
    %p200 = scmp.ne.s32.totalorder %s189, %s192
    %p201 = scmp.eq.s32.totalorder %s18, 3
    %p202 = por %p200, %p201
    %p203 = scmp.ne.s32.totalorder %s192, %s193
    %p204 = scmp.eq.s32.totalorder %s18, 0
    %p205 = por %p203, %p204
    %p206 = scmp.ne.s32.totalorder %s192, %s193
    %p207 = scmp.eq.s32.totalorder %s19, 3
    %p208 = por %p206, %p207
    %p210 = scmp.ne.s32.totalorder %s193, %s209
    %p211 = scmp.eq.s32.totalorder %s19, 0
    %p212 = por %p210, %p211
    %p213 = scmp.le.s32.totalorder 1, %s13
    %p214 = scmp.lt.s32.totalorder %s13, 5
    %p215 = pnand %p213, %p214
    %p216 = pneg %p215
    // Predicated region
    $region9: #{tpu_custom_call.1} parent=5 // pred_check
      _
    $region10: #{tpu_custom_call.1} parent=5 // pred_check_branch
      %218 = sbr.rel (%p215) target = $region12
    $region11: #{tpu_custom_call.1} parent=5 // pred_region
      %s219 = ssub.s32 %s13, 1
      // Predicated region
      $region13: #{tpu_custom_call.1} parent=11 // pred_check
        %p220 = pneg %p72
      $region14: #{tpu_custom_call.1} parent=11 // pred_check_branch
        %222 = sbr.rel (%p220) target = $region16
      $region15: #{tpu_custom_call.1} parent=11 // pred_region
        _
      $region16: #{tpu_custom_call.1} parent=11 // pred_fallthru
        _
      // Predicated region
      $region17: #{tpu_custom_call.1} parent=11 // pred_check
        %p223 = pneg %p93
      $region18: #{tpu_custom_call.1} parent=11 // pred_check_branch
        %225 = sbr.rel (%p223) target = $region20
      $region19: #{tpu_custom_call.1} parent=11 // pred_region
        _
      $region20: #{tpu_custom_call.1} parent=11 // pred_fallthru
        _
      // Predicated region
      $region21: #{tpu_custom_call.1} parent=11 // pred_check
        %p226 = pneg %p114
      $region22: #{tpu_custom_call.1} parent=11 // pred_check_branch
        %228 = sbr.rel (%p226) target = $region24
      $region23: #{tpu_custom_call.1} parent=11 // pred_region
        _
      $region24: #{tpu_custom_call.1} parent=11 // pred_fallthru
        _
      // Predicated region
      $region25: #{tpu_custom_call.1} parent=11 // pred_check
        %p229 = pneg %p135
      $region26: #{tpu_custom_call.1} parent=11 // pred_check_branch
        %231 = sbr.rel (%p229) target = $region28
      $region27: #{tpu_custom_call.1} parent=11 // pred_region
        _
      $region28: #{tpu_custom_call.1} parent=11 // pred_fallthru
        _
      // Predicated region
      $region29: #{tpu_custom_call.1} parent=11 // pred_check
        %p232 = pneg %p156
      $region30: #{tpu_custom_call.1} parent=11 // pred_check_branch
        %234 = sbr.rel (%p232) target = $region32
      $region31: #{tpu_custom_call.1} parent=11 // pred_region
        _
      $region32: #{tpu_custom_call.1} parent=11 // pred_fallthru
        _
      // Predicated region
      $region33: #{tpu_custom_call.1} parent=11 // pred_check
        %p235 = pneg %p177
      $region34: #{tpu_custom_call.1} parent=11 // pred_check_branch
        %237 = sbr.rel (%p235) target = $region36
      $region35: #{tpu_custom_call.1} parent=11 // pred_region
        _
      $region36: #{tpu_custom_call.1} parent=11 // pred_fallthru
        _
    $region12: #{tpu_custom_call.1} parent=5 // pred_fallthru
      _
    %p238 = scmp.lt.s32.totalorder %s13, 4
    // Predicated region
    $region37: #{tpu_custom_call.1} parent=5 // pred_check
      %p239 = pneg %p238
    $region38: #{tpu_custom_call.1} parent=5 // pred_check_branch
      %241 = sbr.rel (%p239) target = $region40
    $region39: #{tpu_custom_call.1} parent=5 // pred_region
      // Predicated region
      $region41: #{tpu_custom_call.1} parent=39 // pred_check
        %p242 = pneg %p45
      $region42: #{tpu_custom_call.1} parent=39 // pred_check_branch
        %244 = sbr.rel (%p242) target = $region44
      $region43: #{tpu_custom_call.1} parent=39 // pred_region
        %p245 = scmp.lt.s32.totalorder %s20, 1
        %s246 = scalar_select %p245, %s20, 1
        %s247 = smul.addr %s246, 96
        %s248 = smul.addr %s247, 4
        %s249 = scalar_lea.vmem %s0, %s248
      $region44: #{tpu_custom_call.1} parent=39 // pred_fallthru
        _
    $region40: #{tpu_custom_call.1} parent=5 // pred_fallthru
      _
    %p250 = scmp.le.s32.totalorder 1, %s13
    %p251 = scmp.lt.s32.totalorder %s13, 5
    %p252 = pnand %p250, %p251
    %p253 = pneg %p252
    // Predicated region
    $region45: #{tpu_custom_call.1} parent=5 // pred_check
      _
    $region46: #{tpu_custom_call.1} parent=5 // pred_check_branch
      %255 = sbr.rel (%p252) target = $region48
    $region47: #{tpu_custom_call.1} parent=5 // pred_region
      %s256 = ssub.s32 %s13, 1
      %p257 = scmp.lt.s32.totalorder %s22, 1
      %s258 = scalar_select %p257, %s22, 1
      %s259 = smul.addr %s258, 96
      %s260 = smul.addr %s259, 4
      %s261 = scalar_lea.vmem %s0, %s260
      %p262 = pneg %p51
      %p263 = pneg %p48
      %p264 = pneg %p72
      %p265 = pneg %p69
      %p266 = pneg %p93
      %p267 = pneg %p90
      %p268 = pneg %p114
      %p269 = pneg %p111
      %p270 = pneg %p135
      %p271 = pneg %p132
      %p272 = pneg %p156
      %p273 = pneg %p153
      %p274 = pneg %p177
      %p275 = pneg %p174
      %p276 = pneg %p205
      %p277 = pneg %p202
      %s278 = smul.u32 4, %s23
      %p279 = scmp.lt.s32.totalorder %s22, 1
      %s280 = scalar_select %p279, %s22, 1
      %p281 = scmp.lt.s32.totalorder %s278, 7
      %s282 = scalar_select %p281, %s278, 7
      %s283 = smul.addr %s280, 8
      %s284 = sadd.s32 %s282, %s283
      %s285 = smul.addr %s284, 4
      %s286 = scalar_lea.vmem %s7, %s285
      %p287 = scmp.lt.s32.totalorder %s22, 1
      %s288 = scalar_select %p287, %s22, 1
      %s289 = smul.addr %s288, 96
      %s290 = smul.addr %s289, 4
      %s291 = scalar_lea.vmem %s0, %s290
      %s292 = smul.u32 4, %s23
      %p293 = scmp.lt.s32.totalorder %s22, 1
      %s294 = scalar_select %p293, %s22, 1
      %p295 = scmp.lt.s32.totalorder %s292, 7
      %s296 = scalar_select %p295, %s292, 7
      %s297 = smul.addr %s294, 8
      %s298 = sadd.s32 %s296, %s297
      %s299 = smul.addr %s298, 4
      %s300 = scalar_lea.vmem %s7, %s299
      %s301 = smul.u32 4, %s23
      %s303 = smul.u32 %s23, 4
      %p304 = scmp.eq.s32.totalorder %s23, 0
      // Predicated region
      $region49: #{tpu_custom_call.1} parent=47 // pred_check
        %p305 = pneg %p304
      $region50: #{tpu_custom_call.1} parent=47 // pred_check_branch
        %307 = sbr.rel (%p305) target = $region52
      $region51: #{tpu_custom_call.1} parent=47 // pred_region
        %vm308 = vcmask 60416
        %309 = vst.msk [vmem:[#allocation3] sm:$0xf] %vm308, 0
        %vm310 = vcmask 57344
        %311 = vst.msk [vmem:[#allocation3 + $0x4] sm:$0x1] %vm310, 0
        %312 = vst.msk [vmem:[#allocation3 + $0x8] sm:$0xf] %vm308, 0
        %313 = vst.msk [vmem:[#allocation3 + $0xc] sm:$0x1] %vm310, 0
        %314 = vst.msk [vmem:[#allocation3 + $0x10] sm:$0xf] %vm308, 0
        %315 = vst.msk [vmem:[#allocation3 + $0x14] sm:$0x1] %vm310, 0
        %316 = vst.msk [vmem:[#allocation3 + $0x18] sm:$0xf] %vm308, 0
        %317 = vst.msk [vmem:[#allocation3 + $0x1c] sm:$0x1] %vm310, 0
        %318 = vst.msk [vmem:[#allocation3 + $0x20] sm:$0xf] %vm308, 0
        %319 = vst.msk [vmem:[#allocation3 + $0x24] sm:$0x1] %vm310, 0
        %320 = vst.msk [vmem:[#allocation3 + $0x28] sm:$0xf] %vm308, 0
        %321 = vst.msk [vmem:[#allocation3 + $0x2c] sm:$0x1] %vm310, 0
      $region52: #{tpu_custom_call.1} parent=47 // pred_fallthru
        _
      %s322 = smul.u32 %s303, 2
      %s323 = smul.addr %s322, 4
      %s324 = scalar_lea.vmem %s291, %s323
      %v325 = vld [vmem:[%s324] sm:$0xf]
      %v326 = vld [vmem:[%s324 + $0x4] sm:$0x1]
      %v327 = vld [vmem:[%s324 + $0x8] sm:$0xf]
      %v328 = vld [vmem:[%s324 + $0xc] sm:$0x1]
      %v329 = vld [vmem:[%s324 + $0x10] sm:$0xf]
      %v330 = vld [vmem:[%s324 + $0x14] sm:$0x1]
      %v331 = vld [vmem:[%s324 + $0x18] sm:$0xf]
      %v332 = vld [vmem:[%s324 + $0x1c] sm:$0x1]
      %v333 = vld [vmem:[%s324 + $0x20] sm:$0xf]
      %v334 = vld [vmem:[%s324 + $0x24] sm:$0x1]
      %v335 = vld [vmem:[%s324 + $0x28] sm:$0xf]
      %v336 = vld [vmem:[%s324 + $0x2c] sm:$0x1]
      %v337 = vld [vmem:[%s324 + $0x30] sm:$0xf]
      %v338 = vld [vmem:[%s324 + $0x34] sm:$0x1]
      %v339 = vld [vmem:[%s324 + $0x38] sm:$0xf]
      %v340 = vld [vmem:[%s324 + $0x3c] sm:$0x1]
      %s341 = sadd.s32 %s322, 24
      %s342 = smul.addr %s341, 4
      %s343 = scalar_lea.vmem %s291, %s342
      %v344 = vld [vmem:[%s343] sm:$0xf]
      %v345 = vld [vmem:[%s343 + $0x4] sm:$0x1]
      %v346 = vld [vmem:[%s343 + $0x8] sm:$0xf]
      %v347 = vld [vmem:[%s343 + $0xc] sm:$0x1]
      %v348 = vld [vmem:[%s343 + $0x10] sm:$0xf]
      %v349 = vld [vmem:[%s343 + $0x14] sm:$0x1]
      %v350 = vld [vmem:[%s343 + $0x18] sm:$0xf]
      %v351 = vld [vmem:[%s343 + $0x1c] sm:$0x1]
      %v352 = vld [vmem:[%s343 + $0x20] sm:$0xf]
      %v353 = vld [vmem:[%s343 + $0x24] sm:$0x1]
      %v354 = vld [vmem:[%s343 + $0x28] sm:$0xf]
      %v355 = vld [vmem:[%s343 + $0x2c] sm:$0x1]
      %v356 = vld [vmem:[%s343 + $0x30] sm:$0xf]
      %v357 = vld [vmem:[%s343 + $0x34] sm:$0x1]
      %v358 = vld [vmem:[%s343 + $0x38] sm:$0xf]
      %v359 = vld [vmem:[%s343 + $0x3c] sm:$0x1]
      %s360 = sadd.s32 %s322, 48
      %s361 = smul.addr %s360, 4
      %s362 = scalar_lea.vmem %s291, %s361
      %v363 = vld [vmem:[%s362] sm:$0xf]
      %v364 = vld [vmem:[%s362 + $0x4] sm:$0x1]
      %v365 = vld [vmem:[%s362 + $0x8] sm:$0xf]
      %v366 = vld [vmem:[%s362 + $0xc] sm:$0x1]
      %v367 = vld [vmem:[%s362 + $0x10] sm:$0xf]
      %v368 = vld [vmem:[%s362 + $0x14] sm:$0x1]
      %v369 = vld [vmem:[%s362 + $0x18] sm:$0xf]
      %v370 = vld [vmem:[%s362 + $0x1c] sm:$0x1]
      %v371 = vld [vmem:[%s362 + $0x20] sm:$0xf]
      %v372 = vld [vmem:[%s362 + $0x24] sm:$0x1]
      %v373 = vld [vmem:[%s362 + $0x28] sm:$0xf]
      %v374 = vld [vmem:[%s362 + $0x2c] sm:$0x1]
      %v375 = vld [vmem:[%s362 + $0x30] sm:$0xf]
      %v376 = vld [vmem:[%s362 + $0x34] sm:$0x1]
      %v377 = vld [vmem:[%s362 + $0x38] sm:$0xf]
      %v378 = vld [vmem:[%s362 + $0x3c] sm:$0x1]
      %s379 = sadd.s32 %s341, 48
      %s380 = smul.addr %s379, 4
      %s381 = scalar_lea.vmem %s291, %s380
      %v382 = vld [vmem:[%s381] sm:$0xf]
      %v383 = vld [vmem:[%s381 + $0x4] sm:$0x1]
      %v384 = vld [vmem:[%s381 + $0x8] sm:$0xf]
      %v385 = vld [vmem:[%s381 + $0xc] sm:$0x1]
      %v386 = vld [vmem:[%s381 + $0x10] sm:$0xf]
      %v387 = vld [vmem:[%s381 + $0x14] sm:$0x1]
      %v388 = vld [vmem:[%s381 + $0x18] sm:$0xf]
      %v389 = vld [vmem:[%s381 + $0x1c] sm:$0x1]
      %v390 = vld [vmem:[%s381 + $0x20] sm:$0xf]
      %v391 = vld [vmem:[%s381 + $0x24] sm:$0x1]
      %v392 = vld [vmem:[%s381 + $0x28] sm:$0xf]
      %v393 = vld [vmem:[%s381 + $0x2c] sm:$0x1]
      %v394 = vld [vmem:[%s381 + $0x30] sm:$0xf]
      %v395 = vld [vmem:[%s381 + $0x34] sm:$0x1]
      %v396 = vld [vmem:[%s381 + $0x38] sm:$0xf]
      %v397 = vld [vmem:[%s381 + $0x3c] sm:$0x1]
      %v398 = vmax.bf16 %v325, %v344
      %v399 = vmax.bf16 %v326, %v345
      %v400 = vmax.bf16 %v327, %v346
      %v401 = vmax.bf16 %v328, %v347
      %v402 = vmax.bf16 %v329, %v348
      %v403 = vmax.bf16 %v330, %v349
      %v404 = vmax.bf16 %v331, %v350
      %v405 = vmax.bf16 %v332, %v351
      %v406 = vmax.bf16 %v333, %v352
      %v407 = vmax.bf16 %v334, %v353
      %v408 = vmax.bf16 %v335, %v354
      %v409 = vmax.bf16 %v336, %v355
      %v410 = vmax.bf16 %v337, %v356
      %v411 = vmax.bf16 %v338, %v357
      %v412 = vmax.bf16 %v339, %v358
      %v413 = vmax.bf16 %v340, %v359
      %v414 = vmax.bf16 %v363, %v382
      %v415 = vmax.bf16 %v364, %v383
      %v416 = vmax.bf16 %v365, %v384
      %v417 = vmax.bf16 %v366, %v385
      %v418 = vmax.bf16 %v367, %v386
      %v419 = vmax.bf16 %v368, %v387
      %v420 = vmax.bf16 %v369, %v388
      %v421 = vmax.bf16 %v370, %v389
      %v422 = vmax.bf16 %v371, %v390
      %v423 = vmax.bf16 %v372, %v391
      %v424 = vmax.bf16 %v373, %v392
      %v425 = vmax.bf16 %v374, %v393
      %v426 = vmax.bf16 %v375, %v394
      %v427 = vmax.bf16 %v376, %v395
      %v428 = vmax.bf16 %v377, %v396
      %v429 = vmax.bf16 %v378, %v397
      %v430 = vmax.bf16 %v398, %v414
      %v431 = vmax.bf16 %v399, %v415
      %v432 = vmax.bf16 %v400, %v416
      %v433 = vmax.bf16 %v401, %v417
      %v434 = vmax.bf16 %v402, %v418
      %v435 = vmax.bf16 %v403, %v419
      %v436 = vmax.bf16 %v404, %v420
      %v437 = vmax.bf16 %v405, %v421
      %v438 = vmax.bf16 %v406, %v422
      %v439 = vmax.bf16 %v407, %v423
      %v440 = vmax.bf16 %v408, %v424
      %v441 = vmax.bf16 %v409, %v425
      %v442 = vmax.bf16 %v410, %v426
      %v443 = vmax.bf16 %v411, %v427
      %v444 = vmax.bf16 %v412, %v428
      %v445 = vmax.bf16 %v413, %v429
      %vm446 = vcmask 27648
      %447 = vst.msk [vmem:[#allocation2] sm:$0xf] %vm446, %v430
      %vm448 = vcmask 24576
      %449 = vst.msk [vmem:[#allocation2 + $0x4] sm:$0x1] %vm448, %v431
      %450 = vst.msk [vmem:[#allocation2 + $0x8] sm:$0xf] %vm446, %v432
      %451 = vst.msk [vmem:[#allocation2 + $0xc] sm:$0x1] %vm448, %v433
      %452 = vst.msk [vmem:[#allocation2 + $0x10] sm:$0xf] %vm446, %v434
      %453 = vst.msk [vmem:[#allocation2 + $0x14] sm:$0x1] %vm448, %v435
      %454 = vst.msk [vmem:[#allocation2 + $0x18] sm:$0xf] %vm446, %v436
      %455 = vst.msk [vmem:[#allocation2 + $0x1c] sm:$0x1] %vm448, %v437
      %456 = vst.msk [vmem:[#allocation2 + $0x20] sm:$0xf] %vm446, %v438
      %457 = vst.msk [vmem:[#allocation2 + $0x24] sm:$0x1] %vm448, %v439
      %458 = vst.msk [vmem:[#allocation2 + $0x28] sm:$0xf] %vm446, %v440
      %459 = vst.msk [vmem:[#allocation2 + $0x2c] sm:$0x1] %vm448, %v441
      %460 = vst.msk [vmem:[#allocation2 + $0x30] sm:$0xf] %vm446, %v442
      %461 = vst.msk [vmem:[#allocation2 + $0x34] sm:$0x1] %vm448, %v443
      %462 = vst.msk [vmem:[#allocation2 + $0x38] sm:$0xf] %vm446, %v444
      %463 = vst.msk [vmem:[#allocation2 + $0x3c] sm:$0x1] %vm448, %v445
      %v464 = vld [vmem:[#allocation2] sm:$0xf]
      %v465 = vld [vmem:[#allocation2 + $0x8] sm:$0xf]
      %v466 = vld [vmem:[#allocation2 + $0x10] sm:$0xf]
      %v467 = vld [vmem:[#allocation2 + $0x18] sm:$0xf]
      %v468 = vld [vmem:[#allocation2 + $0x20] sm:$0xf]
      %v469 = vld [vmem:[#allocation2 + $0x28] sm:$0xf]
      %v470 = vld [vmem:[%s1] sm:$0x3]
      %v471 = vld [vmem:[#allocation2 + $0x4] sm:$0x1]
      %v472 = vld [vmem:[#allocation2 + $0xc] sm:$0x1]
      %v473 = vld [vmem:[#allocation2 + $0x14] sm:$0x1]
      %v474 = vld [vmem:[#allocation2 + $0x1c] sm:$0x1]
      %v475 = vld [vmem:[#allocation2 + $0x24] sm:$0x1]
      %v476 = vld [vmem:[#allocation2 + $0x2c] sm:$0x1]
      %vm477 = vsmask.f32 3328
      %vm478 = vsmask.f32 7440
      %vm479 = vmor %vm477, %vm478
      %v481 = vshrl.u32 %v464, 16
      %v483 = vrot.slane %v481, 4
      %v484 = vshll.u32 %v464, 16
      %v486 = vrot.slane %v484, 5
      %v487 = vor.u32 %v483, %v486
      %v488 = vrot.slane %v487, 4
      %v490 = vshll.u32 %v471, 16
      %v492 = vrot.slane %v490, 5
      %v493 = vsel %vm479, %v488, %v492
      %v495 = vshrl.u32 %v465, 16
      %v497 = vrot.slane %v495, 4
      %v498 = vshll.u32 %v465, 16
      %v500 = vrot.slane %v498, 5
      %v501 = vor.u32 %v497, %v500
      %v502 = vrot.slane %v501, 4
      %v504 = vshll.u32 %v472, 16
      %v506 = vrot.slane %v504, 5
      %v507 = vsel %vm479, %v502, %v506
      %v509 = vshrl.u32 %v466, 16
      %v511 = vrot.slane %v509, 4
      %v512 = vshll.u32 %v466, 16
      %v514 = vrot.slane %v512, 5
      %v515 = vor.u32 %v511, %v514
      %v516 = vrot.slane %v515, 4
      %v518 = vshll.u32 %v473, 16
      %v520 = vrot.slane %v518, 5
      %v521 = vsel %vm479, %v516, %v520
      %v523 = vshrl.u32 %v467, 16
      %v525 = vrot.slane %v523, 4
      %v526 = vshll.u32 %v467, 16
      %v528 = vrot.slane %v526, 5
      %v529 = vor.u32 %v525, %v528
      %v530 = vrot.slane %v529, 4
      %v532 = vshll.u32 %v474, 16
      %v534 = vrot.slane %v532, 5
      %v535 = vsel %vm479, %v530, %v534
      %v537 = vshrl.u32 %v468, 16
      %v539 = vrot.slane %v537, 4
      %v540 = vshll.u32 %v468, 16
      %v542 = vrot.slane %v540, 5
      %v543 = vor.u32 %v539, %v542
      %v544 = vrot.slane %v543, 4
      %v546 = vshll.u32 %v475, 16
      %v548 = vrot.slane %v546, 5
      %v549 = vsel %vm479, %v544, %v548
      %v551 = vshrl.u32 %v469, 16
      %v553 = vrot.slane %v551, 4
      %v554 = vshll.u32 %v469, 16
      %v556 = vrot.slane %v554, 5
      %v557 = vor.u32 %v553, %v556
      %v558 = vrot.slane %v557, 4
      %v560 = vshll.u32 %v476, 16
      %v562 = vrot.slane %v560, 5
      %v563 = vsel %vm479, %v558, %v562
      %s564 = scalar_lea.vmem %s1, 2
      %v565 = vld [vmem:[%s564] sm:$0x3]
      %v566 = vunpack.c.l.b16 %v493
      %v567 = vunpack.c.l.b16 %v507
      %v568 = vunpack.c.l.b16 %v521
      %v569 = vunpack.c.l.b16 %v535
      %v570 = vunpack.c.l.b16 %v549
      %v571 = vunpack.c.l.b16 %v563
      %v572 = vpack.c.b16 %v567, %v566
      %v573 = vpack.c.b16 %v569, %v568
      %v574 = vpack.c.b16 %v571, %v570
      %vm575 = vcmask 31744
      %v577 = vsel %vm575, %v572, 0
      %v580 = vsel %vm575, %v573, 0
      %v583 = vsel %vm575, %v574, 0
      %vm585 = vcmask 1041408
      %v587 = vsel %vm585, %v565, 0
      %589 = vmatprep.subr.bf16.mxu0 0
      %590 = vmatpush1.bf16.msra.mxu0 %v587
      %591 = vmatprep.subr.bf16.mxu0 0
      %592 = vmatpush1.bf16.msra.mxu0 0
      %593 = vmatprep.subr.bf16.mxu0 0
      %594 = vmatpush1.bf16.msra.mxu0 0
      %595 = vmatprep.subr.bf16.mxu0 0
      %596 = vmatpush1.bf16.msra.mxu0 0
      %597 = vmatprep.subr.bf16.mxu0 0
      %598 = vmatpush1.bf16.msra.mxu0 0
      %599 = vmatprep.subr.bf16.mxu0 0
      %600 = vmatpush1.bf16.msra.mxu0 0
      %601 = vmatprep.subr.bf16.mxu0 0
      %602 = vmatpush1.bf16.msra.mxu0 0
      %603 = vmatprep.subr.bf16.mxu0 0
      %604 = vmatpush1.bf16.msra.mxu0 0
      %605 = vmatprep.subr.bf16.mxu0 0
      %606 = vmatpush1.bf16.msra.mxu0 0
      %607 = vmatprep.subr.bf16.mxu0 0
      %608 = vmatpush1.bf16.msra.mxu0 0
      %609 = vmatprep.subr.bf16.mxu0 0
      %610 = vmatpush1.bf16.msra.mxu0 0
      %611 = vmatprep.subr.bf16.mxu0 0
      %612 = vmatpush1.bf16.msra.mxu0 0
      %613 = vmatprep.subr.bf16.mxu0 0
      %614 = vmatpush1.bf16.msra.mxu0 0
      %615 = vmatprep.subr.bf16.mxu0 0
      %616 = vmatpush1.bf16.msra.mxu0 0
      %617 = vmatprep.subr.bf16.mxu0 0
      %618 = vmatpush1.bf16.msra.mxu0 0
      %619 = vmatprep.subr.bf16.mxu0 0
      %620 = vmatpush1.bf16.msra.mxu0 0
      %621 = vmatprep.mubr.bf16.mxu0 0
      %622 = vmatmul.mubr.bf16.gmra.mrb[0].mxu0 %v577
      %v623 = vpop.f32.mrb[0].mxu0
      %v624 = vadd.f32 0.0, %v623
      %v625 = vpop.f32.mrb[0].mxu0
      %v626 = vpop.f32.mrb[0].mxu0
      %v627 = vadd.f32 0.0, %v626
      %v628 = vpop.f32.mrb[0].mxu0
      %629 = vmatprep.mubr.bf16.mxu0 0
      %630 = vmatmul.mubr.bf16.gmra.mrb[0].mxu0 %v580
      %v631 = vpop.f32.mrb[0].mxu0
      %v632 = vadd.f32 0.0, %v631
      %v633 = vpop.f32.mrb[0].mxu0
      %v634 = vpop.f32.mrb[0].mxu0
      %v635 = vadd.f32 0.0, %v634
      %v636 = vpop.f32.mrb[0].mxu0
      %637 = vmatprep.mubr.bf16.mxu0 0
      %638 = vmatmul.mubr.bf16.gmra.mrb[0].mxu0 %v583
      %v639 = vpop.f32.mrb[0].mxu0
      %v640 = vadd.f32 0.0, %v639
      %v641 = vpop.f32.mrb[0].mxu0
      %v642 = vpop.f32.mrb[0].mxu0
      %v643 = vadd.f32 0.0, %v642
      %v644 = vpop.f32.mrb[0].mxu0
      %645 = vdwg.mxu0
      %v652 = vunpack.c.l.b16 %v464
      %v653 = vunpack.c.l.b16 %v465
      %v654 = vunpack.c.l.b16 %v466
      %v655 = vunpack.c.l.b16 %v467
      %v656 = vunpack.c.l.b16 %v468
      %v657 = vunpack.c.l.b16 %v469
      %v658 = vpack.c.b16 %v653, %v652
      %v659 = vpack.c.b16 %v655, %v654
      %v660 = vpack.c.b16 %v657, %v656
      %v662 = vsel %vm575, %v658, 0
      %v665 = vsel %vm575, %v659, 0
      %v668 = vsel %vm575, %v660, 0
      %v671 = vsel %vm585, %v470, 0
      %673 = vmatprep.subr.bf16.mxu0 0
      %674 = vmatpush1.bf16.msra.mxu0 %v671
      %675 = vmatprep.subr.bf16.mxu0 0
      %676 = vmatpush1.bf16.msra.mxu0 0
      %677 = vmatprep.subr.bf16.mxu0 0
      %678 = vmatpush1.bf16.msra.mxu0 0
      %679 = vmatprep.subr.bf16.mxu0 0
      %680 = vmatpush1.bf16.msra.mxu0 0
      %681 = vmatprep.subr.bf16.mxu0 0
      %682 = vmatpush1.bf16.msra.mxu0 0
      %683 = vmatprep.subr.bf16.mxu0 0
      %684 = vmatpush1.bf16.msra.mxu0 0
      %685 = vmatprep.subr.bf16.mxu0 0
      %686 = vmatpush1.bf16.msra.mxu0 0
      %687 = vmatprep.subr.bf16.mxu0 0
      %688 = vmatpush1.bf16.msra.mxu0 0
      %689 = vmatprep.subr.bf16.mxu0 0
      %690 = vmatpush1.bf16.msra.mxu0 0
      %691 = vmatprep.subr.bf16.mxu0 0
      %692 = vmatpush1.bf16.msra.mxu0 0
      %693 = vmatprep.subr.bf16.mxu0 0
      %694 = vmatpush1.bf16.msra.mxu0 0
      %695 = vmatprep.subr.bf16.mxu0 0
      %696 = vmatpush1.bf16.msra.mxu0 0
      %697 = vmatprep.subr.bf16.mxu0 0
      %698 = vmatpush1.bf16.msra.mxu0 0
      %699 = vmatprep.subr.bf16.mxu0 0
      %700 = vmatpush1.bf16.msra.mxu0 0
      %701 = vmatprep.subr.bf16.mxu0 0
      %702 = vmatpush1.bf16.msra.mxu0 0
      %703 = vmatprep.subr.bf16.mxu0 0
      %704 = vmatpush1.bf16.msra.mxu0 0
      %705 = vmatprep.mubr.bf16.mxu0 0
      %706 = vmatmul.mubr.bf16.gmra.mrb[0].mxu0 %v662
      %v707 = vpop.f32.mrb[0].mxu0
      %v708 = vadd.f32 %v624, %v707
      %v709 = vpop.f32.mrb[0].mxu0
      %v710 = vpop.f32.mrb[0].mxu0
      %v711 = vadd.f32 %v627, %v710
      %v712 = vpop.f32.mrb[0].mxu0
      %713 = vmatprep.mubr.bf16.mxu0 0
      %714 = vmatmul.mubr.bf16.gmra.mrb[0].mxu0 %v665
      %v715 = vpop.f32.mrb[0].mxu0
      %v716 = vadd.f32 %v632, %v715
      %v717 = vpop.f32.mrb[0].mxu0
      %v718 = vpop.f32.mrb[0].mxu0
      %v719 = vadd.f32 %v635, %v718
      %v720 = vpop.f32.mrb[0].mxu0
      %721 = vmatprep.mubr.bf16.mxu0 0
      %722 = vmatmul.mubr.bf16.gmra.mrb[0].mxu0 %v668
      %v723 = vpop.f32.mrb[0].mxu0
      %v724 = vadd.f32 %v640, %v723
      %v725 = vpop.f32.mrb[0].mxu0
      %v726 = vpop.f32.mrb[0].mxu0
      %v727 = vadd.f32 %v643, %v726
      %v728 = vpop.f32.mrb[0].mxu0
      %729 = vdwg.mxu0
      %v730 = vld [vmem:[#allocation2] sm:$0xe]
      %v731 = vld [vmem:[#allocation2 + $0x8] sm:$0xe]
      %v732 = vld [vmem:[#allocation2 + $0x10] sm:$0xe]
      %v733 = vld [vmem:[#allocation2 + $0x18] sm:$0xe]
      %v734 = vld [vmem:[#allocation2 + $0x20] sm:$0xe]
      %v735 = vld [vmem:[#allocation2 + $0x28] sm:$0xe]
      %vm748 = vcmask 1042432
      %vm749 = vcmask 1046532
      %vm750 = vmor %vm748, %vm749
      %v751 = vrot.slane %v730, 5
      %v752 = vrot.slane %v751, 4
      %v753 = vrot.slane %v471, 5
      %v754 = vsel %vm750, %v752, %v753
      %v755 = vrot.slane %v731, 5
      %v756 = vrot.slane %v755, 4
      %v757 = vrot.slane %v472, 5
      %v758 = vsel %vm750, %v756, %v757
      %v759 = vrot.slane %v732, 5
      %v760 = vrot.slane %v759, 4
      %v761 = vrot.slane %v473, 5
      %v762 = vsel %vm750, %v760, %v761
      %v763 = vrot.slane %v733, 5
      %v764 = vrot.slane %v763, 4
      %v765 = vrot.slane %v474, 5
      %v766 = vsel %vm750, %v764, %v765
      %v767 = vrot.slane %v734, 5
      %v768 = vrot.slane %v767, 4
      %v769 = vrot.slane %v475, 5
      %v770 = vsel %vm750, %v768, %v769
      %v771 = vrot.slane %v735, 5
      %v772 = vrot.slane %v771, 4
      %v773 = vrot.slane %v476, 5
      %v774 = vsel %vm750, %v772, %v773
      %s775 = scalar_lea.vmem %s1, 4
      %v776 = vld [vmem:[%s775] sm:$0x3]
      %v777 = vunpack.c.l.b16 %v754
      %v778 = vunpack.c.l.b16 %v758
      %v779 = vunpack.c.l.b16 %v762
      %v780 = vunpack.c.l.b16 %v766
      %v781 = vunpack.c.l.b16 %v770
      %v782 = vunpack.c.l.b16 %v774
      %v783 = vpack.c.b16 %v778, %v777
      %v784 = vpack.c.b16 %v780, %v779
      %v785 = vpack.c.b16 %v782, %v781
      %v787 = vsel %vm575, %v783, 0
      %v790 = vsel %vm575, %v784, 0
      %v793 = vsel %vm575, %v785, 0
      %v796 = vsel %vm585, %v776, 0
      %798 = vmatprep.subr.bf16.mxu0 0
      %799 = vmatpush1.bf16.msra.mxu0 %v796
      %800 = vmatprep.subr.bf16.mxu0 0
      %801 = vmatpush1.bf16.msra.mxu0 0
      %802 = vmatprep.subr.bf16.mxu0 0
      %803 = vmatpush1.bf16.msra.mxu0 0
      %804 = vmatprep.subr.bf16.mxu0 0
      %805 = vmatpush1.bf16.msra.mxu0 0
      %806 = vmatprep.subr.bf16.mxu0 0
      %807 = vmatpush1.bf16.msra.mxu0 0
      %808 = vmatprep.subr.bf16.mxu0 0
      %809 = vmatpush1.bf16.msra.mxu0 0
      %810 = vmatprep.subr.bf16.mxu0 0
      %811 = vmatpush1.bf16.msra.mxu0 0
      %812 = vmatprep.subr.bf16.mxu0 0
      %813 = vmatpush1.bf16.msra.mxu0 0
      %814 = vmatprep.subr.bf16.mxu0 0
      %815 = vmatpush1.bf16.msra.mxu0 0
      %816 = vmatprep.subr.bf16.mxu0 0
      %817 = vmatpush1.bf16.msra.mxu0 0
      %818 = vmatprep.subr.bf16.mxu0 0
      %819 = vmatpush1.bf16.msra.mxu0 0
      %820 = vmatprep.subr.bf16.mxu0 0
      %821 = vmatpush1.bf16.msra.mxu0 0
      %822 = vmatprep.subr.bf16.mxu0 0
      %823 = vmatpush1.bf16.msra.mxu0 0
      %824 = vmatprep.subr.bf16.mxu0 0
      %825 = vmatpush1.bf16.msra.mxu0 0
      %826 = vmatprep.subr.bf16.mxu0 0
      %827 = vmatpush1.bf16.msra.mxu0 0
      %828 = vmatprep.subr.bf16.mxu0 0
      %829 = vmatpush1.bf16.msra.mxu0 0
      %830 = vmatprep.mubr.bf16.mxu0 0
      %831 = vmatmul.mubr.bf16.gmra.mrb[0].mxu0 %v787
      %v832 = vpop.f32.mrb[0].mxu0
      %v833 = vadd.f32 0.0, %v832
      %v834 = vpop.f32.mrb[0].mxu0
      %v835 = vpop.f32.mrb[0].mxu0
      %v836 = vadd.f32 0.0, %v835
      %v837 = vpop.f32.mrb[0].mxu0
      %838 = vmatprep.mubr.bf16.mxu0 0
      %839 = vmatmul.mubr.bf16.gmra.mrb[0].mxu0 %v790
      %v840 = vpop.f32.mrb[0].mxu0
      %v841 = vadd.f32 0.0, %v840
      %v842 = vpop.f32.mrb[0].mxu0
      %v843 = vpop.f32.mrb[0].mxu0
      %v844 = vadd.f32 0.0, %v843
      %v845 = vpop.f32.mrb[0].mxu0
      %846 = vmatprep.mubr.bf16.mxu0 0
      %847 = vmatmul.mubr.bf16.gmra.mrb[0].mxu0 %v793
      %v848 = vpop.f32.mrb[0].mxu0
      %v849 = vadd.f32 0.0, %v848
      %v850 = vpop.f32.mrb[0].mxu0
      %v851 = vpop.f32.mrb[0].mxu0
      %v852 = vadd.f32 0.0, %v851
      %v853 = vpop.f32.mrb[0].mxu0
      %854 = vdwg.mxu0
      %v855 = vadd.f32 %v708, %v833
      %v856 = vadd.f32 %v711, %v836
      %v857 = vadd.f32 %v716, %v841
      %v858 = vadd.f32 %v719, %v844
      %v859 = vadd.f32 %v724, %v849
      %v860 = vadd.f32 %v727, %v852
      %s861 = scalar_lea.vmem [#allocation2], 8
      %v862 = vld [vmem:[%s861] sm:$0xf]
      %v863 = vld [vmem:[%s861 + $0x8] sm:$0xf]
      %v864 = vld [vmem:[%s861 + $0x10] sm:$0xf]
      %v865 = vld [vmem:[%s861 + $0x18] sm:$0xf]
      %v866 = vld [vmem:[%s861 + $0x20] sm:$0xf]
      %v867 = vld [vmem:[%s861 + $0x28] sm:$0xf]
      %s868 = scalar_lea.vmem %s1, 6
      %v869 = vld [vmem:[%s868] sm:$0x3]
      %v876 = vunpack.c.l.b16 %v862
      %v877 = vunpack.c.l.b16 %v863
      %v878 = vunpack.c.l.b16 %v864
      %v879 = vunpack.c.l.b16 %v865
      %v880 = vunpack.c.l.b16 %v866
      %v881 = vunpack.c.l.b16 %v867
      %v882 = vpack.c.b16 %v877, %v876
      %v883 = vpack.c.b16 %v879, %v878
      %v884 = vpack.c.b16 %v881, %v880
      %v886 = vsel %vm575, %v882, 0
      %v889 = vsel %vm575, %v883, 0
      %v892 = vsel %vm575, %v884, 0
      %v895 = vsel %vm585, %v869, 0
      %897 = vmatprep.subr.bf16.mxu0 0
      %898 = vmatpush1.bf16.msra.mxu0 %v895
      %899 = vmatprep.subr.bf16.mxu0 0
      %900 = vmatpush1.bf16.msra.mxu0 0
      %901 = vmatprep.subr.bf16.mxu0 0
      %902 = vmatpush1.bf16.msra.mxu0 0
      %903 = vmatprep.subr.bf16.mxu0 0
      %904 = vmatpush1.bf16.msra.mxu0 0
      %905 = vmatprep.subr.bf16.mxu0 0
      %906 = vmatpush1.bf16.msra.mxu0 0
      %907 = vmatprep.subr.bf16.mxu0 0
      %908 = vmatpush1.bf16.msra.mxu0 0
      %909 = vmatprep.subr.bf16.mxu0 0
      %910 = vmatpush1.bf16.msra.mxu0 0
      %911 = vmatprep.subr.bf16.mxu0 0
      %912 = vmatpush1.bf16.msra.mxu0 0
      %913 = vmatprep.subr.bf16.mxu0 0
      %914 = vmatpush1.bf16.msra.mxu0 0
      %915 = vmatprep.subr.bf16.mxu0 0
      %916 = vmatpush1.bf16.msra.mxu0 0
      %917 = vmatprep.subr.bf16.mxu0 0
      %918 = vmatpush1.bf16.msra.mxu0 0
      %919 = vmatprep.subr.bf16.mxu0 0
      %920 = vmatpush1.bf16.msra.mxu0 0
      %921 = vmatprep.subr.bf16.mxu0 0
      %922 = vmatpush1.bf16.msra.mxu0 0
      %923 = vmatprep.subr.bf16.mxu0 0
      %924 = vmatpush1.bf16.msra.mxu0 0
      %925 = vmatprep.subr.bf16.mxu0 0
      %926 = vmatpush1.bf16.msra.mxu0 0
      %927 = vmatprep.subr.bf16.mxu0 0
      %928 = vmatpush1.bf16.msra.mxu0 0
      %929 = vmatprep.mubr.bf16.mxu0 0
      %930 = vmatmul.mubr.bf16.gmra.mrb[0].mxu0 %v886
      %v931 = vpop.f32.mrb[0].mxu0
      %v932 = vadd.f32 0.0, %v931
      %v933 = vpop.f32.mrb[0].mxu0
      %v934 = vpop.f32.mrb[0].mxu0
      %v935 = vadd.f32 0.0, %v934
      %v936 = vpop.f32.mrb[0].mxu0
      %937 = vmatprep.mubr.bf16.mxu0 0
      %938 = vmatmul.mubr.bf16.gmra.mrb[0].mxu0 %v889
      %v939 = vpop.f32.mrb[0].mxu0
      %v940 = vadd.f32 0.0, %v939
      %v941 = vpop.f32.mrb[0].mxu0
      %v942 = vpop.f32.mrb[0].mxu0
      %v943 = vadd.f32 0.0, %v942
      %v944 = vpop.f32.mrb[0].mxu0
      %945 = vmatprep.mubr.bf16.mxu0 0
      %946 = vmatmul.mubr.bf16.gmra.mrb[0].mxu0 %v892
      %v947 = vpop.f32.mrb[0].mxu0
      %v948 = vadd.f32 0.0, %v947
      %v949 = vpop.f32.mrb[0].mxu0
      %v950 = vpop.f32.mrb[0].mxu0
      %v951 = vadd.f32 0.0, %v950
      %v952 = vpop.f32.mrb[0].mxu0
      %953 = vdwg.mxu0
      %v954 = vadd.f32 %v855, %v932
      %v955 = vadd.f32 %v856, %v935
      %v956 = vadd.f32 %v857, %v940
      %v957 = vadd.f32 %v858, %v943
      %v958 = vadd.f32 %v859, %v948
      %v959 = vadd.f32 %v860, %v951
      %v960 = vld [vmem:[%s861] sm:$0xf]
      %v961 = vld [vmem:[%s861 + $0x4] sm:$0x1]
      %v962 = vld [vmem:[%s861 + $0x8] sm:$0xf]
      %v963 = vld [vmem:[%s861 + $0xc] sm:$0x1]
      %v964 = vld [vmem:[%s861 + $0x10] sm:$0xf]
      %v965 = vld [vmem:[%s861 + $0x14] sm:$0x1]
      %v966 = vld [vmem:[%s861 + $0x18] sm:$0xf]
      %v967 = vld [vmem:[%s861 + $0x1c] sm:$0x1]
      %v968 = vld [vmem:[%s861 + $0x20] sm:$0xf]
      %v969 = vld [vmem:[%s861 + $0x24] sm:$0x1]
      %v970 = vld [vmem:[%s861 + $0x28] sm:$0xf]
      %v971 = vld [vmem:[%s861 + $0x2c] sm:$0x1]
      %v973 = vshrl.u32 %v960, 16
      %v975 = vrot.slane %v973, 4
      %v976 = vshll.u32 %v960, 16
      %v978 = vrot.slane %v976, 5
      %v979 = vor.u32 %v975, %v978
      %v980 = vrot.slane %v979, 4
      %v982 = vshll.u32 %v961, 16
      %v984 = vrot.slane %v982, 5
      %v985 = vsel %vm479, %v980, %v984
      %v987 = vshrl.u32 %v962, 16
      %v989 = vrot.slane %v987, 4
      %v990 = vshll.u32 %v962, 16
      %v992 = vrot.slane %v990, 5
      %v993 = vor.u32 %v989, %v992
      %v994 = vrot.slane %v993, 4
      %v996 = vshll.u32 %v963, 16
      %v998 = vrot.slane %v996, 5
      %v999 = vsel %vm479, %v994, %v998
      %v1001 = vshrl.u32 %v964, 16
      %v1003 = vrot.slane %v1001, 4
      %v1004 = vshll.u32 %v964, 16
      %v1006 = vrot.slane %v1004, 5
      %v1007 = vor.u32 %v1003, %v1006
      %v1008 = vrot.slane %v1007, 4
      %v1010 = vshll.u32 %v965, 16
      %v1012 = vrot.slane %v1010, 5
      %v1013 = vsel %vm479, %v1008, %v1012
      %v1015 = vshrl.u32 %v966, 16
      %v1017 = vrot.slane %v1015, 4
      %v1018 = vshll.u32 %v966, 16
      %v1020 = vrot.slane %v1018, 5
      %v1021 = vor.u32 %v1017, %v1020
      %v1022 = vrot.slane %v1021, 4
      %v1024 = vshll.u32 %v967, 16
      %v1026 = vrot.slane %v1024, 5
      %v1027 = vsel %vm479, %v1022, %v1026
      %v1029 = vshrl.u32 %v968, 16
      %v1031 = vrot.slane %v1029, 4
      %v1032 = vshll.u32 %v968, 16
      %v1034 = vrot.slane %v1032, 5
      %v1035 = vor.u32 %v1031, %v1034
      %v1036 = vrot.slane %v1035, 4
      %v1038 = vshll.u32 %v969, 16
      %v1040 = vrot.slane %v1038, 5
      %v1041 = vsel %vm479, %v1036, %v1040
      %v1043 = vshrl.u32 %v970, 16
      %v1045 = vrot.slane %v1043, 4
      %v1046 = vshll.u32 %v970, 16
      %v1048 = vrot.slane %v1046, 5
      %v1049 = vor.u32 %v1045, %v1048
      %v1050 = vrot.slane %v1049, 4
      %v1052 = vshll.u32 %v971, 16
      %v1054 = vrot.slane %v1052, 5
      %v1055 = vsel %vm479, %v1050, %v1054
      %s1056 = scalar_lea.vmem %s1, 8
      %v1057 = vld [vmem:[%s1056] sm:$0x3]
      %v1058 = vunpack.c.l.b16 %v985
      %v1059 = vunpack.c.l.b16 %v999
      %v1060 = vunpack.c.l.b16 %v1013
      %v1061 = vunpack.c.l.b16 %v1027
      %v1062 = vunpack.c.l.b16 %v1041
      %v1063 = vunpack.c.l.b16 %v1055
      %v1064 = vpack.c.b16 %v1059, %v1058
      %v1065 = vpack.c.b16 %v1061, %v1060
      %v1066 = vpack.c.b16 %v1063, %v1062
      %v1068 = vsel %vm575, %v1064, 0
      %v1071 = vsel %vm575, %v1065, 0
      %v1074 = vsel %vm575, %v1066, 0
      %v1077 = vsel %vm585, %v1057, 0
      %1079 = vmatprep.subr.bf16.mxu0 0
      %1080 = vmatpush1.bf16.msra.mxu0 %v1077
      %1081 = vmatprep.subr.bf16.mxu0 0
      %1082 = vmatpush1.bf16.msra.mxu0 0
      %1083 = vmatprep.subr.bf16.mxu0 0
      %1084 = vmatpush1.bf16.msra.mxu0 0
      %1085 = vmatprep.subr.bf16.mxu0 0
      %1086 = vmatpush1.bf16.msra.mxu0 0
      %1087 = vmatprep.subr.bf16.mxu0 0
      %1088 = vmatpush1.bf16.msra.mxu0 0
      %1089 = vmatprep.subr.bf16.mxu0 0
      %1090 = vmatpush1.bf16.msra.mxu0 0
      %1091 = vmatprep.subr.bf16.mxu0 0
      %1092 = vmatpush1.bf16.msra.mxu0 0
      %1093 = vmatprep.subr.bf16.mxu0 0
      %1094 = vmatpush1.bf16.msra.mxu0 0
      %1095 = vmatprep.subr.bf16.mxu0 0
      %1096 = vmatpush1.bf16.msra.mxu0 0
      %1097 = vmatprep.subr.bf16.mxu0 0
      %1098 = vmatpush1.bf16.msra.mxu0 0
      %1099 = vmatprep.subr.bf16.mxu0 0
      %1100 = vmatpush1.bf16.msra.mxu0 0
      %1101 = vmatprep.subr.bf16.mxu0 0
      %1102 = vmatpush1.bf16.msra.mxu0 0
      %1103 = vmatprep.subr.bf16.mxu0 0
      %1104 = vmatpush1.bf16.msra.mxu0 0
      %1105 = vmatprep.subr.bf16.mxu0 0
      %1106 = vmatpush1.bf16.msra.mxu0 0
      %1107 = vmatprep.subr.bf16.mxu0 0
      %1108 = vmatpush1.bf16.msra.mxu0 0
      %1109 = vmatprep.subr.bf16.mxu0 0
      %1110 = vmatpush1.bf16.msra.mxu0 0
      %1111 = vmatprep.mubr.bf16.mxu0 0
      %1112 = vmatmul.mubr.bf16.gmra.mrb[0].mxu0 %v1068
      %v1113 = vpop.f32.mrb[0].mxu0
      %v1114 = vadd.f32 0.0, %v1113
      %v1115 = vpop.f32.mrb[0].mxu0
      %v1116 = vpop.f32.mrb[0].mxu0
      %v1117 = vadd.f32 0.0, %v1116
      %v1118 = vpop.f32.mrb[0].mxu0
      %1119 = vmatprep.mubr.bf16.mxu0 0
      %1120 = vmatmul.mubr.bf16.gmra.mrb[0].mxu0 %v1071
      %v1121 = vpop.f32.mrb[0].mxu0
      %v1122 = vadd.f32 0.0, %v1121
      %v1123 = vpop.f32.mrb[0].mxu0
      %v1124 = vpop.f32.mrb[0].mxu0
      %v1125 = vadd.f32 0.0, %v1124
      %v1126 = vpop.f32.mrb[0].mxu0
      %1127 = vmatprep.mubr.bf16.mxu0 0
      %1128 = vmatmul.mubr.bf16.gmra.mrb[0].mxu0 %v1074
      %v1129 = vpop.f32.mrb[0].mxu0
      %v1130 = vadd.f32 0.0, %v1129
      %v1131 = vpop.f32.mrb[0].mxu0
      %v1132 = vpop.f32.mrb[0].mxu0
      %v1133 = vadd.f32 0.0, %v1132
      %v1134 = vpop.f32.mrb[0].mxu0
      %1135 = vdwg.mxu0
      %v1136 = vadd.f32 %v954, %v1114
      %v1137 = vadd.f32 %v955, %v1117
      %v1138 = vadd.f32 %v956, %v1122
      %v1139 = vadd.f32 %v957, %v1125
      %v1140 = vadd.f32 %v958, %v1130
      %v1141 = vadd.f32 %v959, %v1133
      %v1142 = vld [vmem:[%s861] sm:$0xe]
      %v1143 = vld [vmem:[%s861 + $0x8] sm:$0xe]
      %v1144 = vld [vmem:[%s861 + $0x10] sm:$0xe]
      %v1145 = vld [vmem:[%s861 + $0x18] sm:$0xe]
      %v1146 = vld [vmem:[%s861 + $0x20] sm:$0xe]
      %v1147 = vld [vmem:[%s861 + $0x28] sm:$0xe]
      %v1160 = vrot.slane %v1142, 5
      %v1161 = vrot.slane %v1160, 4
      %v1162 = vrot.slane %v961, 5
      %v1163 = vsel %vm750, %v1161, %v1162
      %v1164 = vrot.slane %v1143, 5
      %v1165 = vrot.slane %v1164, 4
      %v1166 = vrot.slane %v963, 5
      %v1167 = vsel %vm750, %v1165, %v1166
      %v1168 = vrot.slane %v1144, 5
      %v1169 = vrot.slane %v1168, 4
      %v1170 = vrot.slane %v965, 5
      %v1171 = vsel %vm750, %v1169, %v1170
      %v1172 = vrot.slane %v1145, 5
      %v1173 = vrot.slane %v1172, 4
      %v1174 = vrot.slane %v967, 5
      %v1175 = vsel %vm750, %v1173, %v1174
      %v1176 = vrot.slane %v1146, 5
      %v1177 = vrot.slane %v1176, 4
      %v1178 = vrot.slane %v969, 5
      %v1179 = vsel %vm750, %v1177, %v1178
      %v1180 = vrot.slane %v1147, 5
      %v1181 = vrot.slane %v1180, 4
      %v1182 = vrot.slane %v971, 5
      %v1183 = vsel %vm750, %v1181, %v1182
      %s1184 = scalar_lea.vmem %s1, 10
      %v1185 = vld [vmem:[%s1184] sm:$0x3]
      %v1186 = vunpack.c.l.b16 %v1163
      %v1187 = vunpack.c.l.b16 %v1167
      %v1188 = vunpack.c.l.b16 %v1171
      %v1189 = vunpack.c.l.b16 %v1175
      %v1190 = vunpack.c.l.b16 %v1179
      %v1191 = vunpack.c.l.b16 %v1183
      %v1192 = vpack.c.b16 %v1187, %v1186
      %v1193 = vpack.c.b16 %v1189, %v1188
      %v1194 = vpack.c.b16 %v1191, %v1190
      %v1196 = vsel %vm575, %v1192, 0
      %v1199 = vsel %vm575, %v1193, 0
      %v1202 = vsel %vm575, %v1194, 0
      %v1205 = vsel %vm585, %v1185, 0
      %1207 = vmatprep.subr.bf16.mxu0 0
      %1208 = vmatpush1.bf16.msra.mxu0 %v1205
      %1209 = vmatprep.subr.bf16.mxu0 0
      %1210 = vmatpush1.bf16.msra.mxu0 0
      %1211 = vmatprep.subr.bf16.mxu0 0
      %1212 = vmatpush1.bf16.msra.mxu0 0
      %1213 = vmatprep.subr.bf16.mxu0 0
      %1214 = vmatpush1.bf16.msra.mxu0 0
      %1215 = vmatprep.subr.bf16.mxu0 0
      %1216 = vmatpush1.bf16.msra.mxu0 0
      %1217 = vmatprep.subr.bf16.mxu0 0
      %1218 = vmatpush1.bf16.msra.mxu0 0
      %1219 = vmatprep.subr.bf16.mxu0 0
      %1220 = vmatpush1.bf16.msra.mxu0 0
      %1221 = vmatprep.subr.bf16.mxu0 0
      %1222 = vmatpush1.bf16.msra.mxu0 0
      %1223 = vmatprep.subr.bf16.mxu0 0
      %1224 = vmatpush1.bf16.msra.mxu0 0
      %1225 = vmatprep.subr.bf16.mxu0 0
      %1226 = vmatpush1.bf16.msra.mxu0 0
      %1227 = vmatprep.subr.bf16.mxu0 0
      %1228 = vmatpush1.bf16.msra.mxu0 0
      %1229 = vmatprep.subr.bf16.mxu0 0
      %1230 = vmatpush1.bf16.msra.mxu0 0
      %1231 = vmatprep.subr.bf16.mxu0 0
      %1232 = vmatpush1.bf16.msra.mxu0 0
      %1233 = vmatprep.subr.bf16.mxu0 0
      %1234 = vmatpush1.bf16.msra.mxu0 0
      %1235 = vmatprep.subr.bf16.mxu0 0
      %1236 = vmatpush1.bf16.msra.mxu0 0
      %1237 = vmatprep.subr.bf16.mxu0 0
      %1238 = vmatpush1.bf16.msra.mxu0 0
      %1239 = vmatprep.mubr.bf16.mxu0 0
      %1240 = vmatmul.mubr.bf16.gmra.mrb[0].mxu0 %v1196
      %v1241 = vpop.f32.mrb[0].mxu0
      %v1242 = vadd.f32 0.0, %v1241
      %v1243 = vpop.f32.mrb[0].mxu0
      %v1244 = vpop.f32.mrb[0].mxu0
      %v1245 = vadd.f32 0.0, %v1244
      %v1246 = vpop.f32.mrb[0].mxu0
      %1247 = vmatprep.mubr.bf16.mxu0 0
      %1248 = vmatmul.mubr.bf16.gmra.mrb[0].mxu0 %v1199
      %v1249 = vpop.f32.mrb[0].mxu0
      %v1250 = vadd.f32 0.0, %v1249
      %v1251 = vpop.f32.mrb[0].mxu0
      %v1252 = vpop.f32.mrb[0].mxu0
      %v1253 = vadd.f32 0.0, %v1252
      %v1254 = vpop.f32.mrb[0].mxu0
      %1255 = vmatprep.mubr.bf16.mxu0 0
      %1256 = vmatmul.mubr.bf16.gmra.mrb[0].mxu0 %v1202
      %v1257 = vpop.f32.mrb[0].mxu0
      %v1258 = vadd.f32 0.0, %v1257
      %v1259 = vpop.f32.mrb[0].mxu0
      %v1260 = vpop.f32.mrb[0].mxu0
      %v1261 = vadd.f32 0.0, %v1260
      %v1262 = vpop.f32.mrb[0].mxu0
      %1263 = vdwg.mxu0
      %v1264 = vadd.f32 %v1136, %v1242
      %v1265 = vadd.f32 %v1137, %v1245
      %v1266 = vadd.f32 %v1138, %v1250
      %v1267 = vadd.f32 %v1139, %v1253
      %v1268 = vadd.f32 %v1140, %v1258
      %v1269 = vadd.f32 %v1141, %v1261
      %s1270 = scalar_lea.vmem [#allocation2], 16
      %v1271 = vld [vmem:[%s1270] sm:$0xf]
      %v1272 = vld [vmem:[%s1270 + $0x8] sm:$0xf]
      %v1273 = vld [vmem:[%s1270 + $0x10] sm:$0xf]
      %v1274 = vld [vmem:[%s1270 + $0x18] sm:$0xf]
      %v1275 = vld [vmem:[%s1270 + $0x20] sm:$0xf]
      %v1276 = vld [vmem:[%s1270 + $0x28] sm:$0xf]
      %s1277 = scalar_lea.vmem %s1, 12
      %v1278 = vld [vmem:[%s1277] sm:$0x3]
      %v1285 = vunpack.c.l.b16 %v1271
      %v1286 = vunpack.c.l.b16 %v1272
      %v1287 = vunpack.c.l.b16 %v1273
      %v1288 = vunpack.c.l.b16 %v1274
      %v1289 = vunpack.c.l.b16 %v1275
      %v1290 = vunpack.c.l.b16 %v1276
      %v1291 = vpack.c.b16 %v1286, %v1285
      %v1292 = vpack.c.b16 %v1288, %v1287
      %v1293 = vpack.c.b16 %v1290, %v1289
      %v1295 = vsel %vm575, %v1291, 0
      %v1298 = vsel %vm575, %v1292, 0
      %v1301 = vsel %vm575, %v1293, 0
      %v1304 = vsel %vm585, %v1278, 0
      %1306 = vmatprep.subr.bf16.mxu0 0
      %1307 = vmatpush1.bf16.msra.mxu0 %v1304
      %1308 = vmatprep.subr.bf16.mxu0 0
      %1309 = vmatpush1.bf16.msra.mxu0 0
      %1310 = vmatprep.subr.bf16.mxu0 0
      %1311 = vmatpush1.bf16.msra.mxu0 0
      %1312 = vmatprep.subr.bf16.mxu0 0
      %1313 = vmatpush1.bf16.msra.mxu0 0
      %1314 = vmatprep.subr.bf16.mxu0 0
      %1315 = vmatpush1.bf16.msra.mxu0 0
      %1316 = vmatprep.subr.bf16.mxu0 0
      %1317 = vmatpush1.bf16.msra.mxu0 0
      %1318 = vmatprep.subr.bf16.mxu0 0
      %1319 = vmatpush1.bf16.msra.mxu0 0
      %1320 = vmatprep.subr.bf16.mxu0 0
      %1321 = vmatpush1.bf16.msra.mxu0 0
      %1322 = vmatprep.subr.bf16.mxu0 0
      %1323 = vmatpush1.bf16.msra.mxu0 0
      %1324 = vmatprep.subr.bf16.mxu0 0
      %1325 = vmatpush1.bf16.msra.mxu0 0
      %1326 = vmatprep.subr.bf16.mxu0 0
      %1327 = vmatpush1.bf16.msra.mxu0 0
      %1328 = vmatprep.subr.bf16.mxu0 0
      %1329 = vmatpush1.bf16.msra.mxu0 0
      %1330 = vmatprep.subr.bf16.mxu0 0
      %1331 = vmatpush1.bf16.msra.mxu0 0
      %1332 = vmatprep.subr.bf16.mxu0 0
      %1333 = vmatpush1.bf16.msra.mxu0 0
      %1334 = vmatprep.subr.bf16.mxu0 0
      %1335 = vmatpush1.bf16.msra.mxu0 0
      %1336 = vmatprep.subr.bf16.mxu0 0
      %1337 = vmatpush1.bf16.msra.mxu0 0
      %1338 = vmatprep.mubr.bf16.mxu0 0
      %1339 = vmatmul.mubr.bf16.gmra.mrb[0].mxu0 %v1295
      %v1340 = vpop.f32.mrb[0].mxu0
      %v1341 = vadd.f32 0.0, %v1340
      %v1342 = vpop.f32.mrb[0].mxu0
      %v1343 = vpop.f32.mrb[0].mxu0
      %v1344 = vadd.f32 0.0, %v1343
      %v1345 = vpop.f32.mrb[0].mxu0
      %1346 = vmatprep.mubr.bf16.mxu0 0
      %1347 = vmatmul.mubr.bf16.gmra.mrb[0].mxu0 %v1298
      %v1348 = vpop.f32.mrb[0].mxu0
      %v1349 = vadd.f32 0.0, %v1348
      %v1350 = vpop.f32.mrb[0].mxu0
      %v1351 = vpop.f32.mrb[0].mxu0
      %v1352 = vadd.f32 0.0, %v1351
      %v1353 = vpop.f32.mrb[0].mxu0
      %1354 = vmatprep.mubr.bf16.mxu0 0
      %1355 = vmatmul.mubr.bf16.gmra.mrb[0].mxu0 %v1301
      %v1356 = vpop.f32.mrb[0].mxu0
      %v1357 = vadd.f32 0.0, %v1356
      %v1358 = vpop.f32.mrb[0].mxu0
      %v1359 = vpop.f32.mrb[0].mxu0
      %v1360 = vadd.f32 0.0, %v1359
      %v1361 = vpop.f32.mrb[0].mxu0
      %1362 = vdwg.mxu0
      %v1363 = vadd.f32 %v1264, %v1341
      %v1364 = vadd.f32 %v1265, %v1344
      %v1365 = vadd.f32 %v1266, %v1349
      %v1366 = vadd.f32 %v1267, %v1352
      %v1367 = vadd.f32 %v1268, %v1357
      %v1368 = vadd.f32 %v1269, %v1360
      %v1369 = vld [vmem:[%s1270] sm:$0xf]
      %v1370 = vld [vmem:[%s1270 + $0x4] sm:$0x1]
      %v1371 = vld [vmem:[%s1270 + $0x8] sm:$0xf]
      %v1372 = vld [vmem:[%s1270 + $0xc] sm:$0x1]
      %v1373 = vld [vmem:[%s1270 + $0x10] sm:$0xf]
      %v1374 = vld [vmem:[%s1270 + $0x14] sm:$0x1]
      %v1375 = vld [vmem:[%s1270 + $0x18] sm:$0xf]
      %v1376 = vld [vmem:[%s1270 + $0x1c] sm:$0x1]
      %v1377 = vld [vmem:[%s1270 + $0x20] sm:$0xf]
      %v1378 = vld [vmem:[%s1270 + $0x24] sm:$0x1]
      %v1379 = vld [vmem:[%s1270 + $0x28] sm:$0xf]
      %v1380 = vld [vmem:[%s1270 + $0x2c] sm:$0x1]
      %v1382 = vshrl.u32 %v1369, 16
      %v1384 = vrot.slane %v1382, 4
      %v1385 = vshll.u32 %v1369, 16
      %v1387 = vrot.slane %v1385, 5
      %v1388 = vor.u32 %v1384, %v1387
      %v1389 = vrot.slane %v1388, 4
      %v1391 = vshll.u32 %v1370, 16
      %v1393 = vrot.slane %v1391, 5
      %v1394 = vsel %vm479, %v1389, %v1393
      %v1396 = vshrl.u32 %v1371, 16
      %v1398 = vrot.slane %v1396, 4
      %v1399 = vshll.u32 %v1371, 16
      %v1401 = vrot.slane %v1399, 5
      %v1402 = vor.u32 %v1398, %v1401
      %v1403 = vrot.slane %v1402, 4
      %v1405 = vshll.u32 %v1372, 16
      %v1407 = vrot.slane %v1405, 5
      %v1408 = vsel %vm479, %v1403, %v1407
      %v1410 = vshrl.u32 %v1373, 16
      %v1412 = vrot.slane %v1410, 4
      %v1413 = vshll.u32 %v1373, 16
      %v1415 = vrot.slane %v1413, 5
      %v1416 = vor.u32 %v1412, %v1415
      %v1417 = vrot.slane %v1416, 4
      %v1419 = vshll.u32 %v1374, 16
      %v1421 = vrot.slane %v1419, 5
      %v1422 = vsel %vm479, %v1417, %v1421
      %v1424 = vshrl.u32 %v1375, 16
      %v1426 = vrot.slane %v1424, 4
      %v1427 = vshll.u32 %v1375, 16
      %v1429 = vrot.slane %v1427, 5
      %v1430 = vor.u32 %v1426, %v1429
      %v1431 = vrot.slane %v1430, 4
      %v1433 = vshll.u32 %v1376, 16
      %v1435 = vrot.slane %v1433, 5
      %v1436 = vsel %vm479, %v1431, %v1435
      %v1438 = vshrl.u32 %v1377, 16
      %v1440 = vrot.slane %v1438, 4
      %v1441 = vshll.u32 %v1377, 16
      %v1443 = vrot.slane %v1441, 5
      %v1444 = vor.u32 %v1440, %v1443
      %v1445 = vrot.slane %v1444, 4
      %v1447 = vshll.u32 %v1378, 16
      %v1449 = vrot.slane %v1447, 5
      %v1450 = vsel %vm479, %v1445, %v1449
      %v1452 = vshrl.u32 %v1379, 16
      %v1454 = vrot.slane %v1452, 4
      %v1455 = vshll.u32 %v1379, 16
      %v1457 = vrot.slane %v1455, 5
      %v1458 = vor.u32 %v1454, %v1457
      %v1459 = vrot.slane %v1458, 4
      %v1461 = vshll.u32 %v1380, 16
      %v1463 = vrot.slane %v1461, 5
      %v1464 = vsel %vm479, %v1459, %v1463
      %s1465 = scalar_lea.vmem %s1, 14
      %v1466 = vld [vmem:[%s1465] sm:$0x3]
      %v1467 = vunpack.c.l.b16 %v1394
      %v1468 = vunpack.c.l.b16 %v1408
      %v1469 = vunpack.c.l.b16 %v1422
      %v1470 = vunpack.c.l.b16 %v1436
      %v1471 = vunpack.c.l.b16 %v1450
      %v1472 = vunpack.c.l.b16 %v1464
      %v1473 = vpack.c.b16 %v1468, %v1467
      %v1474 = vpack.c.b16 %v1470, %v1469
      %v1475 = vpack.c.b16 %v1472, %v1471
      %v1477 = vsel %vm575, %v1473, 0
      %v1480 = vsel %vm575, %v1474, 0
      %v1483 = vsel %vm575, %v1475, 0
      %v1486 = vsel %vm585, %v1466, 0
      %1488 = vmatprep.subr.bf16.mxu0 0
      %1489 = vmatpush1.bf16.msra.mxu0 %v1486
      %1490 = vmatprep.subr.bf16.mxu0 0
      %1491 = vmatpush1.bf16.msra.mxu0 0
      %1492 = vmatprep.subr.bf16.mxu0 0
      %1493 = vmatpush1.bf16.msra.mxu0 0
      %1494 = vmatprep.subr.bf16.mxu0 0
      %1495 = vmatpush1.bf16.msra.mxu0 0
      %1496 = vmatprep.subr.bf16.mxu0 0
      %1497 = vmatpush1.bf16.msra.mxu0 0
      %1498 = vmatprep.subr.bf16.mxu0 0
      %1499 = vmatpush1.bf16.msra.mxu0 0
      %1500 = vmatprep.subr.bf16.mxu0 0
      %1501 = vmatpush1.bf16.msra.mxu0 0
      %1502 = vmatprep.subr.bf16.mxu0 0
      %1503 = vmatpush1.bf16.msra.mxu0 0
      %1504 = vmatprep.subr.bf16.mxu0 0
      %1505 = vmatpush1.bf16.msra.mxu0 0
      %1506 = vmatprep.subr.bf16.mxu0 0
      %1507 = vmatpush1.bf16.msra.mxu0 0
      %1508 = vmatprep.subr.bf16.mxu0 0
      %1509 = vmatpush1.bf16.msra.mxu0 0
      %1510 = vmatprep.subr.bf16.mxu0 0
      %1511 = vmatpush1.bf16.msra.mxu0 0
      %1512 = vmatprep.subr.bf16.mxu0 0
      %1513 = vmatpush1.bf16.msra.mxu0 0
      %1514 = vmatprep.subr.bf16.mxu0 0
      %1515 = vmatpush1.bf16.msra.mxu0 0
      %1516 = vmatprep.subr.bf16.mxu0 0
      %1517 = vmatpush1.bf16.msra.mxu0 0
      %1518 = vmatprep.subr.bf16.mxu0 0
      %1519 = vmatpush1.bf16.msra.mxu0 0
      %1520 = vmatprep.mubr.bf16.mxu0 0
      %1521 = vmatmul.mubr.bf16.gmra.mrb[0].mxu0 %v1477
      %v1522 = vpop.f32.mrb[0].mxu0
      %v1523 = vadd.f32 0.0, %v1522
      %v1524 = vpop.f32.mrb[0].mxu0
      %v1525 = vpop.f32.mrb[0].mxu0
      %v1526 = vadd.f32 0.0, %v1525
      %v1527 = vpop.f32.mrb[0].mxu0
      %1528 = vmatprep.mubr.bf16.mxu0 0
      %1529 = vmatmul.mubr.bf16.gmra.mrb[0].mxu0 %v1480
      %v1530 = vpop.f32.mrb[0].mxu0
      %v1531 = vadd.f32 0.0, %v1530
      %v1532 = vpop.f32.mrb[0].mxu0
      %v1533 = vpop.f32.mrb[0].mxu0
      %v1534 = vadd.f32 0.0, %v1533
      %v1535 = vpop.f32.mrb[0].mxu0
      %1536 = vmatprep.mubr.bf16.mxu0 0
      %1537 = vmatmul.mubr.bf16.gmra.mrb[0].mxu0 %v1483
      %v1538 = vpop.f32.mrb[0].mxu0
      %v1539 = vadd.f32 0.0, %v1538
      %v1540 = vpop.f32.mrb[0].mxu0
      %v1541 = vpop.f32.mrb[0].mxu0
      %v1542 = vadd.f32 0.0, %v1541
      %v1543 = vpop.f32.mrb[0].mxu0
      %1544 = vdwg.mxu0
      %v1545 = vadd.f32 %v1363, %v1523
      %v1546 = vadd.f32 %v1364, %v1526
      %v1547 = vadd.f32 %v1365, %v1531
      %v1548 = vadd.f32 %v1366, %v1534
      %v1549 = vadd.f32 %v1367, %v1539
      %v1550 = vadd.f32 %v1368, %v1542
      %v1551 = vld [vmem:[%s1270] sm:$0xe]
      %v1552 = vld [vmem:[%s1270 + $0x8] sm:$0xe]
      %v1553 = vld [vmem:[%s1270 + $0x10] sm:$0xe]
      %v1554 = vld [vmem:[%s1270 + $0x18] sm:$0xe]
      %v1555 = vld [vmem:[%s1270 + $0x20] sm:$0xe]
      %v1556 = vld [vmem:[%s1270 + $0x28] sm:$0xe]
      %v1569 = vrot.slane %v1551, 5
      %v1570 = vrot.slane %v1569, 4
      %v1571 = vrot.slane %v1370, 5
      %v1572 = vsel %vm750, %v1570, %v1571
      %v1573 = vrot.slane %v1552, 5
      %v1574 = vrot.slane %v1573, 4
      %v1575 = vrot.slane %v1372, 5
      %v1576 = vsel %vm750, %v1574, %v1575
      %v1577 = vrot.slane %v1553, 5
      %v1578 = vrot.slane %v1577, 4
      %v1579 = vrot.slane %v1374, 5
      %v1580 = vsel %vm750, %v1578, %v1579
      %v1581 = vrot.slane %v1554, 5
      %v1582 = vrot.slane %v1581, 4
      %v1583 = vrot.slane %v1376, 5
      %v1584 = vsel %vm750, %v1582, %v1583
      %v1585 = vrot.slane %v1555, 5
      %v1586 = vrot.slane %v1585, 4
      %v1587 = vrot.slane %v1378, 5
      %v1588 = vsel %vm750, %v1586, %v1587
      %v1589 = vrot.slane %v1556, 5
      %v1590 = vrot.slane %v1589, 4
      %v1591 = vrot.slane %v1380, 5
      %v1592 = vsel %vm750, %v1590, %v1591
      %s1593 = scalar_lea.vmem %s1, 16
      %v1594 = vld [vmem:[%s1593] sm:$0x3]
      %v1595 = vunpack.c.l.b16 %v1572
      %v1596 = vunpack.c.l.b16 %v1576
      %v1597 = vunpack.c.l.b16 %v1580
      %v1598 = vunpack.c.l.b16 %v1584
      %v1599 = vunpack.c.l.b16 %v1588
      %v1600 = vunpack.c.l.b16 %v1592
      %v1601 = vpack.c.b16 %v1596, %v1595
      %v1602 = vpack.c.b16 %v1598, %v1597
      %v1603 = vpack.c.b16 %v1600, %v1599
      %v1605 = vsel %vm575, %v1601, 0
      %v1608 = vsel %vm575, %v1602, 0
      %v1611 = vsel %vm575, %v1603, 0
      %v1614 = vsel %vm585, %v1594, 0
      %1616 = vmatprep.subr.bf16.mxu0 0
      %1617 = vmatpush1.bf16.msra.mxu0 %v1614
      %1618 = vmatprep.subr.bf16.mxu0 0
      %1619 = vmatpush1.bf16.msra.mxu0 0
      %1620 = vmatprep.subr.bf16.mxu0 0
      %1621 = vmatpush1.bf16.msra.mxu0 0
      %1622 = vmatprep.subr.bf16.mxu0 0
      %1623 = vmatpush1.bf16.msra.mxu0 0
      %1624 = vmatprep.subr.bf16.mxu0 0
      %1625 = vmatpush1.bf16.msra.mxu0 0
      %1626 = vmatprep.subr.bf16.mxu0 0
      %1627 = vmatpush1.bf16.msra.mxu0 0
      %1628 = vmatprep.subr.bf16.mxu0 0
      %1629 = vmatpush1.bf16.msra.mxu0 0
      %1630 = vmatprep.subr.bf16.mxu0 0
      %1631 = vmatpush1.bf16.msra.mxu0 0
      %1632 = vmatprep.subr.bf16.mxu0 0
      %1633 = vmatpush1.bf16.msra.mxu0 0
      %1634 = vmatprep.subr.bf16.mxu0 0
      %1635 = vmatpush1.bf16.msra.mxu0 0
      %1636 = vmatprep.subr.bf16.mxu0 0
      %1637 = vmatpush1.bf16.msra.mxu0 0
      %1638 = vmatprep.subr.bf16.mxu0 0
      %1639 = vmatpush1.bf16.msra.mxu0 0
      %1640 = vmatprep.subr.bf16.mxu0 0
      %1641 = vmatpush1.bf16.msra.mxu0 0
      %1642 = vmatprep.subr.bf16.mxu0 0
      %1643 = vmatpush1.bf16.msra.mxu0 0
      %1644 = vmatprep.subr.bf16.mxu0 0
      %1645 = vmatpush1.bf16.msra.mxu0 0
      %1646 = vmatprep.subr.bf16.mxu0 0
      %1647 = vmatpush1.bf16.msra.mxu0 0
      %1648 = vmatprep.mubr.bf16.mxu0 0
      %1649 = vmatmul.mubr.bf16.gmra.mrb[0].mxu0 %v1605
      %v1650 = vpop.f32.mrb[0].mxu0
      %v1651 = vadd.f32 0.0, %v1650
      %v1652 = vpop.f32.mrb[0].mxu0
      %v1653 = vpop.f32.mrb[0].mxu0
      %v1654 = vadd.f32 0.0, %v1653
      %v1655 = vpop.f32.mrb[0].mxu0
      %1656 = vmatprep.mubr.bf16.mxu0 0
      %1657 = vmatmul.mubr.bf16.gmra.mrb[0].mxu0 %v1608
      %v1658 = vpop.f32.mrb[0].mxu0
      %v1659 = vadd.f32 0.0, %v1658
      %v1660 = vpop.f32.mrb[0].mxu0
      %v1661 = vpop.f32.mrb[0].mxu0
      %v1662 = vadd.f32 0.0, %v1661
      %v1663 = vpop.f32.mrb[0].mxu0
      %1664 = vmatprep.mubr.bf16.mxu0 0
      %1665 = vmatmul.mubr.bf16.gmra.mrb[0].mxu0 %v1611
      %v1666 = vpop.f32.mrb[0].mxu0
      %v1667 = vadd.f32 0.0, %v1666
      %v1668 = vpop.f32.mrb[0].mxu0
      %v1669 = vpop.f32.mrb[0].mxu0
      %v1670 = vadd.f32 0.0, %v1669
      %v1671 = vpop.f32.mrb[0].mxu0
      %1672 = vdwg.mxu0
      %v1673 = vadd.f32 %v1545, %v1651
      %v1674 = vadd.f32 %v1546, %v1654
      %v1675 = vadd.f32 %v1547, %v1659
      %v1676 = vadd.f32 %v1548, %v1662
      %v1677 = vadd.f32 %v1549, %v1667
      %v1678 = vadd.f32 %v1550, %v1670
      %v1679 = vld [vmem:[%s2] sm:$0x1]
      %v1681 = vlaneseq
      %v1682 = vshrl.u32 %v1681, 7
      %v1683 = vsub.s32 0, %v1682
      %v1684 = vrot.slane %v1679, %v1683
      %v1686 = vmul.f32 %v1673, %v1684
      %v1687 = vmul.f32 %v1674, %v1684
      %v1688 = vmul.f32 %v1675, %v1684
      %v1689 = vmul.f32 %v1676, %v1684
      %v1690 = vmul.f32 %v1677, %v1684
      %v1691 = vmul.f32 %v1678, %v1684
      %v1692 = vld [vmem:[%s3] sm:$0x1]
      %v1694 = vlaneseq
      %v1695 = vshrl.u32 %v1694, 7
      %v1696 = vsub.s32 0, %v1695
      %v1697 = vrot.slane %v1692, %v1696
      %v1699 = vadd.f32 %v1686, %v1697
      %v1700 = vadd.f32 %v1687, %v1697
      %v1701 = vadd.f32 %v1688, %v1697
      %v1702 = vadd.f32 %v1689, %v1697
      %v1703 = vadd.f32 %v1690, %v1697
      %v1704 = vadd.f32 %v1691, %v1697
      %v1705 = vmax.f32 %v1699, 0.0
      %v1706 = vmax.f32 %v1700, 0.0
      %v1707 = vmax.f32 %v1701, 0.0
      %v1708 = vmax.f32 %v1702, 0.0
      %v1709 = vmax.f32 %v1703, 0.0
      %v1710 = vmax.f32 %v1704, 0.0
      %s1711 = ssub.s32 %s303, 1
      %v1712 = vstv %s1711
      %v1713 = vadd.s32 %v1712, 1
      %v1714 = vadd.s32 %v1712, 2
      %v1715 = vadd.s32 %v1712, 3
      %v1716 = vadd.s32 %v1712, 4
      %v1717 = vadd.s32 %v1712, 5
      %vm1718 = vcmp.ge.s32.totalorder %v1712, 0
      %vm1719 = vcmp.ge.s32.totalorder %v1713, 0
      %vm1720 = vcmp.ge.s32.totalorder %v1714, 0
      %vm1721 = vcmp.ge.s32.totalorder %v1715, 0
      %vm1722 = vcmp.ge.s32.totalorder %v1716, 0
      %vm1723 = vcmp.ge.s32.totalorder %v1717, 0
      %vm1724 = vcmp.lt.s32.totalorder %v1712, 8
      %vm1725 = vcmp.lt.s32.totalorder %v1713, 8
      %vm1726 = vcmp.lt.s32.totalorder %v1714, 8
      %vm1727 = vcmp.lt.s32.totalorder %v1715, 8
      %vm1728 = vcmp.lt.s32.totalorder %v1716, 8
      %vm1729 = vcmp.lt.s32.totalorder %v1717, 8
      %vm1730 = vmand %vm1718, %vm1724
      %vm1731 = vmand %vm1719, %vm1725
      %vm1732 = vmand %vm1720, %vm1726
      %vm1733 = vmand %vm1721, %vm1727
      %vm1734 = vmand %vm1722, %vm1728
      %vm1735 = vmand %vm1723, %vm1729
      %v1736 = vsel %vm1730, 1, 0
      %v1737 = vsel %vm1731, 1, 0
      %v1738 = vsel %vm1732, 1, 0
      %v1739 = vsel %vm1733, 1, 0
      %v1740 = vsel %vm1734, 1, 0
      %v1741 = vsel %vm1735, 1, 0
      %vm1742 = vcmp.eq.s32.totalorder %v1736, 1
      %vm1743 = vcmp.eq.s32.totalorder %v1737, 1
      %vm1744 = vcmp.eq.s32.totalorder %v1738, 1
      %vm1745 = vcmp.eq.s32.totalorder %v1739, 1
      %vm1746 = vcmp.eq.s32.totalorder %v1740, 1
      %vm1747 = vcmp.eq.s32.totalorder %v1741, 1
      %v1748 = vsel %vm1742, %v1705, 0.0
      %v1749 = vsel %vm1743, %v1706, 0.0
      %v1750 = vsel %vm1744, %v1707, 0.0
      %v1751 = vsel %vm1745, %v1708, 0.0
      %v1752 = vsel %vm1746, %v1709, 0.0
      %v1753 = vsel %vm1747, %v1710, 0.0
      %v1754 = vpack.c.bf16 %v1748, %v1748
      %v1755 = vpack.c.bf16 %v1749, %v1749
      %v1756 = vpack.c.bf16 %v1750, %v1750
      %v1757 = vpack.c.bf16 %v1751, %v1751
      %v1758 = vpack.c.bf16 %v1752, %v1752
      %v1759 = vpack.c.bf16 %v1753, %v1753
      %v1766 = vunpack.c.l.b16 %v1754
      %v1767 = vunpack.c.l.b16 %v1755
      %v1768 = vunpack.c.l.b16 %v1756
      %v1769 = vunpack.c.l.b16 %v1757
      %v1770 = vunpack.c.l.b16 %v1758
      %v1771 = vunpack.c.l.b16 %v1759
      %v1772 = vpack.c.b16 %v1766, %v1766
      %v1773 = vpack.c.b16 %v1767, %v1767
      %v1774 = vpack.c.b16 %v1768, %v1768
      %v1775 = vpack.c.b16 %v1769, %v1769
      %v1776 = vpack.c.b16 %v1770, %v1770
      %v1777 = vpack.c.b16 %v1771, %v1771
      %v1779 = vshrl.u32 %v1772, 16
      %v1781 = vrot.slane %v1779, 7
      %v1782 = vshll.u32 %v1772, 16
      %v1784 = vor.u32 %v1781, %v1782
      %v1785 = vrot.slane %v1781, 4
      %v1787 = vshrl.u32 %v1773, 16
      %v1789 = vrot.slane %v1787, 7
      %v1790 = vshll.u32 %v1773, 16
      %v1792 = vor.u32 %v1789, %v1790
      %v1793 = vrot.slane %v1789, 4
      %v1795 = vshrl.u32 %v1774, 16
      %v1797 = vrot.slane %v1795, 7
      %v1798 = vshll.u32 %v1774, 16
      %v1800 = vor.u32 %v1797, %v1798
      %v1801 = vrot.slane %v1797, 4
      %v1803 = vshrl.u32 %v1775, 16
      %v1805 = vrot.slane %v1803, 7
      %v1806 = vshll.u32 %v1775, 16
      %v1808 = vor.u32 %v1805, %v1806
      %v1809 = vrot.slane %v1805, 4
      %v1811 = vshrl.u32 %v1776, 16
      %v1813 = vrot.slane %v1811, 7
      %v1814 = vshll.u32 %v1776, 16
      %v1816 = vor.u32 %v1813, %v1814
      %v1817 = vrot.slane %v1813, 4
      %v1819 = vshrl.u32 %v1777, 16
      %v1821 = vrot.slane %v1819, 7
      %v1822 = vshll.u32 %v1777, 16
      %v1824 = vor.u32 %v1821, %v1822
      %v1825 = vrot.slane %v1821, 4
      %vm1838 = vcmask 60416
      %vm1839 = vsmask.f32 7938
      %vm1840 = vmand %vm1838, %vm1839
      %v1841 = vld [vmem:[#allocation3] sm:$0xf]
      %v1842 = vsel %vm1840, %v1784, %v1841
      %1843 = vst [vmem:[#allocation3] sm:$0xf] %v1842
      %vm1844 = vcmask 57344
      %vm1845 = vsmask.f32 256
      %vm1846 = vmand %vm1844, %vm1845
      %v1847 = vld [vmem:[#allocation3 + $0x4] sm:$0x1]
      %v1848 = vsel %vm1846, %v1785, %v1847
      %1849 = vst [vmem:[#allocation3 + $0x4] sm:$0x1] %v1848
      %v1850 = vld [vmem:[#allocation3 + $0x8] sm:$0xf]
      %v1851 = vsel %vm1840, %v1792, %v1850
      %1852 = vst [vmem:[#allocation3 + $0x8] sm:$0xf] %v1851
      %v1853 = vld [vmem:[#allocation3 + $0xc] sm:$0x1]
      %v1854 = vsel %vm1846, %v1793, %v1853
      %1855 = vst [vmem:[#allocation3 + $0xc] sm:$0x1] %v1854
      %v1856 = vld [vmem:[#allocation3 + $0x10] sm:$0xf]
      %v1857 = vsel %vm1840, %v1800, %v1856
      %1858 = vst [vmem:[#allocation3 + $0x10] sm:$0xf] %v1857
      %v1859 = vld [vmem:[#allocation3 + $0x14] sm:$0x1]
      %v1860 = vsel %vm1846, %v1801, %v1859
      %1861 = vst [vmem:[#allocation3 + $0x14] sm:$0x1] %v1860
      %v1862 = vld [vmem:[#allocation3 + $0x18] sm:$0xf]
      %v1863 = vsel %vm1840, %v1808, %v1862
      %1864 = vst [vmem:[#allocation3 + $0x18] sm:$0xf] %v1863
      %v1865 = vld [vmem:[#allocation3 + $0x1c] sm:$0x1]
      %v1866 = vsel %vm1846, %v1809, %v1865
      %1867 = vst [vmem:[#allocation3 + $0x1c] sm:$0x1] %v1866
      %v1868 = vld [vmem:[#allocation3 + $0x20] sm:$0xf]
      %v1869 = vsel %vm1840, %v1816, %v1868
      %1870 = vst [vmem:[#allocation3 + $0x20] sm:$0xf] %v1869
      %v1871 = vld [vmem:[#allocation3 + $0x24] sm:$0x1]
      %v1872 = vsel %vm1846, %v1817, %v1871
      %1873 = vst [vmem:[#allocation3 + $0x24] sm:$0x1] %v1872
      %v1874 = vld [vmem:[#allocation3 + $0x28] sm:$0xf]
      %v1875 = vsel %vm1840, %v1824, %v1874
      %1876 = vst [vmem:[#allocation3 + $0x28] sm:$0xf] %v1875
      %v1877 = vld [vmem:[#allocation3 + $0x2c] sm:$0x1]
      %v1878 = vsel %vm1846, %v1825, %v1877
      %1879 = vst [vmem:[#allocation3 + $0x2c] sm:$0x1] %v1878
      %v1880 = vld [vmem:[#allocation3] sm:$0xf]
      %v1881 = vld [vmem:[#allocation3 + $0x8] sm:$0xf]
      %v1882 = vld [vmem:[#allocation3 + $0x10] sm:$0xf]
      %v1883 = vld [vmem:[#allocation3 + $0x18] sm:$0xf]
      %v1884 = vld [vmem:[%s4] sm:$0xf]
      %v1885 = vld [vmem:[#allocation3 + $0x4] sm:$0x1]
      %v1886 = vld [vmem:[#allocation3 + $0xc] sm:$0x1]
      %v1887 = vld [vmem:[#allocation3 + $0x14] sm:$0x1]
      %v1888 = vld [vmem:[#allocation3 + $0x1c] sm:$0x1]
      %v1890 = vshrl.u32 %v1880, 16
      %v1892 = vrot.slane %v1890, 4
      %v1893 = vshll.u32 %v1880, 16
      %v1895 = vrot.slane %v1893, 5
      %v1896 = vor.u32 %v1892, %v1895
      %v1897 = vrot.slane %v1896, 4
      %v1899 = vshll.u32 %v1885, 16
      %v1901 = vrot.slane %v1899, 5
      %v1902 = vsel %vm479, %v1897, %v1901
      %v1904 = vshrl.u32 %v1881, 16
      %v1906 = vrot.slane %v1904, 4
      %v1907 = vshll.u32 %v1881, 16
      %v1909 = vrot.slane %v1907, 5
      %v1910 = vor.u32 %v1906, %v1909
      %v1911 = vrot.slane %v1910, 4
      %v1913 = vshll.u32 %v1886, 16
      %v1915 = vrot.slane %v1913, 5
      %v1916 = vsel %vm479, %v1911, %v1915
      %v1918 = vshrl.u32 %v1882, 16
      %v1920 = vrot.slane %v1918, 4
      %v1921 = vshll.u32 %v1882, 16
      %v1923 = vrot.slane %v1921, 5
      %v1924 = vor.u32 %v1920, %v1923
      %v1925 = vrot.slane %v1924, 4
      %v1927 = vshll.u32 %v1887, 16
      %v1929 = vrot.slane %v1927, 5
      %v1930 = vsel %vm479, %v1925, %v1929
      %v1932 = vshrl.u32 %v1883, 16
      %v1934 = vrot.slane %v1932, 4
      %v1935 = vshll.u32 %v1883, 16
      %v1937 = vrot.slane %v1935, 5
      %v1938 = vor.u32 %v1934, %v1937
      %v1939 = vrot.slane %v1938, 4
      %v1941 = vshll.u32 %v1888, 16
      %v1943 = vrot.slane %v1941, 5
      %v1944 = vsel %vm479, %v1939, %v1943
      %s1945 = scalar_lea.vmem %s4, 4
      %v1946 = vld [vmem:[%s1945] sm:$0xf]
      %v1947 = vunpack.c.l.b16 %v1902
      %v1948 = vunpack.c.l.b16 %v1916
      %v1949 = vunpack.c.l.b16 %v1930
      %v1950 = vunpack.c.l.b16 %v1944
      %v1951 = vpack.c.b16 %v1948, %v1947
      %v1952 = vpack.c.b16 %v1950, %v1949
      %vm1953 = vcmask 64512
      %v1955 = vsel %vm1953, %v1951, 0
      %v1958 = vsel %vm1953, %v1952, 0
      %vm1960 = vcmask 1043456
      %v1962 = vsel %vm1960, %v1946, 0
      %1964 = vmatprep.subr.bf16.mxu0 0
      %1965 = vmatpush1.bf16.msra.mxu0 %v1962
      %1966 = vmatprep.subr.bf16.mxu0 0
      %1967 = vmatpush1.bf16.msra.mxu0 0
      %1968 = vmatprep.subr.bf16.mxu0 0
      %1969 = vmatpush1.bf16.msra.mxu0 0
      %1970 = vmatprep.subr.bf16.mxu0 0
      %1971 = vmatpush1.bf16.msra.mxu0 0
      %1972 = vmatprep.subr.bf16.mxu0 0
      %1973 = vmatpush1.bf16.msra.mxu0 0
      %1974 = vmatprep.subr.bf16.mxu0 0
      %1975 = vmatpush1.bf16.msra.mxu0 0
      %1976 = vmatprep.subr.bf16.mxu0 0
      %1977 = vmatpush1.bf16.msra.mxu0 0
      %1978 = vmatprep.subr.bf16.mxu0 0
      %1979 = vmatpush1.bf16.msra.mxu0 0
      %1980 = vmatprep.subr.bf16.mxu0 0
      %1981 = vmatpush1.bf16.msra.mxu0 0
      %1982 = vmatprep.subr.bf16.mxu0 0
      %1983 = vmatpush1.bf16.msra.mxu0 0
      %1984 = vmatprep.subr.bf16.mxu0 0
      %1985 = vmatpush1.bf16.msra.mxu0 0
      %1986 = vmatprep.subr.bf16.mxu0 0
      %1987 = vmatpush1.bf16.msra.mxu0 0
      %1988 = vmatprep.subr.bf16.mxu0 0
      %1989 = vmatpush1.bf16.msra.mxu0 0
      %1990 = vmatprep.subr.bf16.mxu0 0
      %1991 = vmatpush1.bf16.msra.mxu0 0
      %1992 = vmatprep.subr.bf16.mxu0 0
      %1993 = vmatpush1.bf16.msra.mxu0 0
      %1994 = vmatprep.subr.bf16.mxu0 0
      %1995 = vmatpush1.bf16.msra.mxu0 0
      %1996 = vmatprep.mubr.bf16.mxu0 0
      %1997 = vmatmul.mubr.bf16.gmra.mrb[0].mxu0 %v1955
      %v1998 = vpop.f32.mrb[0].mxu0
      %v1999 = vadd.f32 0.0, %v1998
      %v2000 = vpop.f32.mrb[0].mxu0
      %v2001 = vpop.f32.mrb[0].mxu0
      %v2002 = vadd.f32 0.0, %v2001
      %v2003 = vpop.f32.mrb[0].mxu0
      %2004 = vmatprep.mubr.bf16.mxu0 0
      %2005 = vmatmul.mubr.bf16.gmra.mrb[0].mxu0 %v1958
      %v2006 = vpop.f32.mrb[0].mxu0
      %v2007 = vadd.f32 0.0, %v2006
      %v2008 = vpop.f32.mrb[0].mxu0
      %v2009 = vpop.f32.mrb[0].mxu0
      %v2010 = vadd.f32 0.0, %v2009
      %v2011 = vpop.f32.mrb[0].mxu0
      %2012 = vdwg.mxu0
      %v2017 = vunpack.c.l.b16 %v1880
      %v2018 = vunpack.c.l.b16 %v1881
      %v2019 = vunpack.c.l.b16 %v1882
      %v2020 = vunpack.c.l.b16 %v1883
      %v2021 = vpack.c.b16 %v2018, %v2017
      %v2022 = vpack.c.b16 %v2020, %v2019
      %v2024 = vsel %vm1953, %v2021, 0
      %v2027 = vsel %vm1953, %v2022, 0
      %v2030 = vsel %vm1960, %v1884, 0
      %2032 = vmatprep.subr.bf16.mxu0 0
      %2033 = vmatpush1.bf16.msra.mxu0 %v2030
      %2034 = vmatprep.subr.bf16.mxu0 0
      %2035 = vmatpush1.bf16.msra.mxu0 0
      %2036 = vmatprep.subr.bf16.mxu0 0
      %2037 = vmatpush1.bf16.msra.mxu0 0
      %2038 = vmatprep.subr.bf16.mxu0 0
      %2039 = vmatpush1.bf16.msra.mxu0 0
      %2040 = vmatprep.subr.bf16.mxu0 0
      %2041 = vmatpush1.bf16.msra.mxu0 0
      %2042 = vmatprep.subr.bf16.mxu0 0
      %2043 = vmatpush1.bf16.msra.mxu0 0
      %2044 = vmatprep.subr.bf16.mxu0 0
      %2045 = vmatpush1.bf16.msra.mxu0 0
      %2046 = vmatprep.subr.bf16.mxu0 0
      %2047 = vmatpush1.bf16.msra.mxu0 0
      %2048 = vmatprep.subr.bf16.mxu0 0
      %2049 = vmatpush1.bf16.msra.mxu0 0
      %2050 = vmatprep.subr.bf16.mxu0 0
      %2051 = vmatpush1.bf16.msra.mxu0 0
      %2052 = vmatprep.subr.bf16.mxu0 0
      %2053 = vmatpush1.bf16.msra.mxu0 0
      %2054 = vmatprep.subr.bf16.mxu0 0
      %2055 = vmatpush1.bf16.msra.mxu0 0
      %2056 = vmatprep.subr.bf16.mxu0 0
      %2057 = vmatpush1.bf16.msra.mxu0 0
      %2058 = vmatprep.subr.bf16.mxu0 0
      %2059 = vmatpush1.bf16.msra.mxu0 0
      %2060 = vmatprep.subr.bf16.mxu0 0
      %2061 = vmatpush1.bf16.msra.mxu0 0
      %2062 = vmatprep.subr.bf16.mxu0 0
      %2063 = vmatpush1.bf16.msra.mxu0 0
      %2064 = vmatprep.mubr.bf16.mxu0 0
      %2065 = vmatmul.mubr.bf16.gmra.mrb[0].mxu0 %v2024
      %v2066 = vpop.f32.mrb[0].mxu0
      %v2067 = vadd.f32 %v1999, %v2066
      %v2068 = vpop.f32.mrb[0].mxu0
      %v2069 = vpop.f32.mrb[0].mxu0
      %v2070 = vadd.f32 %v2002, %v2069
      %v2071 = vpop.f32.mrb[0].mxu0
      %2072 = vmatprep.mubr.bf16.mxu0 0
      %2073 = vmatmul.mubr.bf16.gmra.mrb[0].mxu0 %v2027
      %v2074 = vpop.f32.mrb[0].mxu0
      %v2075 = vadd.f32 %v2007, %v2074
      %v2076 = vpop.f32.mrb[0].mxu0
      %v2077 = vpop.f32.mrb[0].mxu0
      %v2078 = vadd.f32 %v2010, %v2077
      %v2079 = vpop.f32.mrb[0].mxu0
      %2080 = vdwg.mxu0
      %v2081 = vld [vmem:[#allocation3] sm:$0xe]
      %v2082 = vld [vmem:[#allocation3 + $0x8] sm:$0xe]
      %v2083 = vld [vmem:[#allocation3 + $0x10] sm:$0xe]
      %v2084 = vld [vmem:[#allocation3 + $0x18] sm:$0xe]
      %v2093 = vrot.slane %v2081, 5
      %v2094 = vrot.slane %v2093, 4
      %v2095 = vrot.slane %v1885, 5
      %v2096 = vsel %vm750, %v2094, %v2095
      %v2097 = vrot.slane %v2082, 5
      %v2098 = vrot.slane %v2097, 4
      %v2099 = vrot.slane %v1886, 5
      %v2100 = vsel %vm750, %v2098, %v2099
      %v2101 = vrot.slane %v2083, 5
      %v2102 = vrot.slane %v2101, 4
      %v2103 = vrot.slane %v1887, 5
      %v2104 = vsel %vm750, %v2102, %v2103
      %v2105 = vrot.slane %v2084, 5
      %v2106 = vrot.slane %v2105, 4
      %v2107 = vrot.slane %v1888, 5
      %v2108 = vsel %vm750, %v2106, %v2107
      %s2109 = scalar_lea.vmem %s4, 8
      %v2110 = vld [vmem:[%s2109] sm:$0xf]
      %v2111 = vunpack.c.l.b16 %v2096
      %v2112 = vunpack.c.l.b16 %v2100
      %v2113 = vunpack.c.l.b16 %v2104
      %v2114 = vunpack.c.l.b16 %v2108
      %v2115 = vpack.c.b16 %v2112, %v2111
      %v2116 = vpack.c.b16 %v2114, %v2113
      %v2118 = vsel %vm1953, %v2115, 0
      %v2121 = vsel %vm1953, %v2116, 0
      %v2124 = vsel %vm1960, %v2110, 0
      %2126 = vmatprep.subr.bf16.mxu0 0
      %2127 = vmatpush1.bf16.msra.mxu0 %v2124
      %2128 = vmatprep.subr.bf16.mxu0 0
      %2129 = vmatpush1.bf16.msra.mxu0 0
      %2130 = vmatprep.subr.bf16.mxu0 0
      %2131 = vmatpush1.bf16.msra.mxu0 0
      %2132 = vmatprep.subr.bf16.mxu0 0
      %2133 = vmatpush1.bf16.msra.mxu0 0
      %2134 = vmatprep.subr.bf16.mxu0 0
      %2135 = vmatpush1.bf16.msra.mxu0 0
      %2136 = vmatprep.subr.bf16.mxu0 0
      %2137 = vmatpush1.bf16.msra.mxu0 0
      %2138 = vmatprep.subr.bf16.mxu0 0
      %2139 = vmatpush1.bf16.msra.mxu0 0
      %2140 = vmatprep.subr.bf16.mxu0 0
      %2141 = vmatpush1.bf16.msra.mxu0 0
      %2142 = vmatprep.subr.bf16.mxu0 0
      %2143 = vmatpush1.bf16.msra.mxu0 0
      %2144 = vmatprep.subr.bf16.mxu0 0
      %2145 = vmatpush1.bf16.msra.mxu0 0
      %2146 = vmatprep.subr.bf16.mxu0 0
      %2147 = vmatpush1.bf16.msra.mxu0 0
      %2148 = vmatprep.subr.bf16.mxu0 0
      %2149 = vmatpush1.bf16.msra.mxu0 0
      %2150 = vmatprep.subr.bf16.mxu0 0
      %2151 = vmatpush1.bf16.msra.mxu0 0
      %2152 = vmatprep.subr.bf16.mxu0 0
      %2153 = vmatpush1.bf16.msra.mxu0 0
      %2154 = vmatprep.subr.bf16.mxu0 0
      %2155 = vmatpush1.bf16.msra.mxu0 0
      %2156 = vmatprep.subr.bf16.mxu0 0
      %2157 = vmatpush1.bf16.msra.mxu0 0
      %2158 = vmatprep.mubr.bf16.mxu0 0
      %2159 = vmatmul.mubr.bf16.gmra.mrb[0].mxu0 %v2118
      %v2160 = vpop.f32.mrb[0].mxu0
      %v2161 = vadd.f32 0.0, %v2160
      %v2162 = vpop.f32.mrb[0].mxu0
      %v2163 = vpop.f32.mrb[0].mxu0
      %v2164 = vadd.f32 0.0, %v2163
      %v2165 = vpop.f32.mrb[0].mxu0
      %2166 = vmatprep.mubr.bf16.mxu0 0
      %2167 = vmatmul.mubr.bf16.gmra.mrb[0].mxu0 %v2121
      %v2168 = vpop.f32.mrb[0].mxu0
      %v2169 = vadd.f32 0.0, %v2168
      %v2170 = vpop.f32.mrb[0].mxu0
      %v2171 = vpop.f32.mrb[0].mxu0
      %v2172 = vadd.f32 0.0, %v2171
      %v2173 = vpop.f32.mrb[0].mxu0
      %2174 = vdwg.mxu0
      %v2175 = vadd.f32 %v2067, %v2161
      %v2176 = vadd.f32 %v2070, %v2164
      %v2177 = vadd.f32 %v2075, %v2169
      %v2178 = vadd.f32 %v2078, %v2172
      %s2179 = scalar_lea.vmem [#allocation3], 8
      %v2180 = vld [vmem:[%s2179] sm:$0xf]
      %v2181 = vld [vmem:[%s2179 + $0x8] sm:$0xf]
      %v2182 = vld [vmem:[%s2179 + $0x10] sm:$0xf]
      %v2183 = vld [vmem:[%s2179 + $0x18] sm:$0xf]
      %s2184 = scalar_lea.vmem %s4, 12
      %v2185 = vld [vmem:[%s2184] sm:$0xf]
      %v2190 = vunpack.c.l.b16 %v2180
      %v2191 = vunpack.c.l.b16 %v2181
      %v2192 = vunpack.c.l.b16 %v2182
      %v2193 = vunpack.c.l.b16 %v2183
      %v2194 = vpack.c.b16 %v2191, %v2190
      %v2195 = vpack.c.b16 %v2193, %v2192
      %v2197 = vsel %vm1953, %v2194, 0
      %v2200 = vsel %vm1953, %v2195, 0
      %v2203 = vsel %vm1960, %v2185, 0
      %2205 = vmatprep.subr.bf16.mxu0 0
      %2206 = vmatpush1.bf16.msra.mxu0 %v2203
      %2207 = vmatprep.subr.bf16.mxu0 0
      %2208 = vmatpush1.bf16.msra.mxu0 0
      %2209 = vmatprep.subr.bf16.mxu0 0
      %2210 = vmatpush1.bf16.msra.mxu0 0
      %2211 = vmatprep.subr.bf16.mxu0 0
      %2212 = vmatpush1.bf16.msra.mxu0 0
      %2213 = vmatprep.subr.bf16.mxu0 0
      %2214 = vmatpush1.bf16.msra.mxu0 0
      %2215 = vmatprep.subr.bf16.mxu0 0
      %2216 = vmatpush1.bf16.msra.mxu0 0
      %2217 = vmatprep.subr.bf16.mxu0 0
      %2218 = vmatpush1.bf16.msra.mxu0 0
      %2219 = vmatprep.subr.bf16.mxu0 0
      %2220 = vmatpush1.bf16.msra.mxu0 0
      %2221 = vmatprep.subr.bf16.mxu0 0
      %2222 = vmatpush1.bf16.msra.mxu0 0
      %2223 = vmatprep.subr.bf16.mxu0 0
      %2224 = vmatpush1.bf16.msra.mxu0 0
      %2225 = vmatprep.subr.bf16.mxu0 0
      %2226 = vmatpush1.bf16.msra.mxu0 0
      %2227 = vmatprep.subr.bf16.mxu0 0
      %2228 = vmatpush1.bf16.msra.mxu0 0
      %2229 = vmatprep.subr.bf16.mxu0 0
      %2230 = vmatpush1.bf16.msra.mxu0 0
      %2231 = vmatprep.subr.bf16.mxu0 0
      %2232 = vmatpush1.bf16.msra.mxu0 0
      %2233 = vmatprep.subr.bf16.mxu0 0
      %2234 = vmatpush1.bf16.msra.mxu0 0
      %2235 = vmatprep.subr.bf16.mxu0 0
      %2236 = vmatpush1.bf16.msra.mxu0 0
      %2237 = vmatprep.mubr.bf16.mxu0 0
      %2238 = vmatmul.mubr.bf16.gmra.mrb[0].mxu0 %v2197
      %v2239 = vpop.f32.mrb[0].mxu0
      %v2240 = vadd.f32 0.0, %v2239
      %v2241 = vpop.f32.mrb[0].mxu0
      %v2242 = vpop.f32.mrb[0].mxu0
      %v2243 = vadd.f32 0.0, %v2242
      %v2244 = vpop.f32.mrb[0].mxu0
      %2245 = vmatprep.mubr.bf16.mxu0 0
      %2246 = vmatmul.mubr.bf16.gmra.mrb[0].mxu0 %v2200
      %v2247 = vpop.f32.mrb[0].mxu0
      %v2248 = vadd.f32 0.0, %v2247
      %v2249 = vpop.f32.mrb[0].mxu0
      %v2250 = vpop.f32.mrb[0].mxu0
      %v2251 = vadd.f32 0.0, %v2250
      %v2252 = vpop.f32.mrb[0].mxu0
      %2253 = vdwg.mxu0
      %v2254 = vadd.f32 %v2175, %v2240
      %v2255 = vadd.f32 %v2176, %v2243
      %v2256 = vadd.f32 %v2177, %v2248
      %v2257 = vadd.f32 %v2178, %v2251
      %v2258 = vld [vmem:[%s2179] sm:$0xf]
      %v2259 = vld [vmem:[%s2179 + $0x4] sm:$0x1]
      %v2260 = vld [vmem:[%s2179 + $0x8] sm:$0xf]
      %v2261 = vld [vmem:[%s2179 + $0xc] sm:$0x1]
      %v2262 = vld [vmem:[%s2179 + $0x10] sm:$0xf]
      %v2263 = vld [vmem:[%s2179 + $0x14] sm:$0x1]
      %v2264 = vld [vmem:[%s2179 + $0x18] sm:$0xf]
      %v2265 = vld [vmem:[%s2179 + $0x1c] sm:$0x1]
      %v2267 = vshrl.u32 %v2258, 16
      %v2269 = vrot.slane %v2267, 4
      %v2270 = vshll.u32 %v2258, 16
      %v2272 = vrot.slane %v2270, 5
      %v2273 = vor.u32 %v2269, %v2272
      %v2274 = vrot.slane %v2273, 4
      %v2276 = vshll.u32 %v2259, 16
      %v2278 = vrot.slane %v2276, 5
      %v2279 = vsel %vm479, %v2274, %v2278
      %v2281 = vshrl.u32 %v2260, 16
      %v2283 = vrot.slane %v2281, 4
      %v2284 = vshll.u32 %v2260, 16
      %v2286 = vrot.slane %v2284, 5
      %v2287 = vor.u32 %v2283, %v2286
      %v2288 = vrot.slane %v2287, 4
      %v2290 = vshll.u32 %v2261, 16
      %v2292 = vrot.slane %v2290, 5
      %v2293 = vsel %vm479, %v2288, %v2292
      %v2295 = vshrl.u32 %v2262, 16
      %v2297 = vrot.slane %v2295, 4
      %v2298 = vshll.u32 %v2262, 16
      %v2300 = vrot.slane %v2298, 5
      %v2301 = vor.u32 %v2297, %v2300
      %v2302 = vrot.slane %v2301, 4
      %v2304 = vshll.u32 %v2263, 16
      %v2306 = vrot.slane %v2304, 5
      %v2307 = vsel %vm479, %v2302, %v2306
      %v2309 = vshrl.u32 %v2264, 16
      %v2311 = vrot.slane %v2309, 4
      %v2312 = vshll.u32 %v2264, 16
      %v2314 = vrot.slane %v2312, 5
      %v2315 = vor.u32 %v2311, %v2314
      %v2316 = vrot.slane %v2315, 4
      %v2318 = vshll.u32 %v2265, 16
      %v2320 = vrot.slane %v2318, 5
      %v2321 = vsel %vm479, %v2316, %v2320
      %s2322 = scalar_lea.vmem %s4, 16
      %v2323 = vld [vmem:[%s2322] sm:$0xf]
      %v2324 = vunpack.c.l.b16 %v2279
      %v2325 = vunpack.c.l.b16 %v2293
      %v2326 = vunpack.c.l.b16 %v2307
      %v2327 = vunpack.c.l.b16 %v2321
      %v2328 = vpack.c.b16 %v2325, %v2324
      %v2329 = vpack.c.b16 %v2327, %v2326
      %v2331 = vsel %vm1953, %v2328, 0
      %v2334 = vsel %vm1953, %v2329, 0
      %v2337 = vsel %vm1960, %v2323, 0
      %2339 = vmatprep.subr.bf16.mxu0 0
      %2340 = vmatpush1.bf16.msra.mxu0 %v2337
      %2341 = vmatprep.subr.bf16.mxu0 0
      %2342 = vmatpush1.bf16.msra.mxu0 0
      %2343 = vmatprep.subr.bf16.mxu0 0
      %2344 = vmatpush1.bf16.msra.mxu0 0
      %2345 = vmatprep.subr.bf16.mxu0 0
      %2346 = vmatpush1.bf16.msra.mxu0 0
      %2347 = vmatprep.subr.bf16.mxu0 0
      %2348 = vmatpush1.bf16.msra.mxu0 0
      %2349 = vmatprep.subr.bf16.mxu0 0
      %2350 = vmatpush1.bf16.msra.mxu0 0
      %2351 = vmatprep.subr.bf16.mxu0 0
      %2352 = vmatpush1.bf16.msra.mxu0 0
      %2353 = vmatprep.subr.bf16.mxu0 0
      %2354 = vmatpush1.bf16.msra.mxu0 0
      %2355 = vmatprep.subr.bf16.mxu0 0
      %2356 = vmatpush1.bf16.msra.mxu0 0
      %2357 = vmatprep.subr.bf16.mxu0 0
      %2358 = vmatpush1.bf16.msra.mxu0 0
      %2359 = vmatprep.subr.bf16.mxu0 0
      %2360 = vmatpush1.bf16.msra.mxu0 0
      %2361 = vmatprep.subr.bf16.mxu0 0
      %2362 = vmatpush1.bf16.msra.mxu0 0
      %2363 = vmatprep.subr.bf16.mxu0 0
      %2364 = vmatpush1.bf16.msra.mxu0 0
      %2365 = vmatprep.subr.bf16.mxu0 0
      %2366 = vmatpush1.bf16.msra.mxu0 0
      %2367 = vmatprep.subr.bf16.mxu0 0
      %2368 = vmatpush1.bf16.msra.mxu0 0
      %2369 = vmatprep.subr.bf16.mxu0 0
      %2370 = vmatpush1.bf16.msra.mxu0 0
      %2371 = vmatprep.mubr.bf16.mxu0 0
      %2372 = vmatmul.mubr.bf16.gmra.mrb[0].mxu0 %v2331
      %v2373 = vpop.f32.mrb[0].mxu0
      %v2374 = vadd.f32 0.0, %v2373
      %v2375 = vpop.f32.mrb[0].mxu0
      %v2376 = vpop.f32.mrb[0].mxu0
      %v2377 = vadd.f32 0.0, %v2376
      %v2378 = vpop.f32.mrb[0].mxu0
      %2379 = vmatprep.mubr.bf16.mxu0 0
      %2380 = vmatmul.mubr.bf16.gmra.mrb[0].mxu0 %v2334
      %v2381 = vpop.f32.mrb[0].mxu0
      %v2382 = vadd.f32 0.0, %v2381
      %v2383 = vpop.f32.mrb[0].mxu0
      %v2384 = vpop.f32.mrb[0].mxu0
      %v2385 = vadd.f32 0.0, %v2384
      %v2386 = vpop.f32.mrb[0].mxu0
      %2387 = vdwg.mxu0
      %v2388 = vadd.f32 %v2254, %v2374
      %v2389 = vadd.f32 %v2255, %v2377
      %v2390 = vadd.f32 %v2256, %v2382
      %v2391 = vadd.f32 %v2257, %v2385
      %v2392 = vld [vmem:[%s2179] sm:$0xe]
      %v2393 = vld [vmem:[%s2179 + $0x8] sm:$0xe]
      %v2394 = vld [vmem:[%s2179 + $0x10] sm:$0xe]
      %v2395 = vld [vmem:[%s2179 + $0x18] sm:$0xe]
      %v2404 = vrot.slane %v2392, 5
      %v2405 = vrot.slane %v2404, 4
      %v2406 = vrot.slane %v2259, 5
      %v2407 = vsel %vm750, %v2405, %v2406
      %v2408 = vrot.slane %v2393, 5
      %v2409 = vrot.slane %v2408, 4
      %v2410 = vrot.slane %v2261, 5
      %v2411 = vsel %vm750, %v2409, %v2410
      %v2412 = vrot.slane %v2394, 5
      %v2413 = vrot.slane %v2412, 4
      %v2414 = vrot.slane %v2263, 5
      %v2415 = vsel %vm750, %v2413, %v2414
      %v2416 = vrot.slane %v2395, 5
      %v2417 = vrot.slane %v2416, 4
      %v2418 = vrot.slane %v2265, 5
      %v2419 = vsel %vm750, %v2417, %v2418
      %s2420 = scalar_lea.vmem %s4, 20
      %v2421 = vld [vmem:[%s2420] sm:$0xf]
      %v2422 = vunpack.c.l.b16 %v2407
      %v2423 = vunpack.c.l.b16 %v2411
      %v2424 = vunpack.c.l.b16 %v2415
      %v2425 = vunpack.c.l.b16 %v2419
      %v2426 = vpack.c.b16 %v2423, %v2422
      %v2427 = vpack.c.b16 %v2425, %v2424
      %v2429 = vsel %vm1953, %v2426, 0
      %v2432 = vsel %vm1953, %v2427, 0
      %v2435 = vsel %vm1960, %v2421, 0
      %2437 = vmatprep.subr.bf16.mxu0 0
      %2438 = vmatpush1.bf16.msra.mxu0 %v2435
      %2439 = vmatprep.subr.bf16.mxu0 0
      %2440 = vmatpush1.bf16.msra.mxu0 0
      %2441 = vmatprep.subr.bf16.mxu0 0
      %2442 = vmatpush1.bf16.msra.mxu0 0
      %2443 = vmatprep.subr.bf16.mxu0 0
      %2444 = vmatpush1.bf16.msra.mxu0 0
      %2445 = vmatprep.subr.bf16.mxu0 0
      %2446 = vmatpush1.bf16.msra.mxu0 0
      %2447 = vmatprep.subr.bf16.mxu0 0
      %2448 = vmatpush1.bf16.msra.mxu0 0
      %2449 = vmatprep.subr.bf16.mxu0 0
      %2450 = vmatpush1.bf16.msra.mxu0 0
      %2451 = vmatprep.subr.bf16.mxu0 0
      %2452 = vmatpush1.bf16.msra.mxu0 0
      %2453 = vmatprep.subr.bf16.mxu0 0
      %2454 = vmatpush1.bf16.msra.mxu0 0
      %2455 = vmatprep.subr.bf16.mxu0 0
      %2456 = vmatpush1.bf16.msra.mxu0 0
      %2457 = vmatprep.subr.bf16.mxu0 0
      %2458 = vmatpush1.bf16.msra.mxu0 0
      %2459 = vmatprep.subr.bf16.mxu0 0
      %2460 = vmatpush1.bf16.msra.mxu0 0
      %2461 = vmatprep.subr.bf16.mxu0 0
      %2462 = vmatpush1.bf16.msra.mxu0 0
      %2463 = vmatprep.subr.bf16.mxu0 0
      %2464 = vmatpush1.bf16.msra.mxu0 0
      %2465 = vmatprep.subr.bf16.mxu0 0
      %2466 = vmatpush1.bf16.msra.mxu0 0
      %2467 = vmatprep.subr.bf16.mxu0 0
      %2468 = vmatpush1.bf16.msra.mxu0 0
      %2469 = vmatprep.mubr.bf16.mxu0 0
      %2470 = vmatmul.mubr.bf16.gmra.mrb[0].mxu0 %v2429
      %v2471 = vpop.f32.mrb[0].mxu0
      %v2472 = vadd.f32 0.0, %v2471
      %v2473 = vpop.f32.mrb[0].mxu0
      %v2474 = vpop.f32.mrb[0].mxu0
      %v2475 = vadd.f32 0.0, %v2474
      %v2476 = vpop.f32.mrb[0].mxu0
      %2477 = vmatprep.mubr.bf16.mxu0 0
      %2478 = vmatmul.mubr.bf16.gmra.mrb[0].mxu0 %v2432
      %v2479 = vpop.f32.mrb[0].mxu0
      %v2480 = vadd.f32 0.0, %v2479
      %v2481 = vpop.f32.mrb[0].mxu0
      %v2482 = vpop.f32.mrb[0].mxu0
      %v2483 = vadd.f32 0.0, %v2482
      %v2484 = vpop.f32.mrb[0].mxu0
      %2485 = vdwg.mxu0
      %v2486 = vadd.f32 %v2388, %v2472
      %v2487 = vadd.f32 %v2389, %v2475
      %v2488 = vadd.f32 %v2390, %v2480
      %v2489 = vadd.f32 %v2391, %v2483
      %s2490 = scalar_lea.vmem [#allocation3], 16
      %v2491 = vld [vmem:[%s2490] sm:$0xf]
      %v2492 = vld [vmem:[%s2490 + $0x8] sm:$0xf]
      %v2493 = vld [vmem:[%s2490 + $0x10] sm:$0xf]
      %v2494 = vld [vmem:[%s2490 + $0x18] sm:$0xf]
      %s2495 = scalar_lea.vmem %s4, 24
      %v2496 = vld [vmem:[%s2495] sm:$0xf]
      %v2501 = vunpack.c.l.b16 %v2491
      %v2502 = vunpack.c.l.b16 %v2492
      %v2503 = vunpack.c.l.b16 %v2493
      %v2504 = vunpack.c.l.b16 %v2494
      %v2505 = vpack.c.b16 %v2502, %v2501
      %v2506 = vpack.c.b16 %v2504, %v2503
      %v2508 = vsel %vm1953, %v2505, 0
      %v2511 = vsel %vm1953, %v2506, 0
      %v2514 = vsel %vm1960, %v2496, 0
      %2516 = vmatprep.subr.bf16.mxu0 0
      %2517 = vmatpush1.bf16.msra.mxu0 %v2514
      %2518 = vmatprep.subr.bf16.mxu0 0
      %2519 = vmatpush1.bf16.msra.mxu0 0
      %2520 = vmatprep.subr.bf16.mxu0 0
      %2521 = vmatpush1.bf16.msra.mxu0 0
      %2522 = vmatprep.subr.bf16.mxu0 0
      %2523 = vmatpush1.bf16.msra.mxu0 0
      %2524 = vmatprep.subr.bf16.mxu0 0
      %2525 = vmatpush1.bf16.msra.mxu0 0
      %2526 = vmatprep.subr.bf16.mxu0 0
      %2527 = vmatpush1.bf16.msra.mxu0 0
      %2528 = vmatprep.subr.bf16.mxu0 0
      %2529 = vmatpush1.bf16.msra.mxu0 0
      %2530 = vmatprep.subr.bf16.mxu0 0
      %2531 = vmatpush1.bf16.msra.mxu0 0
      %2532 = vmatprep.subr.bf16.mxu0 0
      %2533 = vmatpush1.bf16.msra.mxu0 0
      %2534 = vmatprep.subr.bf16.mxu0 0
      %2535 = vmatpush1.bf16.msra.mxu0 0
      %2536 = vmatprep.subr.bf16.mxu0 0
      %2537 = vmatpush1.bf16.msra.mxu0 0
      %2538 = vmatprep.subr.bf16.mxu0 0
      %2539 = vmatpush1.bf16.msra.mxu0 0
      %2540 = vmatprep.subr.bf16.mxu0 0
      %2541 = vmatpush1.bf16.msra.mxu0 0
      %2542 = vmatprep.subr.bf16.mxu0 0
      %2543 = vmatpush1.bf16.msra.mxu0 0
      %2544 = vmatprep.subr.bf16.mxu0 0
      %2545 = vmatpush1.bf16.msra.mxu0 0
      %2546 = vmatprep.subr.bf16.mxu0 0
      %2547 = vmatpush1.bf16.msra.mxu0 0
      %2548 = vmatprep.mubr.bf16.mxu0 0
      %2549 = vmatmul.mubr.bf16.gmra.mrb[0].mxu0 %v2508
      %v2550 = vpop.f32.mrb[0].mxu0
      %v2551 = vadd.f32 0.0, %v2550
      %v2552 = vpop.f32.mrb[0].mxu0
      %v2553 = vpop.f32.mrb[0].mxu0
      %v2554 = vadd.f32 0.0, %v2553
      %v2555 = vpop.f32.mrb[0].mxu0
      %2556 = vmatprep.mubr.bf16.mxu0 0
      %2557 = vmatmul.mubr.bf16.gmra.mrb[0].mxu0 %v2511
      %v2558 = vpop.f32.mrb[0].mxu0
      %v2559 = vadd.f32 0.0, %v2558
      %v2560 = vpop.f32.mrb[0].mxu0
      %v2561 = vpop.f32.mrb[0].mxu0
      %v2562 = vadd.f32 0.0, %v2561
      %v2563 = vpop.f32.mrb[0].mxu0
      %2564 = vdwg.mxu0
      %v2565 = vadd.f32 %v2486, %v2551
      %v2566 = vadd.f32 %v2487, %v2554
      %v2567 = vadd.f32 %v2488, %v2559
      %v2568 = vadd.f32 %v2489, %v2562
      %v2569 = vld [vmem:[%s2490] sm:$0xf]
      %v2570 = vld [vmem:[%s2490 + $0x4] sm:$0x1]
      %v2571 = vld [vmem:[%s2490 + $0x8] sm:$0xf]
      %v2572 = vld [vmem:[%s2490 + $0xc] sm:$0x1]
      %v2573 = vld [vmem:[%s2490 + $0x10] sm:$0xf]
      %v2574 = vld [vmem:[%s2490 + $0x14] sm:$0x1]
      %v2575 = vld [vmem:[%s2490 + $0x18] sm:$0xf]
      %v2576 = vld [vmem:[%s2490 + $0x1c] sm:$0x1]
      %v2578 = vshrl.u32 %v2569, 16
      %v2580 = vrot.slane %v2578, 4
      %v2581 = vshll.u32 %v2569, 16
      %v2583 = vrot.slane %v2581, 5
      %v2584 = vor.u32 %v2580, %v2583
      %v2585 = vrot.slane %v2584, 4
      %v2587 = vshll.u32 %v2570, 16
      %v2589 = vrot.slane %v2587, 5
      %v2590 = vsel %vm479, %v2585, %v2589
      %v2592 = vshrl.u32 %v2571, 16
      %v2594 = vrot.slane %v2592, 4
      %v2595 = vshll.u32 %v2571, 16
      %v2597 = vrot.slane %v2595, 5
      %v2598 = vor.u32 %v2594, %v2597
      %v2599 = vrot.slane %v2598, 4
      %v2601 = vshll.u32 %v2572, 16
      %v2603 = vrot.slane %v2601, 5
      %v2604 = vsel %vm479, %v2599, %v2603
      %v2606 = vshrl.u32 %v2573, 16
      %v2608 = vrot.slane %v2606, 4
      %v2609 = vshll.u32 %v2573, 16
      %v2611 = vrot.slane %v2609, 5
      %v2612 = vor.u32 %v2608, %v2611
      %v2613 = vrot.slane %v2612, 4
      %v2615 = vshll.u32 %v2574, 16
      %v2617 = vrot.slane %v2615, 5
      %v2618 = vsel %vm479, %v2613, %v2617
      %v2620 = vshrl.u32 %v2575, 16
      %v2622 = vrot.slane %v2620, 4
      %v2623 = vshll.u32 %v2575, 16
      %v2625 = vrot.slane %v2623, 5
      %v2626 = vor.u32 %v2622, %v2625
      %v2627 = vrot.slane %v2626, 4
      %v2629 = vshll.u32 %v2576, 16
      %v2631 = vrot.slane %v2629, 5
      %v2632 = vsel %vm479, %v2627, %v2631
      %s2633 = scalar_lea.vmem %s4, 28
      %v2634 = vld [vmem:[%s2633] sm:$0xf]
      %v2635 = vunpack.c.l.b16 %v2590
      %v2636 = vunpack.c.l.b16 %v2604
      %v2637 = vunpack.c.l.b16 %v2618
      %v2638 = vunpack.c.l.b16 %v2632
      %v2639 = vpack.c.b16 %v2636, %v2635
      %v2640 = vpack.c.b16 %v2638, %v2637
      %v2642 = vsel %vm1953, %v2639, 0
      %v2645 = vsel %vm1953, %v2640, 0
      %v2648 = vsel %vm1960, %v2634, 0
      %2650 = vmatprep.subr.bf16.mxu0 0
      %2651 = vmatpush1.bf16.msra.mxu0 %v2648
      %2652 = vmatprep.subr.bf16.mxu0 0
      %2653 = vmatpush1.bf16.msra.mxu0 0
      %2654 = vmatprep.subr.bf16.mxu0 0
      %2655 = vmatpush1.bf16.msra.mxu0 0
      %2656 = vmatprep.subr.bf16.mxu0 0
      %2657 = vmatpush1.bf16.msra.mxu0 0
      %2658 = vmatprep.subr.bf16.mxu0 0
      %2659 = vmatpush1.bf16.msra.mxu0 0
      %2660 = vmatprep.subr.bf16.mxu0 0
      %2661 = vmatpush1.bf16.msra.mxu0 0
      %2662 = vmatprep.subr.bf16.mxu0 0
      %2663 = vmatpush1.bf16.msra.mxu0 0
      %2664 = vmatprep.subr.bf16.mxu0 0
      %2665 = vmatpush1.bf16.msra.mxu0 0
      %2666 = vmatprep.subr.bf16.mxu0 0
      %2667 = vmatpush1.bf16.msra.mxu0 0
      %2668 = vmatprep.subr.bf16.mxu0 0
      %2669 = vmatpush1.bf16.msra.mxu0 0
      %2670 = vmatprep.subr.bf16.mxu0 0
      %2671 = vmatpush1.bf16.msra.mxu0 0
      %2672 = vmatprep.subr.bf16.mxu0 0
      %2673 = vmatpush1.bf16.msra.mxu0 0
      %2674 = vmatprep.subr.bf16.mxu0 0
      %2675 = vmatpush1.bf16.msra.mxu0 0
      %2676 = vmatprep.subr.bf16.mxu0 0
      %2677 = vmatpush1.bf16.msra.mxu0 0
      %2678 = vmatprep.subr.bf16.mxu0 0
      %2679 = vmatpush1.bf16.msra.mxu0 0
      %2680 = vmatprep.subr.bf16.mxu0 0
      %2681 = vmatpush1.bf16.msra.mxu0 0
      %2682 = vmatprep.mubr.bf16.mxu0 0
      %2683 = vmatmul.mubr.bf16.gmra.mrb[0].mxu0 %v2642
      %v2684 = vpop.f32.mrb[0].mxu0
      %v2685 = vadd.f32 0.0, %v2684
      %v2686 = vpop.f32.mrb[0].mxu0
      %v2687 = vpop.f32.mrb[0].mxu0
      %v2688 = vadd.f32 0.0, %v2687
      %v2689 = vpop.f32.mrb[0].mxu0
      %2690 = vmatprep.mubr.bf16.mxu0 0
      %2691 = vmatmul.mubr.bf16.gmra.mrb[0].mxu0 %v2645
      %v2692 = vpop.f32.mrb[0].mxu0
      %v2693 = vadd.f32 0.0, %v2692
      %v2694 = vpop.f32.mrb[0].mxu0
      %v2695 = vpop.f32.mrb[0].mxu0
      %v2696 = vadd.f32 0.0, %v2695
      %v2697 = vpop.f32.mrb[0].mxu0
      %2698 = vdwg.mxu0
      %v2699 = vadd.f32 %v2565, %v2685
      %v2700 = vadd.f32 %v2566, %v2688
      %v2701 = vadd.f32 %v2567, %v2693
      %v2702 = vadd.f32 %v2568, %v2696
      %v2703 = vld [vmem:[%s2490] sm:$0xe]
      %v2704 = vld [vmem:[%s2490 + $0x8] sm:$0xe]
      %v2705 = vld [vmem:[%s2490 + $0x10] sm:$0xe]
      %v2706 = vld [vmem:[%s2490 + $0x18] sm:$0xe]
      %v2715 = vrot.slane %v2703, 5
      %v2716 = vrot.slane %v2715, 4
      %v2717 = vrot.slane %v2570, 5
      %v2718 = vsel %vm750, %v2716, %v2717
      %v2719 = vrot.slane %v2704, 5
      %v2720 = vrot.slane %v2719, 4
      %v2721 = vrot.slane %v2572, 5
      %v2722 = vsel %vm750, %v2720, %v2721
      %v2723 = vrot.slane %v2705, 5
      %v2724 = vrot.slane %v2723, 4
      %v2725 = vrot.slane %v2574, 5
      %v2726 = vsel %vm750, %v2724, %v2725
      %v2727 = vrot.slane %v2706, 5
      %v2728 = vrot.slane %v2727, 4
      %v2729 = vrot.slane %v2576, 5
      %v2730 = vsel %vm750, %v2728, %v2729
      %s2731 = scalar_lea.vmem %s4, 32
      %v2732 = vld [vmem:[%s2731] sm:$0xf]
      %v2733 = vunpack.c.l.b16 %v2718
      %v2734 = vunpack.c.l.b16 %v2722
      %v2735 = vunpack.c.l.b16 %v2726
      %v2736 = vunpack.c.l.b16 %v2730
      %v2737 = vpack.c.b16 %v2734, %v2733
      %v2738 = vpack.c.b16 %v2736, %v2735
      %v2740 = vsel %vm1953, %v2737, 0
      %v2743 = vsel %vm1953, %v2738, 0
      %v2746 = vsel %vm1960, %v2732, 0
      %2748 = vmatprep.subr.bf16.mxu0 0
      %2749 = vmatpush1.bf16.msra.mxu0 %v2746
      %2750 = vmatprep.subr.bf16.mxu0 0
      %2751 = vmatpush1.bf16.msra.mxu0 0
      %2752 = vmatprep.subr.bf16.mxu0 0
      %2753 = vmatpush1.bf16.msra.mxu0 0
      %2754 = vmatprep.subr.bf16.mxu0 0
      %2755 = vmatpush1.bf16.msra.mxu0 0
      %2756 = vmatprep.subr.bf16.mxu0 0
      %2757 = vmatpush1.bf16.msra.mxu0 0
      %2758 = vmatprep.subr.bf16.mxu0 0
      %2759 = vmatpush1.bf16.msra.mxu0 0
      %2760 = vmatprep.subr.bf16.mxu0 0
      %2761 = vmatpush1.bf16.msra.mxu0 0
      %2762 = vmatprep.subr.bf16.mxu0 0
      %2763 = vmatpush1.bf16.msra.mxu0 0
      %2764 = vmatprep.subr.bf16.mxu0 0
      %2765 = vmatpush1.bf16.msra.mxu0 0
      %2766 = vmatprep.subr.bf16.mxu0 0
      %2767 = vmatpush1.bf16.msra.mxu0 0
      %2768 = vmatprep.subr.bf16.mxu0 0
      %2769 = vmatpush1.bf16.msra.mxu0 0
      %2770 = vmatprep.subr.bf16.mxu0 0
      %2771 = vmatpush1.bf16.msra.mxu0 0
      %2772 = vmatprep.subr.bf16.mxu0 0
      %2773 = vmatpush1.bf16.msra.mxu0 0
      %2774 = vmatprep.subr.bf16.mxu0 0
      %2775 = vmatpush1.bf16.msra.mxu0 0
      %2776 = vmatprep.subr.bf16.mxu0 0
      %2777 = vmatpush1.bf16.msra.mxu0 0
      %2778 = vmatprep.subr.bf16.mxu0 0
      %2779 = vmatpush1.bf16.msra.mxu0 0
      %2780 = vmatprep.mubr.bf16.mxu0 0
      %2781 = vmatmul.mubr.bf16.gmra.mrb[0].mxu0 %v2740
      %v2782 = vpop.f32.mrb[0].mxu0
      %v2783 = vadd.f32 0.0, %v2782
      %v2784 = vpop.f32.mrb[0].mxu0
      %v2785 = vpop.f32.mrb[0].mxu0
      %v2786 = vadd.f32 0.0, %v2785
      %v2787 = vpop.f32.mrb[0].mxu0
      %2788 = vmatprep.mubr.bf16.mxu0 0
      %2789 = vmatmul.mubr.bf16.gmra.mrb[0].mxu0 %v2743
      %v2790 = vpop.f32.mrb[0].mxu0
      %v2791 = vadd.f32 0.0, %v2790
      %v2792 = vpop.f32.mrb[0].mxu0
      %v2793 = vpop.f32.mrb[0].mxu0
      %v2794 = vadd.f32 0.0, %v2793
      %v2795 = vpop.f32.mrb[0].mxu0
      %2796 = vdwg.mxu0
      %v2797 = vadd.f32 %v2699, %v2783
      %v2798 = vadd.f32 %v2700, %v2786
      %v2799 = vadd.f32 %v2701, %v2791
      %v2800 = vadd.f32 %v2702, %v2794
      %v2801 = vld [vmem:[%s5] sm:$0x1]
      %v2803 = vlaneseq
      %v2804 = vshrl.u32 %v2803, 7
      %v2805 = vsub.s32 0, %v2804
      %v2806 = vrot.slane %v2801, %v2805
      %v2808 = vmul.f32 %v2797, %v2806
      %v2809 = vmul.f32 %v2798, %v2806
      %v2810 = vmul.f32 %v2799, %v2806
      %v2811 = vmul.f32 %v2800, %v2806
      %v2812 = vld [vmem:[%s6] sm:$0x1]
      %v2814 = vlaneseq
      %v2815 = vshrl.u32 %v2814, 7
      %v2816 = vsub.s32 0, %v2815
      %v2817 = vrot.slane %v2812, %v2816
      %v2819 = vadd.f32 %v2808, %v2817
      %v2820 = vadd.f32 %v2809, %v2817
      %v2821 = vadd.f32 %v2810, %v2817
      %v2822 = vadd.f32 %v2811, %v2817
      %v2823 = vmax.f32 %v2819, 0.0
      %v2824 = vmax.f32 %v2820, 0.0
      %v2825 = vmax.f32 %v2821, 0.0
      %v2826 = vmax.f32 %v2822, 0.0
      %v2827 = vpack.c.bf16 %v2824, %v2823
      %v2828 = vpack.c.bf16 %v2826, %v2825
      %v2831 = vunpack.c.l.b16 %v2827
      %v2832 = vunpack.c.h.b16 %v2827
      %v2833 = vunpack.c.l.b16 %v2828
      %v2834 = vunpack.c.h.b16 %v2828
      %v2835 = vpack.c.b16 %v2831, %v2831
      %v2836 = vpack.c.b16 %v2832, %v2832
      %v2837 = vpack.c.b16 %v2833, %v2833
      %v2838 = vpack.c.b16 %v2834, %v2834
      %vm2843 = vcmask 60416
      %2844 = vst.msk [vmem:[%s300] sm:$0xf] %vm2843, %v2835
      %2845 = vst.msk [vmem:[%s300 + $0x4] sm:$0xf] %vm2843, %v2836
      %2846 = vst.msk [vmem:[%s300 + $0x8] sm:$0xf] %vm2843, %v2837
      %2847 = vst.msk [vmem:[%s300 + $0xc] sm:$0xf] %vm2843, %v2838
      %s2848 = smul.u32 4, %s23
      %p2849 = scmp.lt.s32.totalorder %s22, 1
      %s2850 = scalar_select %p2849, %s22, 1
      %p2851 = scmp.lt.s32.totalorder %s2848, 7
      %s2852 = scalar_select %p2851, %s2848, 7
      %s2853 = smul.addr %s2850, 8
      %s2854 = sadd.s32 %s2852, %s2853
      %s2855 = smul.addr %s2854, 4
      %s2856 = scalar_lea.vmem %s7, %s2855
      // Predicated region
      $region53: #{tpu_custom_call.1} parent=47 // pred_check
        %p2857 = pneg %p202
      $region54: #{tpu_custom_call.1} parent=47 // pred_check_branch
        %2859 = sbr.rel (%p2857) target = $region56
      $region55: #{tpu_custom_call.1} parent=47 // pred_region
        %s2860 = smul.u32 4, %s23
      $region56: #{tpu_custom_call.1} parent=47 // pred_fallthru
        _
    $region48: #{tpu_custom_call.1} parent=5 // pred_fallthru
      _
    %p2861 = scmp.le.s32.totalorder 2, %s13
    // Predicated region
    $region57: #{tpu_custom_call.1} parent=5 // pred_check
      %p2862 = pneg %p2861
    $region58: #{tpu_custom_call.1} parent=5 // pred_check_branch
      %2864 = sbr.rel (%p2862) target = $region60
    $region59: #{tpu_custom_call.1} parent=5 // pred_region
      %s2865 = ssub.s32 %s13, 2
      // Predicated region
      $region61: #{tpu_custom_call.1} parent=59 // pred_check
        %p2866 = pneg %p208
      $region62: #{tpu_custom_call.1} parent=59 // pred_check_branch
        %2868 = sbr.rel (%p2866) target = $region64
      $region63: #{tpu_custom_call.1} parent=59 // pred_region
        %s2869 = smul.u32 4, %s25
        %p2870 = scmp.lt.s32.totalorder %s24, 1
        %s2871 = scalar_select %p2870, %s24, 1
        %p2872 = scmp.lt.s32.totalorder %s2869, 7
        %s2873 = scalar_select %p2872, %s2869, 7
        %s2874 = smul.addr %s2871, 8
        %s2875 = sadd.s32 %s2873, %s2874
        %s2876 = smul.addr %s2875, 4
        %s2877 = scalar_lea.vmem %s7, %s2876
      $region64: #{tpu_custom_call.1} parent=59 // pred_fallthru
        _
    $region60: #{tpu_custom_call.1} parent=5 // pred_fallthru
      _
  $region6: #{tpu_custom_call.1} parent=0 // loop_footer
    %s17 = sadd.s32 1, %s13
  $region7: #{tpu_custom_call.1} parent=0 // loop_footer_branch
    %12 = sbr.rel target = $region3
  $region8: #{tpu_custom_call.1} parent=0 // loop_exit
    _

</llo_original>
